<compile_context>
chip_gen: v7x
topology: tpu7x:2x2x1
jax: 0.10.0
libtpu: 0.0.40
codegen_flags: <defaults>
</compile_context>

<pallas_src>
import math

import jax
import jax.numpy as jnp
from jax.experimental import pallas as pl
from jax.experimental.pallas import tpu as pltpu

EPS_LN = 1e-5      # nn.LayerNorm default eps
EPS_REVIN = 1e-5   # RevIN default eps


# ---------------------------------------------------------------------------
# small in-kernel helpers (pure jnp, traced inside the Pallas body)
# ---------------------------------------------------------------------------
def _layer_norm(x, g, b):
    mean = jnp.mean(x, axis=-1, keepdims=True)
    xc = x - mean
    var = jnp.mean(xc * xc, axis=-1, keepdims=True)
    return xc * jax.lax.rsqrt(var + EPS_LN) * g + b


def _silu(x):
    return x * jax.nn.sigmoid(x)


def _softplus(x):
    # matches torch.nn.functional.softplus (beta=1, threshold=20); the min()
    # keeps the discarded branch finite and log1p keeps accuracy at small x.
    return jnp.where(x > 20.0, x, jnp.log1p(jnp.exp(jnp.minimum(x, 20.0))))


# ---------------------------------------------------------------------------
# THE fused kernel: one grid step == one batch element's whole forward pass
# ---------------------------------------------------------------------------
def _fused_forward_kernel(trend_ref, in_w_ref, in_b_ref,
                          ln_ref, w_in_ref, conv_w_ref, conv_b_ref,
                          w_dbc_ref, b_delta_ref, a_T_ref, d_ref, w_out_ref,
                          ffn_w1_ref, ffn_w2_ref, fin_w_ref, fin_b_ref,
                          l1_w_ref, l1_b_ref, l2_w_ref, l2_b_ref,
                          head_w_ref, head_b_ref, o_ref):
    f32 = jnp.float32
    x = trend_ref[...].astype(f32)                                # (L, F)
    L = x.shape[0]
    n_layers, n_state, d_inner = a_T_ref.shape

    # ----- RevIN 'norm' (affine=False) ---------------------------------------
    mean = jnp.mean(x, axis=0, keepdims=True)                     # (1, F)
    var = jnp.mean(jnp.square(x - mean), axis=0, keepdims=True)   # biased var
    std = jnp.sqrt(var + EPS_REVIN)
    xn = (x - mean) / std

    # ----- in_linear ----------------------------------------------------------
    src = jnp.dot(xn, in_w_ref[...], preferred_element_type=f32) + in_b_ref[...]

    # ----- encoder stack (unrolled over layers; shapes are static) ------------
    for layer in range(n_layers):
        ln = ln_ref[layer].astype(f32)                            # (8, D) packed LN params

        # norm1 + Mamba(d_state=N, d_conv=2, expand=1)
        n1 = _layer_norm(src, ln[0:1], ln[1:2])

        # fused in_proj: one matmul, split x/z halves with static slices
        xz = jnp.dot(n1, w_in_ref[layer], preferred_element_type=f32)  # (L, 2*Din)
        xc = xz[:, :d_inner]
        z = xz[:, d_inner:]

        # causal depthwise conv (k=2) fused with SiLU; the x[t-1] shift is built
        # in-kernel (a (1,Din) zero row + slice concat; negligible at this size).
        conv_w = conv_w_ref[layer].astype(f32)                    # (2, Din)
        x_prev = jnp.concatenate(
            [jnp.zeros((1, d_inner), f32), xc[:L - 1, :]], axis=0)
        u = _silu(xc * conv_w[1:2, :] + x_prev * conv_w[0:1, :] + conv_b_ref[layer])

        # fused delta/B/C projection (dt_proj folded into x_proj on the host):
        #   [delta_pre | B | C] = u @ [W_delta | W_B | W_C]
        dbc = jnp.dot(u, w_dbc_ref[layer], preferred_element_type=f32)  # (L, Din+2N)
        delta = _softplus(dbc[:, :d_inner] + b_delta_ref[layer])        # (L, Din)
        b_mat = dbc[:, d_inner:d_inner + n_state]                       # (L, N)
        c_mat = dbc[:, d_inner + n_state:]                              # (L, N)

        # selective scan.  Everything without a cross-step dependency (exp(dA),
        # the B (x) du outer products, the C*h readout) is hoisted out of the
        # recurrence, so the serial chain is just two VPU ops per step.
        a_T = a_T_ref[layer]                                            # (N, Din)
        du = delta * u                                                  # (L, Din)
        dA_all = jnp.exp(delta[:, None, :] * a_T[None, :, :])           # (L, N, Din)
        dBu_all = b_mat[:, :, None] * du[:, None, :]                    # (L, N, Din)
        h = jnp.zeros((n_state, d_inner), f32)
        hs = []
        for t in range(L):   # TODO(synk): lax.fori_loop + VMEM scratch for large L
            h = dA_all[t] * h + dBu_all[t]
            hs.append(h)
        h_all = jnp.stack(hs, axis=0)                                   # (L, N, Din)
        y = jnp.sum(c_mat[:, :, None] * h_all, axis=1) + u * d_ref[layer]

        y = y * _silu(z)                                                # gate
        m_out = jnp.dot(y, w_out_ref[layer], preferred_element_type=f32)  # no bias
        m_out = _layer_norm(m_out, ln[2:3], ln[3:4])                    # MambaBlock.norm
        src = src + m_out                                               # dropout1 = id

        # FFN
        n2 = _layer_norm(src, ln[4:5], ln[5:6])
        f = jnp.dot(n2, ffn_w1_ref[layer], preferred_element_type=f32)  # bias=False
        f = jnp.where(f >= 0, f, 0.01 * f)                              # LeakyReLU(0.01)
        src = src + jnp.dot(f, ffn_w2_ref[layer], preferred_element_type=f32)

        # final_enc
        n3 = _layer_norm(src, ln[6:7], ln[7:8])
        src = src + (jnp.dot(n3, fin_w_ref[layer], preferred_element_type=f32)
                     + fin_b_ref[layer])

    # ----- ResidualDecoder + sigma_linear (block-diag fold) + RevIN denorm ----
    x1 = jnp.maximum(
        jnp.dot(src, l1_w_ref[...], preferred_element_type=f32) + l1_b_ref[...], 0.0)
    x2 = jnp.maximum(
        jnp.dot(x1, l2_w_ref[...], preferred_element_type=f32) + l2_b_ref[...], 0.0)
    xo = x2 + src
    # [x_recon_pre | log_var_recip] = [xo | h] @ blockdiag(out_proj_w, sigma_w)
    combo = jnp.dot(jnp.concatenate([xo, src], axis=-1), head_w_ref[...],
                    preferred_element_type=f32) + head_b_ref[...]        # (L, 2F)
    scale = jnp.concatenate([std, jnp.ones_like(std)], axis=-1)          # denorm rec only
    shift = jnp.concatenate([mean, jnp.zeros_like(mean)], axis=-1)
    o_ref[...] = (combo * scale + shift).astype(o_ref.dtype)


def sensitive_mamba_forward(kparams, trend):
    Bsz, L, F_in = trend.shape
    D = kparams["in_w"].shape[1]
    n_layers, N, Din = kparams["a_T"].shape
    H = kparams["ffn_w1"].shape[2]

    def wspec(shape):
        nd = len(shape)
        return pl.BlockSpec(shape, lambda b, _n=nd: (0,) * _n)

    out = pl.pallas_call(
        _fused_forward_kernel,
        out_shape=jax.ShapeDtypeStruct((Bsz, L, 2 * F_in), trend.dtype),
        grid=(Bsz,),
        in_specs=[
            pl.BlockSpec((None, L, F_in), lambda b: (b, 0, 0)),   # trend
            wspec((F_in, D)), wspec((1, D)),                      # in_linear
            wspec((n_layers, 8, D)),                              # packed LN params
            wspec((n_layers, D, 2 * Din)),                        # in_proj (fused)
            wspec((n_layers, 2, Din)), wspec((n_layers, 1, Din)), # conv taps / bias
            wspec((n_layers, Din, Din + 2 * N)),                  # [W_delta|W_B|W_C]
            wspec((n_layers, 1, Din)),                            # dt bias
            wspec((n_layers, N, Din)), wspec((n_layers, 1, Din)), # A^T, D
            wspec((n_layers, Din, D)),                            # out_proj
            wspec((n_layers, D, H)), wspec((n_layers, H, D)),     # ffn
            wspec((n_layers, D, D)), wspec((n_layers, 1, D)),     # final_enc
            wspec((D, D)), wspec((1, D)),                         # decoder layer1
            wspec((D, D)), wspec((1, D)),                         # decoder layer2
            wspec((2 * D, 2 * F_in)), wspec((1, 2 * F_in)),       # blockdiag head
        ],
        out_specs=pl.BlockSpec((None, L, 2 * F_in), lambda b: (b, 0, 0)),
        compiler_params=pltpu.CompilerParams(dimension_semantics=("parallel",)),
    )(trend, kparams["in_w"], kparams["in_b"],
      kparams["ln_pack"], kparams["w_in"], kparams["conv_w"], kparams["conv_b"],
      kparams["w_dbc"], kparams["b_delta"], kparams["a_T"], kparams["d_row"],
      kparams["out_proj_w"], kparams["ffn_w1"], kparams["ffn_w2"],
      kparams["fin_w"], kparams["fin_b"],
      kparams["l1_w"], kparams["l1_b"], kparams["l2_w"], kparams["l2_b"],
      kparams["head_w"], kparams["head_b"])
    return out[..., :F_in], out[..., F_in:]


# ---------------------------------------------------------------------------
# Host-side, once: fold/repack PyTorch-layout params into kernel-ready tensors
# ---------------------------------------------------------------------------
def fold_params(p):
    d_model = p["in_w"].shape[1]
    f_in = p["dec"]["out_w"].shape[1]
    ln_pack, w_in, conv_w, conv_b = [], [], [], []
    w_dbc, b_delta, a_T, d_row = [], [], [], []
    out_proj_w, ffn_w1, ffn_w2, fin_w, fin_b = [], [], [], [], []
    for lp in p["layers"]:
        mp = lp["mamba"]
        d_inner, n_state = mp["A_log"].shape
        dt_rank = mp["dt_proj_w"].shape[0]
        xpw = mp["x_proj_w"]                                       # (Din, dt_rank+2N)
        # dt_proj folded into x_proj (exact algebra): W_delta = x_proj_dt @ dt_proj_w
        w_delta = xpw[:, :dt_rank] @ mp["dt_proj_w"]               # (Din, Din)
        w_dbc.append(jnp.concatenate([w_delta, xpw[:, dt_rank:]], axis=1))
        a_T.append((-jnp.exp(mp["A_log"])).T)                      # (N, Din)
        ln_pack.append(jnp.stack([lp["norm1_g"], lp["norm1_b"],
                                  lp["mb_norm_g"], lp["mb_norm_b"],
                                  lp["norm2_g"], lp["norm2_b"],
                                  lp["norm3_g"], lp["norm3_b"]], axis=0))
        w_in.append(mp["in_proj_w"])
        # NOTE: conv_w[0] must be the x[t-1] tap and conv_w[1] the x[t] tap when
        # importing real Conv1d(groups=Din, k=2, padding=1) checkpoint weights.
        conv_w.append(mp["conv_w"])
        conv_b.append(mp["conv_b"].reshape(1, d_inner))
        b_delta.append(mp["dt_proj_b"].reshape(1, d_inner))
        d_row.append(mp["D"].reshape(1, d_inner))
        out_proj_w.append(mp["out_proj_w"])
        ffn_w1.append(lp["ffn_w1"]); ffn_w2.append(lp["ffn_w2"])
        fin_w.append(lp["fin_w"]); fin_b.append(lp["fin_b"].reshape(1, d_model))
    dec = p["dec"]
    # block-diagonal head: [xo | h] @ [[out_w, 0], [0, sig_w]]
    head_w = jnp.concatenate([
        jnp.concatenate([dec["out_w"], jnp.zeros_like(p["sig_w"])], axis=1),
        jnp.concatenate([jnp.zeros_like(dec["out_w"]), p["sig_w"]], axis=1)], axis=0)
    head_b = jnp.concatenate([dec["out_b"], p["sig_b"]]).reshape(1, 2 * f_in)
    stk = lambda xs: jnp.stack(xs, axis=0)
    return dict(
        in_w=p["in_w"], in_b=p["in_b"].reshape(1, d_model),
        ln_pack=stk(ln_pack), w_in=stk(w_in), conv_w=stk(conv_w), conv_b=stk(conv_b),
        w_dbc=stk(w_dbc), b_delta=stk(b_delta), a_T=stk(a_T), d_row=stk(d_row),
        out_proj_w=stk(out_proj_w), ffn_w1=stk(ffn_w1), ffn_w2=stk(ffn_w2),
        fin_w=stk(fin_w), fin_b=stk(fin_b),
        l1_w=dec["l1_w"], l1_b=dec["l1_b"].reshape(1, d_model),
        l2_w=dec["l2_w"], l2_b=dec["l2_b"].reshape(1, d_model),
        head_w=head_w, head_b=head_b,
    )


# ---------------------------------------------------------------------------
# Deterministic parameter init (shapes follow the PyTorch __init__)
# ---------------------------------------------------------------------------
def init_params(key, step_num_in, f_in, d_model, dim_hidden_fc, n_layers,
                d_state=16, d_conv=2, expand=1):
    d_inner = expand * d_model
    dt_rank = math.ceil(d_model / 16)
    keys = iter(jax.random.split(key, 64 + 32 * n_layers))

    def rnd(shape, scale=0.1):
        return jax.random.normal(next(keys), shape, jnp.float32) * scale

    def mamba_params():
        return dict(
            in_proj_w=rnd((d_model, 2 * d_inner)),            # Linear bias=False
            conv_w=rnd((d_conv, d_inner)),                    # [0]=x[t-1] tap, [1]=x[t] tap
            conv_b=rnd((d_inner,)),
            x_proj_w=rnd((d_inner, dt_rank + 2 * d_state)),   # bias=False
            dt_proj_w=rnd((dt_rank, d_inner)),
            dt_proj_b=rnd((d_inner,)),
            A_log=jnp.log(jnp.broadcast_to(
                jnp.arange(1, d_state + 1, dtype=jnp.float32),
                (d_inner, d_state))),
            D=jnp.ones((d_inner,), jnp.float32),
            out_proj_w=rnd((d_inner, d_model)),               # bias=False
        )

    def layer_params():
        return dict(
            mamba=mamba_params(),
            mb_norm_g=jnp.ones((d_model,), jnp.float32),
            mb_norm_b=jnp.zeros((d_model,), jnp.float32),
            ffn_w1=rnd((d_model, dim_hidden_fc)),             # bias=False
            ffn_w2=rnd((dim_hidden_fc, d_model)),             # bias=False
            fin_w=rnd((d_model, d_model)),
            fin_b=rnd((d_model,)),
            norm1_g=jnp.ones((d_model,), jnp.float32),
            norm1_b=jnp.zeros((d_model,), jnp.float32),
            norm2_g=jnp.ones((d_model,), jnp.float32),
            norm2_b=jnp.zeros((d_model,), jnp.float32),
            norm3_g=jnp.ones((d_model,), jnp.float32),
            norm3_b=jnp.zeros((d_model,), jnp.float32),
        )

    # NOTE: pos_embed (step_num_in, d_model) exists in __init__ but is never
    # used in forward(), so it is omitted here.
    return dict(
        in_w=rnd((f_in, d_model)),
        in_b=rnd((d_model,)),
        layers=[layer_params() for _ in range(n_layers)],
        dec=dict(
            l1_w=rnd((d_model, d_model)), l1_b=rnd((d_model,)),
            l2_w=rnd((d_model, d_model)), l2_b=rnd((d_model,)),
            out_w=rnd((d_model, f_in)), out_b=rnd((f_in,)),
        ),
        sig_w=rnd((d_model, f_in)),
        sig_b=rnd((f_in,)),
    )


# ---------------------------------------------------------------------------
# Pure-JAX reference (mirrors the PyTorch forward) for a tolerance check
# ---------------------------------------------------------------------------
def reference_forward(params, trend):
    def ln(x, g, b):
        m = x.mean(-1, keepdims=True)
        v = ((x - m) ** 2).mean(-1, keepdims=True)
        return (x - m) / jnp.sqrt(v + EPS_LN) * g + b

    Bsz, L, F = trend.shape
    mean = trend.mean(1, keepdims=True)
    var = ((trend - mean) ** 2).mean(1, keepdims=True)
    std = jnp.sqrt(var + EPS_REVIN)
    xn = (trend - mean) / std
    h = xn @ params["in_w"] + params["in_b"]
    for lp in params["layers"]:
        mp = lp["mamba"]
        d_inner, N = mp["A_log"].shape
        dt_rank = mp["dt_proj_w"].shape[0]
        n1 = ln(h, lp["norm1_g"], lp["norm1_b"])
        xz = n1 @ mp["in_proj_w"]
        xc, z = xz[..., :d_inner], xz[..., d_inner:]
        xprev = jnp.pad(xc, ((0, 0), (1, 0), (0, 0)))[:, :L, :]
        u = xc * mp["conv_w"][1] + xprev * mp["conv_w"][0] + mp["conv_b"]
        u = u * jax.nn.sigmoid(u)
        x_dbl = u @ mp["x_proj_w"]
        dt = x_dbl[..., :dt_rank] @ mp["dt_proj_w"] + mp["dt_proj_b"]
        delta = jnp.where(dt > 20.0, dt, jnp.log1p(jnp.exp(jnp.minimum(dt, 20.0))))
        Bm = x_dbl[..., dt_rank:dt_rank + N]
        Cm = x_dbl[..., dt_rank + N:]
        A = -jnp.exp(mp["A_log"])                               # (Din, N)
        hs = jnp.zeros((Bsz, d_inner, N), jnp.float32)
        ys = []
        for t in range(L):
            dA = jnp.exp(delta[:, t, :, None] * A[None])
            dBu = delta[:, t, :, None] * u[:, t, :, None] * Bm[:, t, None, :]
            hs = dA * hs + dBu
            ys.append(jnp.einsum("bdn,bn->bd", hs, Cm[:, t]))
        y = jnp.stack(ys, axis=1) + u * mp["D"]
        y = y * (z * jax.nn.sigmoid(z))
        m_out = ln(y @ mp["out_proj_w"], lp["mb_norm_g"], lp["mb_norm_b"])
        h = h + m_out
        n2 = ln(h, lp["norm2_g"], lp["norm2_b"])
        f = n2 @ lp["ffn_w1"]
        f = jnp.where(f >= 0, f, 0.01 * f)
        h = h + f @ lp["ffn_w2"]
        n3 = ln(h, lp["norm3_g"], lp["norm3_b"])
        h = h + n3 @ lp["fin_w"] + lp["fin_b"]
    dec = params["dec"]
    x1 = jnp.maximum(h @ dec["l1_w"] + dec["l1_b"], 0.0)
    x2 = jnp.maximum(x1 @ dec["l2_w"] + dec["l2_b"], 0.0)
    rec = (x2 + h) @ dec["out_w"] + dec["out_b"]
    rec = rec * std + mean
    lvr = h @ params["sig_w"] + params["sig_b"]
    return rec, lvr


if __name__ == "__main__":
    # SensitiveMamba(step_num_in=8, f_in=4, d_model=32, head_num=4,
    #                dim_hidden_fc=64, encode_layer_num=2)
    step_num_in, f_in, d_model, head_num, dim_hidden_fc, n_layers = 8, 4, 32, 4, 64, 2
    batch = 2

    key = jax.random.PRNGKey(0)
    pkey, xkey = jax.random.split(key)
    params = init_params(pkey, step_num_in, f_in, d_model, dim_hidden_fc, n_layers)
    kparams = fold_params(params)                              # host-side, once
    trend = jax.random.normal(xkey, (batch, step_num_in, f_in), jnp.float32)

    fwd = jax.jit(sensitive_mamba_forward)
    x_recon, log_var_recip = fwd(kparams, trend)
    jax.block_until_ready((x_recon, log_var_recip))

    assert x_recon.shape == (batch, step_num_in, f_in)
    assert log_var_recip.shape == (batch, step_num_in, f_in)
    assert jnp.all(jnp.isfinite(x_recon)) and jnp.all(jnp.isfinite(log_var_recip))

    # tolerance check vs. plain-JAX reference; the host-side folds (dt_proj into
    # x_proj, block-diag head) are algebraically exact, so the tolerance is tight
    # enough to catch layout / conv-tap bugs (only float rounding remains).
    ref_rec, ref_lvr = reference_forward(params, trend)
    assert jnp.allclose(x_recon, ref_rec, atol=2e-3, rtol=2e-3)
    assert jnp.allclose(log_var_recip, ref_lvr, atol=2e-3, rtol=2e-3)

    print("KERNEL_OK")
</pallas_src>

<mosaic_0001>
module attributes {stable_mosaic.version = 11 : i64} {
  func.func @_fused_forward_kernel(%arg0: i32, %arg1: memref<1x8x4xf32, #tpu.memory_space<vmem>>, %arg2: memref<4x32xf32, #tpu.memory_space<vmem>>, %arg3: memref<1x32xf32, #tpu.memory_space<vmem>>, %arg4: memref<2x8x32xf32, #tpu.memory_space<vmem>>, %arg5: memref<2x32x64xf32, #tpu.memory_space<vmem>>, %arg6: memref<2x2x32xf32, #tpu.memory_space<vmem>>, %arg7: memref<2x1x32xf32, #tpu.memory_space<vmem>>, %arg8: memref<2x32x64xf32, #tpu.memory_space<vmem>>, %arg9: memref<2x1x32xf32, #tpu.memory_space<vmem>>, %arg10: memref<2x16x32xf32, #tpu.memory_space<vmem>>, %arg11: memref<2x1x32xf32, #tpu.memory_space<vmem>>, %arg12: memref<2x32x32xf32, #tpu.memory_space<vmem>>, %arg13: memref<2x32x64xf32, #tpu.memory_space<vmem>>, %arg14: memref<2x64x32xf32, #tpu.memory_space<vmem>>, %arg15: memref<2x32x32xf32, #tpu.memory_space<vmem>>, %arg16: memref<2x1x32xf32, #tpu.memory_space<vmem>>, %arg17: memref<32x32xf32, #tpu.memory_space<vmem>>, %arg18: memref<1x32xf32, #tpu.memory_space<vmem>>, %arg19: memref<32x32xf32, #tpu.memory_space<vmem>>, %arg20: memref<1x32xf32, #tpu.memory_space<vmem>>, %arg21: memref<64x8xf32, #tpu.memory_space<vmem>>, %arg22: memref<1x8xf32, #tpu.memory_space<vmem>>, %arg23: memref<1x8x8xf32, #tpu.memory_space<vmem>>) attributes {dimension_semantics = [#tpu.dimension_semantics<parallel>], iteration_bounds = array<i64: 2>, scalar_prefetch = 0 : i64, scratch_operands = 0 : i64, tpu.core_type = #tpu.core_type<tc>, window_params = [{transform_indices = @transform_0, window_bounds = array<i64: 1, 8, 4>}, {pipeline_mode = #tpu.pipeline_mode<synchronous>, transform_indices = @transform_1, window_bounds = array<i64: 4, 32>}, {pipeline_mode = #tpu.pipeline_mode<synchronous>, transform_indices = @transform_2, window_bounds = array<i64: 1, 32>}, {pipeline_mode = #tpu.pipeline_mode<synchronous>, transform_indices = @transform_3, window_bounds = array<i64: 2, 8, 32>}, {pipeline_mode = #tpu.pipeline_mode<synchronous>, transform_indices = @transform_4, window_bounds = array<i64: 2, 32, 64>}, {pipeline_mode = #tpu.pipeline_mode<synchronous>, transform_indices = @transform_5, window_bounds = array<i64: 2, 2, 32>}, {pipeline_mode = #tpu.pipeline_mode<synchronous>, transform_indices = @transform_6, window_bounds = array<i64: 2, 1, 32>}, {pipeline_mode = #tpu.pipeline_mode<synchronous>, transform_indices = @transform_7, window_bounds = array<i64: 2, 32, 64>}, {pipeline_mode = #tpu.pipeline_mode<synchronous>, transform_indices = @transform_8, window_bounds = array<i64: 2, 1, 32>}, {pipeline_mode = #tpu.pipeline_mode<synchronous>, transform_indices = @transform_9, window_bounds = array<i64: 2, 16, 32>}, {pipeline_mode = #tpu.pipeline_mode<synchronous>, transform_indices = @transform_10, window_bounds = array<i64: 2, 1, 32>}, {pipeline_mode = #tpu.pipeline_mode<synchronous>, transform_indices = @transform_11, window_bounds = array<i64: 2, 32, 32>}, {pipeline_mode = #tpu.pipeline_mode<synchronous>, transform_indices = @transform_12, window_bounds = array<i64: 2, 32, 64>}, {pipeline_mode = #tpu.pipeline_mode<synchronous>, transform_indices = @transform_13, window_bounds = array<i64: 2, 64, 32>}, {pipeline_mode = #tpu.pipeline_mode<synchronous>, transform_indices = @transform_14, window_bounds = array<i64: 2, 32, 32>}, {pipeline_mode = #tpu.pipeline_mode<synchronous>, transform_indices = @transform_15, window_bounds = array<i64: 2, 1, 32>}, {pipeline_mode = #tpu.pipeline_mode<synchronous>, transform_indices = @transform_16, window_bounds = array<i64: 32, 32>}, {pipeline_mode = #tpu.pipeline_mode<synchronous>, transform_indices = @transform_17, window_bounds = array<i64: 1, 32>}, {pipeline_mode = #tpu.pipeline_mode<synchronous>, transform_indices = @transform_18, window_bounds = array<i64: 32, 32>}, {pipeline_mode = #tpu.pipeline_mode<synchronous>, transform_indices = @transform_19, window_bounds = array<i64: 1, 32>}, {pipeline_mode = #tpu.pipeline_mode<synchronous>, transform_indices = @transform_20, window_bounds = array<i64: 64, 8>}, {pipeline_mode = #tpu.pipeline_mode<synchronous>, transform_indices = @transform_21, window_bounds = array<i64: 1, 8>}, {transform_indices = @transform_22, window_bounds = array<i64: 1, 8, 8>}]} {
    %c0 = arith.constant 0 : index
    %c0_0 = arith.constant 0 : index
    %c0_1 = arith.constant 0 : index
    %0 = vector.load %arg1[%c0, %c0_0, %c0_1] : memref<1x8x4xf32, #tpu.memory_space<vmem>>, vector<1x8x4xf32>
    %1 = vector.shape_cast %0 : vector<1x8x4xf32> to vector<8x4xf32>
    %cst = arith.constant dense<0.000000e+00> : vector<4xf32>
    %2 = vector.multi_reduction <add>, %1, %cst [0] : vector<8x4xf32> to vector<4xf32>
    %3 = vector.shape_cast %2 : vector<4xf32> to vector<1x4xf32>
    %cst_2 = arith.constant 8.000000e+00 : f32
    %4 = vector.broadcast %cst_2 : f32 to vector<1x4xf32>
    %5 = arith.divf %3, %4 : vector<1x4xf32>
    %6 = vector.broadcast %5 : vector<1x4xf32> to vector<8x4xf32>
    %7 = arith.subf %1, %6 : vector<8x4xf32>
    %8 = arith.mulf %7, %7 : vector<8x4xf32>
    %cst_3 = arith.constant dense<0.000000e+00> : vector<4xf32>
    %9 = vector.multi_reduction <add>, %8, %cst_3 [0] : vector<8x4xf32> to vector<4xf32>
    %10 = vector.shape_cast %9 : vector<4xf32> to vector<1x4xf32>
    %cst_4 = arith.constant 8.000000e+00 : f32
    %11 = vector.broadcast %cst_4 : f32 to vector<1x4xf32>
    %12 = arith.divf %10, %11 : vector<1x4xf32>
    %cst_5 = arith.constant 9.99999974E-6 : f32
    %13 = vector.broadcast %cst_5 : f32 to vector<1x4xf32>
    %14 = arith.addf %12, %13 : vector<1x4xf32>
    %15 = math.sqrt %14 : vector<1x4xf32>
    %16 = vector.broadcast %5 : vector<1x4xf32> to vector<8x4xf32>
    %17 = arith.subf %1, %16 : vector<8x4xf32>
    %18 = vector.broadcast %15 : vector<1x4xf32> to vector<8x4xf32>
    %19 = arith.divf %17, %18 : vector<8x4xf32>
    %c0_6 = arith.constant 0 : index
    %c0_7 = arith.constant 0 : index
    %20 = vector.load %arg2[%c0_6, %c0_7] : memref<4x32xf32, #tpu.memory_space<vmem>>, vector<4x32xf32>
    %cst_8 = arith.constant dense<0.000000e+00> : vector<8x32xf32>
    %21 = tpu.matmul %19, %20, %cst_8 {dimension_numbers = #tpu.dot_dimension_numbers<[1], [0], [0], [1], [0, 0, 1, 1], [], []>} : vector<8x4xf32>, vector<4x32xf32>, vector<8x32xf32> -> vector<8x32xf32>
    %c0_9 = arith.constant 0 : index
    %c0_10 = arith.constant 0 : index
    %22 = vector.load %arg3[%c0_9, %c0_10] : memref<1x32xf32, #tpu.memory_space<vmem>>, vector<1x32xf32>
    %23 = vector.broadcast %22 : vector<1x32xf32> to vector<8x32xf32>
    %24 = arith.addf %21, %23 : vector<8x32xf32>
    %c0_11 = arith.constant 0 : index
    %c0_12 = arith.constant 0 : index
    %c0_13 = arith.constant 0 : index
    %25 = vector.load %arg4[%c0_11, %c0_12, %c0_13] : memref<2x8x32xf32, #tpu.memory_space<vmem>>, vector<1x8x32xf32>
    %26 = vector.shape_cast %25 : vector<1x8x32xf32> to vector<8x32xf32>
    %27 = vector.extract_strided_slice %26 {offsets = [0, 0], sizes = [1, 32], strides = [1, 1]} : vector<8x32xf32> to vector<1x32xf32>
    %28 = vector.extract_strided_slice %26 {offsets = [1, 0], sizes = [1, 32], strides = [1, 1]} : vector<8x32xf32> to vector<1x32xf32>
    %cst_14 = arith.constant dense<0.000000e+00> : vector<8xf32>
    %29 = vector.multi_reduction <add>, %24, %cst_14 [1] : vector<8x32xf32> to vector<8xf32>
    %30 = vector.shape_cast %29 : vector<8xf32> to vector<8x1xf32>
    %cst_15 = arith.constant 3.200000e+01 : f32
    %31 = vector.broadcast %cst_15 : f32 to vector<8x1xf32>
    %32 = arith.divf %30, %31 : vector<8x1xf32>
    %33 = vector.broadcast %32 : vector<8x1xf32> to vector<8x32xf32>
    %34 = arith.subf %24, %33 : vector<8x32xf32>
    %35 = arith.mulf %34, %34 : vector<8x32xf32>
    %cst_16 = arith.constant dense<0.000000e+00> : vector<8xf32>
    %36 = vector.multi_reduction <add>, %35, %cst_16 [1] : vector<8x32xf32> to vector<8xf32>
    %37 = vector.shape_cast %36 : vector<8xf32> to vector<8x1xf32>
    %cst_17 = arith.constant 3.200000e+01 : f32
    %38 = vector.broadcast %cst_17 : f32 to vector<8x1xf32>
    %39 = arith.divf %37, %38 : vector<8x1xf32>
    %cst_18 = arith.constant 9.99999974E-6 : f32
    %40 = vector.broadcast %cst_18 : f32 to vector<8x1xf32>
    %41 = arith.addf %39, %40 : vector<8x1xf32>
    %42 = math.rsqrt %41 : vector<8x1xf32>
    %43 = vector.broadcast %42 : vector<8x1xf32> to vector<8x32xf32>
    %44 = arith.mulf %34, %43 : vector<8x32xf32>
    %45 = vector.broadcast %27 : vector<1x32xf32> to vector<8x32xf32>
    %46 = arith.mulf %44, %45 : vector<8x32xf32>
    %47 = vector.broadcast %28 : vector<1x32xf32> to vector<8x32xf32>
    %48 = arith.addf %46, %47 : vector<8x32xf32>
    %c0_19 = arith.constant 0 : index
    %c0_20 = arith.constant 0 : index
    %c0_21 = arith.constant 0 : index
    %49 = vector.load %arg5[%c0_19, %c0_20, %c0_21] : memref<2x32x64xf32, #tpu.memory_space<vmem>>, vector<1x32x64xf32>
    %50 = vector.shape_cast %49 : vector<1x32x64xf32> to vector<32x64xf32>
    %cst_22 = arith.constant dense<0.000000e+00> : vector<8x64xf32>
    %51 = tpu.matmul %48, %50, %cst_22 {dimension_numbers = #tpu.dot_dimension_numbers<[1], [0], [0], [1], [0, 0, 1, 1], [], []>} : vector<8x32xf32>, vector<32x64xf32>, vector<8x64xf32> -> vector<8x64xf32>
    %52 = vector.extract_strided_slice %51 {offsets = [0, 0], sizes = [8, 32], strides = [1, 1]} : vector<8x64xf32> to vector<8x32xf32>
    %53 = vector.extract_strided_slice %51 {offsets = [0, 32], sizes = [8, 32], strides = [1, 1]} : vector<8x64xf32> to vector<8x32xf32>
    %c0_23 = arith.constant 0 : index
    %c0_24 = arith.constant 0 : index
    %c0_25 = arith.constant 0 : index
    %54 = vector.load %arg6[%c0_23, %c0_24, %c0_25] : memref<2x2x32xf32, #tpu.memory_space<vmem>>, vector<1x2x32xf32>
    %55 = vector.shape_cast %54 : vector<1x2x32xf32> to vector<2x32xf32>
    %cst_26 = arith.constant 0.000000e+00 : f32
    %56 = vector.broadcast %cst_26 : f32 to vector<1x32xf32>
    %57 = vector.extract_strided_slice %52 {offsets = [0, 0], sizes = [7, 32], strides = [1, 1]} : vector<8x32xf32> to vector<7x32xf32>
    %58 = tpu.concatenate %56, %57 in 0 : vector<1x32xf32>, vector<7x32xf32> -> vector<8x32xf32>
    %59 = vector.extract_strided_slice %55 {offsets = [1, 0], sizes = [1, 32], strides = [1, 1]} : vector<2x32xf32> to vector<1x32xf32>
    %60 = vector.broadcast %59 : vector<1x32xf32> to vector<8x32xf32>
    %61 = arith.mulf %52, %60 : vector<8x32xf32>
    %62 = vector.extract_strided_slice %55 {offsets = [0, 0], sizes = [1, 32], strides = [1, 1]} : vector<2x32xf32> to vector<1x32xf32>
    %63 = vector.broadcast %62 : vector<1x32xf32> to vector<8x32xf32>
    %64 = arith.mulf %58, %63 : vector<8x32xf32>
    %65 = arith.addf %61, %64 : vector<8x32xf32>
    %c0_27 = arith.constant 0 : index
    %c0_28 = arith.constant 0 : index
    %c0_29 = arith.constant 0 : index
    %66 = vector.load %arg7[%c0_27, %c0_28, %c0_29] : memref<2x1x32xf32, #tpu.memory_space<vmem>>, vector<1x1x32xf32>
    %67 = vector.shape_cast %66 : vector<1x1x32xf32> to vector<1x32xf32>
    %68 = vector.broadcast %67 : vector<1x32xf32> to vector<8x32xf32>
    %69 = arith.addf %65, %68 : vector<8x32xf32>
    %70 = arith.negf %69 : vector<8x32xf32>
    %71 = math.exp %70 : vector<8x32xf32>
    %cst_30 = arith.constant 1.000000e+00 : f32
    %72 = vector.broadcast %cst_30 : f32 to vector<8x32xf32>
    %73 = arith.addf %72, %71 : vector<8x32xf32>
    %74 = arith.divf %72, %73 : vector<8x32xf32>
    %75 = arith.mulf %69, %74 : vector<8x32xf32>
    %c0_31 = arith.constant 0 : index
    %c0_32 = arith.constant 0 : index
    %c0_33 = arith.constant 0 : index
    %76 = vector.load %arg8[%c0_31, %c0_32, %c0_33] : memref<2x32x64xf32, #tpu.memory_space<vmem>>, vector<1x32x64xf32>
    %77 = vector.shape_cast %76 : vector<1x32x64xf32> to vector<32x64xf32>
    %cst_34 = arith.constant dense<0.000000e+00> : vector<8x64xf32>
    %78 = tpu.matmul %75, %77, %cst_34 {dimension_numbers = #tpu.dot_dimension_numbers<[1], [0], [0], [1], [0, 0, 1, 1], [], []>} : vector<8x32xf32>, vector<32x64xf32>, vector<8x64xf32> -> vector<8x64xf32>
    %79 = vector.extract_strided_slice %78 {offsets = [0, 0], sizes = [8, 32], strides = [1, 1]} : vector<8x64xf32> to vector<8x32xf32>
    %c0_35 = arith.constant 0 : index
    %c0_36 = arith.constant 0 : index
    %c0_37 = arith.constant 0 : index
    %80 = vector.load %arg9[%c0_35, %c0_36, %c0_37] : memref<2x1x32xf32, #tpu.memory_space<vmem>>, vector<1x1x32xf32>
    %81 = vector.shape_cast %80 : vector<1x1x32xf32> to vector<1x32xf32>
    %82 = vector.broadcast %81 : vector<1x32xf32> to vector<8x32xf32>
    %83 = arith.addf %79, %82 : vector<8x32xf32>
    %cst_38 = arith.constant 2.000000e+01 : f32
    %84 = vector.broadcast %cst_38 : f32 to vector<8x32xf32>
    %85 = arith.cmpf ogt, %83, %84 : vector<8x32xf32>
    %cst_39 = arith.constant 2.000000e+01 : f32
    %86 = vector.broadcast %cst_39 : f32 to vector<8x32xf32>
    %87 = arith.minimumf %83, %86 : vector<8x32xf32>
    %88 = math.exp %87 : vector<8x32xf32>
    %89 = math.log1p %88 : vector<8x32xf32>
    %90 = arith.select %85, %83, %89 : vector<8x32xi1>, vector<8x32xf32>
    %91 = vector.extract_strided_slice %78 {offsets = [0, 32], sizes = [8, 16], strides = [1, 1]} : vector<8x64xf32> to vector<8x16xf32>
    %92 = vector.extract_strided_slice %78 {offsets = [0, 48], sizes = [8, 16], strides = [1, 1]} : vector<8x64xf32> to vector<8x16xf32>
    %c0_40 = arith.constant 0 : index
    %c0_41 = arith.constant 0 : index
    %c0_42 = arith.constant 0 : index
    %93 = vector.load %arg10[%c0_40, %c0_41, %c0_42] : memref<2x16x32xf32, #tpu.memory_space<vmem>>, vector<1x16x32xf32>
    %94 = vector.shape_cast %93 : vector<1x16x32xf32> to vector<16x32xf32>
    %95 = arith.mulf %90, %75 : vector<8x32xf32>
    %96 = vector.shape_cast %90 : vector<8x32xf32> to vector<8x1x32xf32>
    %97 = vector.shape_cast %94 : vector<16x32xf32> to vector<1x16x32xf32>
    %98 = vector.broadcast %96 : vector<8x1x32xf32> to vector<8x16x32xf32>
    %99 = vector.broadcast %97 : vector<1x16x32xf32> to vector<8x16x32xf32>
    %100 = arith.mulf %98, %99 : vector<8x16x32xf32>
    %101 = math.exp %100 : vector<8x16x32xf32>
    %102 = vector.shape_cast %91 : vector<8x16xf32> to vector<8x16x1xf32>
    %103 = vector.shape_cast %95 : vector<8x32xf32> to vector<8x1x32xf32>
    %104 = vector.broadcast %102 : vector<8x16x1xf32> to vector<8x16x32xf32>
    %105 = vector.broadcast %103 : vector<8x1x32xf32> to vector<8x16x32xf32>
    %106 = arith.mulf %104, %105 : vector<8x16x32xf32>
    %cst_43 = arith.constant 0.000000e+00 : f32
    %107 = vector.broadcast %cst_43 : f32 to vector<16x32xf32>
    %108 = vector.extract_strided_slice %101 {offsets = [0, 0, 0], sizes = [1, 16, 32], strides = [1, 1, 1]} : vector<8x16x32xf32> to vector<1x16x32xf32>
    %109 = vector.shape_cast %108 : vector<1x16x32xf32> to vector<16x32xf32>
    %110 = arith.mulf %109, %107 : vector<16x32xf32>
    %111 = vector.extract_strided_slice %106 {offsets = [0, 0, 0], sizes = [1, 16, 32], strides = [1, 1, 1]} : vector<8x16x32xf32> to vector<1x16x32xf32>
    %112 = vector.shape_cast %111 : vector<1x16x32xf32> to vector<16x32xf32>
    %113 = arith.addf %110, %112 : vector<16x32xf32>
    %114 = vector.extract_strided_slice %101 {offsets = [1, 0, 0], sizes = [1, 16, 32], strides = [1, 1, 1]} : vector<8x16x32xf32> to vector<1x16x32xf32>
    %115 = vector.shape_cast %114 : vector<1x16x32xf32> to vector<16x32xf32>
    %116 = arith.mulf %115, %113 : vector<16x32xf32>
    %117 = vector.extract_strided_slice %106 {offsets = [1, 0, 0], sizes = [1, 16, 32], strides = [1, 1, 1]} : vector<8x16x32xf32> to vector<1x16x32xf32>
    %118 = vector.shape_cast %117 : vector<1x16x32xf32> to vector<16x32xf32>
    %119 = arith.addf %116, %118 : vector<16x32xf32>
    %120 = vector.extract_strided_slice %101 {offsets = [2, 0, 0], sizes = [1, 16, 32], strides = [1, 1, 1]} : vector<8x16x32xf32> to vector<1x16x32xf32>
    %121 = vector.shape_cast %120 : vector<1x16x32xf32> to vector<16x32xf32>
    %122 = arith.mulf %121, %119 : vector<16x32xf32>
    %123 = vector.extract_strided_slice %106 {offsets = [2, 0, 0], sizes = [1, 16, 32], strides = [1, 1, 1]} : vector<8x16x32xf32> to vector<1x16x32xf32>
    %124 = vector.shape_cast %123 : vector<1x16x32xf32> to vector<16x32xf32>
    %125 = arith.addf %122, %124 : vector<16x32xf32>
    %126 = vector.extract_strided_slice %101 {offsets = [3, 0, 0], sizes = [1, 16, 32], strides = [1, 1, 1]} : vector<8x16x32xf32> to vector<1x16x32xf32>
    %127 = vector.shape_cast %126 : vector<1x16x32xf32> to vector<16x32xf32>
    %128 = arith.mulf %127, %125 : vector<16x32xf32>
    %129 = vector.extract_strided_slice %106 {offsets = [3, 0, 0], sizes = [1, 16, 32], strides = [1, 1, 1]} : vector<8x16x32xf32> to vector<1x16x32xf32>
    %130 = vector.shape_cast %129 : vector<1x16x32xf32> to vector<16x32xf32>
    %131 = arith.addf %128, %130 : vector<16x32xf32>
    %132 = vector.extract_strided_slice %101 {offsets = [4, 0, 0], sizes = [1, 16, 32], strides = [1, 1, 1]} : vector<8x16x32xf32> to vector<1x16x32xf32>
    %133 = vector.shape_cast %132 : vector<1x16x32xf32> to vector<16x32xf32>
    %134 = arith.mulf %133, %131 : vector<16x32xf32>
    %135 = vector.extract_strided_slice %106 {offsets = [4, 0, 0], sizes = [1, 16, 32], strides = [1, 1, 1]} : vector<8x16x32xf32> to vector<1x16x32xf32>
    %136 = vector.shape_cast %135 : vector<1x16x32xf32> to vector<16x32xf32>
    %137 = arith.addf %134, %136 : vector<16x32xf32>
    %138 = vector.extract_strided_slice %101 {offsets = [5, 0, 0], sizes = [1, 16, 32], strides = [1, 1, 1]} : vector<8x16x32xf32> to vector<1x16x32xf32>
    %139 = vector.shape_cast %138 : vector<1x16x32xf32> to vector<16x32xf32>
    %140 = arith.mulf %139, %137 : vector<16x32xf32>
    %141 = vector.extract_strided_slice %106 {offsets = [5, 0, 0], sizes = [1, 16, 32], strides = [1, 1, 1]} : vector<8x16x32xf32> to vector<1x16x32xf32>
    %142 = vector.shape_cast %141 : vector<1x16x32xf32> to vector<16x32xf32>
    %143 = arith.addf %140, %142 : vector<16x32xf32>
    %144 = vector.extract_strided_slice %101 {offsets = [6, 0, 0], sizes = [1, 16, 32], strides = [1, 1, 1]} : vector<8x16x32xf32> to vector<1x16x32xf32>
    %145 = vector.shape_cast %144 : vector<1x16x32xf32> to vector<16x32xf32>
    %146 = arith.mulf %145, %143 : vector<16x32xf32>
    %147 = vector.extract_strided_slice %106 {offsets = [6, 0, 0], sizes = [1, 16, 32], strides = [1, 1, 1]} : vector<8x16x32xf32> to vector<1x16x32xf32>
    %148 = vector.shape_cast %147 : vector<1x16x32xf32> to vector<16x32xf32>
    %149 = arith.addf %146, %148 : vector<16x32xf32>
    %150 = vector.extract_strided_slice %101 {offsets = [7, 0, 0], sizes = [1, 16, 32], strides = [1, 1, 1]} : vector<8x16x32xf32> to vector<1x16x32xf32>
    %151 = vector.shape_cast %150 : vector<1x16x32xf32> to vector<16x32xf32>
    %152 = arith.mulf %151, %149 : vector<16x32xf32>
    %153 = vector.extract_strided_slice %106 {offsets = [7, 0, 0], sizes = [1, 16, 32], strides = [1, 1, 1]} : vector<8x16x32xf32> to vector<1x16x32xf32>
    %154 = vector.shape_cast %153 : vector<1x16x32xf32> to vector<16x32xf32>
    %155 = arith.addf %152, %154 : vector<16x32xf32>
    %156 = vector.shape_cast %113 : vector<16x32xf32> to vector<1x16x32xf32>
    %157 = vector.shape_cast %119 : vector<16x32xf32> to vector<1x16x32xf32>
    %158 = vector.shape_cast %125 : vector<16x32xf32> to vector<1x16x32xf32>
    %159 = vector.shape_cast %131 : vector<16x32xf32> to vector<1x16x32xf32>
    %160 = vector.shape_cast %137 : vector<16x32xf32> to vector<1x16x32xf32>
    %161 = vector.shape_cast %143 : vector<16x32xf32> to vector<1x16x32xf32>
    %162 = vector.shape_cast %149 : vector<16x32xf32> to vector<1x16x32xf32>
    %163 = vector.shape_cast %155 : vector<16x32xf32> to vector<1x16x32xf32>
    %164 = tpu.concatenate %156, %157, %158, %159, %160, %161, %162, %163 in 0 : vector<1x16x32xf32>, vector<1x16x32xf32>, vector<1x16x32xf32>, vector<1x16x32xf32>, vector<1x16x32xf32>, vector<1x16x32xf32>, vector<1x16x32xf32>, vector<1x16x32xf32> -> vector<8x16x32xf32>
    %165 = vector.shape_cast %92 : vector<8x16xf32> to vector<8x16x1xf32>
    %166 = vector.broadcast %165 : vector<8x16x1xf32> to vector<8x16x32xf32>
    %167 = arith.mulf %166, %164 : vector<8x16x32xf32>
    %cst_44 = arith.constant dense<0.000000e+00> : vector<8x32xf32>
    %168 = vector.multi_reduction <add>, %167, %cst_44 [1] : vector<8x16x32xf32> to vector<8x32xf32>
    %c0_45 = arith.constant 0 : index
    %c0_46 = arith.constant 0 : index
    %c0_47 = arith.constant 0 : index
    %169 = vector.load %arg11[%c0_45, %c0_46, %c0_47] : memref<2x1x32xf32, #tpu.memory_space<vmem>>, vector<1x1x32xf32>
    %170 = vector.shape_cast %169 : vector<1x1x32xf32> to vector<1x32xf32>
    %171 = vector.broadcast %170 : vector<1x32xf32> to vector<8x32xf32>
    %172 = arith.mulf %75, %171 : vector<8x32xf32>
    %173 = arith.addf %168, %172 : vector<8x32xf32>
    %174 = arith.negf %53 : vector<8x32xf32>
    %175 = math.exp %174 : vector<8x32xf32>
    %cst_48 = arith.constant 1.000000e+00 : f32
    %176 = vector.broadcast %cst_48 : f32 to vector<8x32xf32>
    %177 = arith.addf %176, %175 : vector<8x32xf32>
    %178 = arith.divf %176, %177 : vector<8x32xf32>
    %179 = arith.mulf %53, %178 : vector<8x32xf32>
    %180 = arith.mulf %173, %179 : vector<8x32xf32>
    %c0_49 = arith.constant 0 : index
    %c0_50 = arith.constant 0 : index
    %c0_51 = arith.constant 0 : index
    %181 = vector.load %arg12[%c0_49, %c0_50, %c0_51] : memref<2x32x32xf32, #tpu.memory_space<vmem>>, vector<1x32x32xf32>
    %182 = vector.shape_cast %181 : vector<1x32x32xf32> to vector<32x32xf32>
    %cst_52 = arith.constant dense<0.000000e+00> : vector<8x32xf32>
    %183 = tpu.matmul %180, %182, %cst_52 {dimension_numbers = #tpu.dot_dimension_numbers<[1], [0], [0], [1], [0, 0, 1, 1], [], []>} : vector<8x32xf32>, vector<32x32xf32>, vector<8x32xf32> -> vector<8x32xf32>
    %184 = vector.extract_strided_slice %26 {offsets = [2, 0], sizes = [1, 32], strides = [1, 1]} : vector<8x32xf32> to vector<1x32xf32>
    %185 = vector.extract_strided_slice %26 {offsets = [3, 0], sizes = [1, 32], strides = [1, 1]} : vector<8x32xf32> to vector<1x32xf32>
    %cst_53 = arith.constant dense<0.000000e+00> : vector<8xf32>
    %186 = vector.multi_reduction <add>, %183, %cst_53 [1] : vector<8x32xf32> to vector<8xf32>
    %187 = vector.shape_cast %186 : vector<8xf32> to vector<8x1xf32>
    %cst_54 = arith.constant 3.200000e+01 : f32
    %188 = vector.broadcast %cst_54 : f32 to vector<8x1xf32>
    %189 = arith.divf %187, %188 : vector<8x1xf32>
    %190 = vector.broadcast %189 : vector<8x1xf32> to vector<8x32xf32>
    %191 = arith.subf %183, %190 : vector<8x32xf32>
    %192 = arith.mulf %191, %191 : vector<8x32xf32>
    %cst_55 = arith.constant dense<0.000000e+00> : vector<8xf32>
    %193 = vector.multi_reduction <add>, %192, %cst_55 [1] : vector<8x32xf32> to vector<8xf32>
    %194 = vector.shape_cast %193 : vector<8xf32> to vector<8x1xf32>
    %cst_56 = arith.constant 3.200000e+01 : f32
    %195 = vector.broadcast %cst_56 : f32 to vector<8x1xf32>
    %196 = arith.divf %194, %195 : vector<8x1xf32>
    %cst_57 = arith.constant 9.99999974E-6 : f32
    %197 = vector.broadcast %cst_57 : f32 to vector<8x1xf32>
    %198 = arith.addf %196, %197 : vector<8x1xf32>
    %199 = math.rsqrt %198 : vector<8x1xf32>
    %200 = vector.broadcast %199 : vector<8x1xf32> to vector<8x32xf32>
    %201 = arith.mulf %191, %200 : vector<8x32xf32>
    %202 = vector.broadcast %184 : vector<1x32xf32> to vector<8x32xf32>
    %203 = arith.mulf %201, %202 : vector<8x32xf32>
    %204 = vector.broadcast %185 : vector<1x32xf32> to vector<8x32xf32>
    %205 = arith.addf %203, %204 : vector<8x32xf32>
    %206 = arith.addf %24, %205 : vector<8x32xf32>
    %207 = vector.extract_strided_slice %26 {offsets = [4, 0], sizes = [1, 32], strides = [1, 1]} : vector<8x32xf32> to vector<1x32xf32>
    %208 = vector.extract_strided_slice %26 {offsets = [5, 0], sizes = [1, 32], strides = [1, 1]} : vector<8x32xf32> to vector<1x32xf32>
    %cst_58 = arith.constant dense<0.000000e+00> : vector<8xf32>
    %209 = vector.multi_reduction <add>, %206, %cst_58 [1] : vector<8x32xf32> to vector<8xf32>
    %210 = vector.shape_cast %209 : vector<8xf32> to vector<8x1xf32>
    %cst_59 = arith.constant 3.200000e+01 : f32
    %211 = vector.broadcast %cst_59 : f32 to vector<8x1xf32>
    %212 = arith.divf %210, %211 : vector<8x1xf32>
    %213 = vector.broadcast %212 : vector<8x1xf32> to vector<8x32xf32>
    %214 = arith.subf %206, %213 : vector<8x32xf32>
    %215 = arith.mulf %214, %214 : vector<8x32xf32>
    %cst_60 = arith.constant dense<0.000000e+00> : vector<8xf32>
    %216 = vector.multi_reduction <add>, %215, %cst_60 [1] : vector<8x32xf32> to vector<8xf32>
    %217 = vector.shape_cast %216 : vector<8xf32> to vector<8x1xf32>
    %cst_61 = arith.constant 3.200000e+01 : f32
    %218 = vector.broadcast %cst_61 : f32 to vector<8x1xf32>
    %219 = arith.divf %217, %218 : vector<8x1xf32>
    %cst_62 = arith.constant 9.99999974E-6 : f32
    %220 = vector.broadcast %cst_62 : f32 to vector<8x1xf32>
    %221 = arith.addf %219, %220 : vector<8x1xf32>
    %222 = math.rsqrt %221 : vector<8x1xf32>
    %223 = vector.broadcast %222 : vector<8x1xf32> to vector<8x32xf32>
    %224 = arith.mulf %214, %223 : vector<8x32xf32>
    %225 = vector.broadcast %207 : vector<1x32xf32> to vector<8x32xf32>
    %226 = arith.mulf %224, %225 : vector<8x32xf32>
    %227 = vector.broadcast %208 : vector<1x32xf32> to vector<8x32xf32>
    %228 = arith.addf %226, %227 : vector<8x32xf32>
    %c0_63 = arith.constant 0 : index
    %c0_64 = arith.constant 0 : index
    %c0_65 = arith.constant 0 : index
    %229 = vector.load %arg13[%c0_63, %c0_64, %c0_65] : memref<2x32x64xf32, #tpu.memory_space<vmem>>, vector<1x32x64xf32>
    %230 = vector.shape_cast %229 : vector<1x32x64xf32> to vector<32x64xf32>
    %cst_66 = arith.constant dense<0.000000e+00> : vector<8x64xf32>
    %231 = tpu.matmul %228, %230, %cst_66 {dimension_numbers = #tpu.dot_dimension_numbers<[1], [0], [0], [1], [0, 0, 1, 1], [], []>} : vector<8x32xf32>, vector<32x64xf32>, vector<8x64xf32> -> vector<8x64xf32>
    %cst_67 = arith.constant 0.000000e+00 : f32
    %232 = vector.broadcast %cst_67 : f32 to vector<8x64xf32>
    %233 = arith.cmpf oge, %231, %232 : vector<8x64xf32>
    %cst_68 = arith.constant 0.00999999977 : f32
    %234 = vector.broadcast %cst_68 : f32 to vector<8x64xf32>
    %235 = arith.mulf %234, %231 : vector<8x64xf32>
    %236 = arith.select %233, %231, %235 : vector<8x64xi1>, vector<8x64xf32>
    %c0_69 = arith.constant 0 : index
    %c0_70 = arith.constant 0 : index
    %c0_71 = arith.constant 0 : index
    %237 = vector.load %arg14[%c0_69, %c0_70, %c0_71] : memref<2x64x32xf32, #tpu.memory_space<vmem>>, vector<1x64x32xf32>
    %238 = vector.shape_cast %237 : vector<1x64x32xf32> to vector<64x32xf32>
    %cst_72 = arith.constant dense<0.000000e+00> : vector<8x32xf32>
    %239 = tpu.matmul %236, %238, %cst_72 {dimension_numbers = #tpu.dot_dimension_numbers<[1], [0], [0], [1], [0, 0, 1, 1], [], []>} : vector<8x64xf32>, vector<64x32xf32>, vector<8x32xf32> -> vector<8x32xf32>
    %240 = arith.addf %206, %239 : vector<8x32xf32>
    %241 = vector.extract_strided_slice %26 {offsets = [6, 0], sizes = [1, 32], strides = [1, 1]} : vector<8x32xf32> to vector<1x32xf32>
    %242 = vector.extract_strided_slice %26 {offsets = [7, 0], sizes = [1, 32], strides = [1, 1]} : vector<8x32xf32> to vector<1x32xf32>
    %cst_73 = arith.constant dense<0.000000e+00> : vector<8xf32>
    %243 = vector.multi_reduction <add>, %240, %cst_73 [1] : vector<8x32xf32> to vector<8xf32>
    %244 = vector.shape_cast %243 : vector<8xf32> to vector<8x1xf32>
    %cst_74 = arith.constant 3.200000e+01 : f32
    %245 = vector.broadcast %cst_74 : f32 to vector<8x1xf32>
    %246 = arith.divf %244, %245 : vector<8x1xf32>
    %247 = vector.broadcast %246 : vector<8x1xf32> to vector<8x32xf32>
    %248 = arith.subf %240, %247 : vector<8x32xf32>
    %249 = arith.mulf %248, %248 : vector<8x32xf32>
    %cst_75 = arith.constant dense<0.000000e+00> : vector<8xf32>
    %250 = vector.multi_reduction <add>, %249, %cst_75 [1] : vector<8x32xf32> to vector<8xf32>
    %251 = vector.shape_cast %250 : vector<8xf32> to vector<8x1xf32>
    %cst_76 = arith.constant 3.200000e+01 : f32
    %252 = vector.broadcast %cst_76 : f32 to vector<8x1xf32>
    %253 = arith.divf %251, %252 : vector<8x1xf32>
    %cst_77 = arith.constant 9.99999974E-6 : f32
    %254 = vector.broadcast %cst_77 : f32 to vector<8x1xf32>
    %255 = arith.addf %253, %254 : vector<8x1xf32>
    %256 = math.rsqrt %255 : vector<8x1xf32>
    %257 = vector.broadcast %256 : vector<8x1xf32> to vector<8x32xf32>
    %258 = arith.mulf %248, %257 : vector<8x32xf32>
    %259 = vector.broadcast %241 : vector<1x32xf32> to vector<8x32xf32>
    %260 = arith.mulf %258, %259 : vector<8x32xf32>
    %261 = vector.broadcast %242 : vector<1x32xf32> to vector<8x32xf32>
    %262 = arith.addf %260, %261 : vector<8x32xf32>
    %c0_78 = arith.constant 0 : index
    %c0_79 = arith.constant 0 : index
    %c0_80 = arith.constant 0 : index
    %263 = vector.load %arg15[%c0_78, %c0_79, %c0_80] : memref<2x32x32xf32, #tpu.memory_space<vmem>>, vector<1x32x32xf32>
    %264 = vector.shape_cast %263 : vector<1x32x32xf32> to vector<32x32xf32>
    %cst_81 = arith.constant dense<0.000000e+00> : vector<8x32xf32>
    %265 = tpu.matmul %262, %264, %cst_81 {dimension_numbers = #tpu.dot_dimension_numbers<[1], [0], [0], [1], [0, 0, 1, 1], [], []>} : vector<8x32xf32>, vector<32x32xf32>, vector<8x32xf32> -> vector<8x32xf32>
    %c0_82 = arith.constant 0 : index
    %c0_83 = arith.constant 0 : index
    %c0_84 = arith.constant 0 : index
    %266 = vector.load %arg16[%c0_82, %c0_83, %c0_84] : memref<2x1x32xf32, #tpu.memory_space<vmem>>, vector<1x1x32xf32>
    %267 = vector.shape_cast %266 : vector<1x1x32xf32> to vector<1x32xf32>
    %268 = vector.broadcast %267 : vector<1x32xf32> to vector<8x32xf32>
    %269 = arith.addf %265, %268 : vector<8x32xf32>
    %270 = arith.addf %240, %269 : vector<8x32xf32>
    %c1 = arith.constant 1 : index
    %c0_85 = arith.constant 0 : index
    %c0_86 = arith.constant 0 : index
    %271 = vector.load %arg4[%c1, %c0_85, %c0_86] : memref<2x8x32xf32, #tpu.memory_space<vmem>>, vector<1x8x32xf32>
    %272 = vector.shape_cast %271 : vector<1x8x32xf32> to vector<8x32xf32>
    %273 = vector.extract_strided_slice %272 {offsets = [0, 0], sizes = [1, 32], strides = [1, 1]} : vector<8x32xf32> to vector<1x32xf32>
    %274 = vector.extract_strided_slice %272 {offsets = [1, 0], sizes = [1, 32], strides = [1, 1]} : vector<8x32xf32> to vector<1x32xf32>
    %cst_87 = arith.constant dense<0.000000e+00> : vector<8xf32>
    %275 = vector.multi_reduction <add>, %270, %cst_87 [1] : vector<8x32xf32> to vector<8xf32>
    %276 = vector.shape_cast %275 : vector<8xf32> to vector<8x1xf32>
    %cst_88 = arith.constant 3.200000e+01 : f32
    %277 = vector.broadcast %cst_88 : f32 to vector<8x1xf32>
    %278 = arith.divf %276, %277 : vector<8x1xf32>
    %279 = vector.broadcast %278 : vector<8x1xf32> to vector<8x32xf32>
    %280 = arith.subf %270, %279 : vector<8x32xf32>
    %281 = arith.mulf %280, %280 : vector<8x32xf32>
    %cst_89 = arith.constant dense<0.000000e+00> : vector<8xf32>
    %282 = vector.multi_reduction <add>, %281, %cst_89 [1] : vector<8x32xf32> to vector<8xf32>
    %283 = vector.shape_cast %282 : vector<8xf32> to vector<8x1xf32>
    %cst_90 = arith.constant 3.200000e+01 : f32
    %284 = vector.broadcast %cst_90 : f32 to vector<8x1xf32>
    %285 = arith.divf %283, %284 : vector<8x1xf32>
    %cst_91 = arith.constant 9.99999974E-6 : f32
    %286 = vector.broadcast %cst_91 : f32 to vector<8x1xf32>
    %287 = arith.addf %285, %286 : vector<8x1xf32>
    %288 = math.rsqrt %287 : vector<8x1xf32>
    %289 = vector.broadcast %288 : vector<8x1xf32> to vector<8x32xf32>
    %290 = arith.mulf %280, %289 : vector<8x32xf32>
    %291 = vector.broadcast %273 : vector<1x32xf32> to vector<8x32xf32>
    %292 = arith.mulf %290, %291 : vector<8x32xf32>
    %293 = vector.broadcast %274 : vector<1x32xf32> to vector<8x32xf32>
    %294 = arith.addf %292, %293 : vector<8x32xf32>
    %c1_92 = arith.constant 1 : index
    %c0_93 = arith.constant 0 : index
    %c0_94 = arith.constant 0 : index
    %295 = vector.load %arg5[%c1_92, %c0_93, %c0_94] : memref<2x32x64xf32, #tpu.memory_space<vmem>>, vector<1x32x64xf32>
    %296 = vector.shape_cast %295 : vector<1x32x64xf32> to vector<32x64xf32>
    %cst_95 = arith.constant dense<0.000000e+00> : vector<8x64xf32>
    %297 = tpu.matmul %294, %296, %cst_95 {dimension_numbers = #tpu.dot_dimension_numbers<[1], [0], [0], [1], [0, 0, 1, 1], [], []>} : vector<8x32xf32>, vector<32x64xf32>, vector<8x64xf32> -> vector<8x64xf32>
    %298 = vector.extract_strided_slice %297 {offsets = [0, 0], sizes = [8, 32], strides = [1, 1]} : vector<8x64xf32> to vector<8x32xf32>
    %299 = vector.extract_strided_slice %297 {offsets = [0, 32], sizes = [8, 32], strides = [1, 1]} : vector<8x64xf32> to vector<8x32xf32>
    %c1_96 = arith.constant 1 : index
    %c0_97 = arith.constant 0 : index
    %c0_98 = arith.constant 0 : index
    %300 = vector.load %arg6[%c1_96, %c0_97, %c0_98] : memref<2x2x32xf32, #tpu.memory_space<vmem>>, vector<1x2x32xf32>
    %301 = vector.shape_cast %300 : vector<1x2x32xf32> to vector<2x32xf32>
    %cst_99 = arith.constant 0.000000e+00 : f32
    %302 = vector.broadcast %cst_99 : f32 to vector<1x32xf32>
    %303 = vector.extract_strided_slice %298 {offsets = [0, 0], sizes = [7, 32], strides = [1, 1]} : vector<8x32xf32> to vector<7x32xf32>
    %304 = tpu.concatenate %302, %303 in 0 : vector<1x32xf32>, vector<7x32xf32> -> vector<8x32xf32>
    %305 = vector.extract_strided_slice %301 {offsets = [1, 0], sizes = [1, 32], strides = [1, 1]} : vector<2x32xf32> to vector<1x32xf32>
    %306 = vector.broadcast %305 : vector<1x32xf32> to vector<8x32xf32>
    %307 = arith.mulf %298, %306 : vector<8x32xf32>
    %308 = vector.extract_strided_slice %301 {offsets = [0, 0], sizes = [1, 32], strides = [1, 1]} : vector<2x32xf32> to vector<1x32xf32>
    %309 = vector.broadcast %308 : vector<1x32xf32> to vector<8x32xf32>
    %310 = arith.mulf %304, %309 : vector<8x32xf32>
    %311 = arith.addf %307, %310 : vector<8x32xf32>
    %c1_100 = arith.constant 1 : index
    %c0_101 = arith.constant 0 : index
    %c0_102 = arith.constant 0 : index
    %312 = vector.load %arg7[%c1_100, %c0_101, %c0_102] : memref<2x1x32xf32, #tpu.memory_space<vmem>>, vector<1x1x32xf32>
    %313 = vector.shape_cast %312 : vector<1x1x32xf32> to vector<1x32xf32>
    %314 = vector.broadcast %313 : vector<1x32xf32> to vector<8x32xf32>
    %315 = arith.addf %311, %314 : vector<8x32xf32>
    %316 = arith.negf %315 : vector<8x32xf32>
    %317 = math.exp %316 : vector<8x32xf32>
    %cst_103 = arith.constant 1.000000e+00 : f32
    %318 = vector.broadcast %cst_103 : f32 to vector<8x32xf32>
    %319 = arith.addf %318, %317 : vector<8x32xf32>
    %320 = arith.divf %318, %319 : vector<8x32xf32>
    %321 = arith.mulf %315, %320 : vector<8x32xf32>
    %c1_104 = arith.constant 1 : index
    %c0_105 = arith.constant 0 : index
    %c0_106 = arith.constant 0 : index
    %322 = vector.load %arg8[%c1_104, %c0_105, %c0_106] : memref<2x32x64xf32, #tpu.memory_space<vmem>>, vector<1x32x64xf32>
    %323 = vector.shape_cast %322 : vector<1x32x64xf32> to vector<32x64xf32>
    %cst_107 = arith.constant dense<0.000000e+00> : vector<8x64xf32>
    %324 = tpu.matmul %321, %323, %cst_107 {dimension_numbers = #tpu.dot_dimension_numbers<[1], [0], [0], [1], [0, 0, 1, 1], [], []>} : vector<8x32xf32>, vector<32x64xf32>, vector<8x64xf32> -> vector<8x64xf32>
    %325 = vector.extract_strided_slice %324 {offsets = [0, 0], sizes = [8, 32], strides = [1, 1]} : vector<8x64xf32> to vector<8x32xf32>
    %c1_108 = arith.constant 1 : index
    %c0_109 = arith.constant 0 : index
    %c0_110 = arith.constant 0 : index
    %326 = vector.load %arg9[%c1_108, %c0_109, %c0_110] : memref<2x1x32xf32, #tpu.memory_space<vmem>>, vector<1x1x32xf32>
    %327 = vector.shape_cast %326 : vector<1x1x32xf32> to vector<1x32xf32>
    %328 = vector.broadcast %327 : vector<1x32xf32> to vector<8x32xf32>
    %329 = arith.addf %325, %328 : vector<8x32xf32>
    %cst_111 = arith.constant 2.000000e+01 : f32
    %330 = vector.broadcast %cst_111 : f32 to vector<8x32xf32>
    %331 = arith.cmpf ogt, %329, %330 : vector<8x32xf32>
    %cst_112 = arith.constant 2.000000e+01 : f32
    %332 = vector.broadcast %cst_112 : f32 to vector<8x32xf32>
    %333 = arith.minimumf %329, %332 : vector<8x32xf32>
    %334 = math.exp %333 : vector<8x32xf32>
    %335 = math.log1p %334 : vector<8x32xf32>
    %336 = arith.select %331, %329, %335 : vector<8x32xi1>, vector<8x32xf32>
    %337 = vector.extract_strided_slice %324 {offsets = [0, 32], sizes = [8, 16], strides = [1, 1]} : vector<8x64xf32> to vector<8x16xf32>
    %338 = vector.extract_strided_slice %324 {offsets = [0, 48], sizes = [8, 16], strides = [1, 1]} : vector<8x64xf32> to vector<8x16xf32>
    %c1_113 = arith.constant 1 : index
    %c0_114 = arith.constant 0 : index
    %c0_115 = arith.constant 0 : index
    %339 = vector.load %arg10[%c1_113, %c0_114, %c0_115] : memref<2x16x32xf32, #tpu.memory_space<vmem>>, vector<1x16x32xf32>
    %340 = vector.shape_cast %339 : vector<1x16x32xf32> to vector<16x32xf32>
    %341 = arith.mulf %336, %321 : vector<8x32xf32>
    %342 = vector.shape_cast %336 : vector<8x32xf32> to vector<8x1x32xf32>
    %343 = vector.shape_cast %340 : vector<16x32xf32> to vector<1x16x32xf32>
    %344 = vector.broadcast %342 : vector<8x1x32xf32> to vector<8x16x32xf32>
    %345 = vector.broadcast %343 : vector<1x16x32xf32> to vector<8x16x32xf32>
    %346 = arith.mulf %344, %345 : vector<8x16x32xf32>
    %347 = math.exp %346 : vector<8x16x32xf32>
    %348 = vector.shape_cast %337 : vector<8x16xf32> to vector<8x16x1xf32>
    %349 = vector.shape_cast %341 : vector<8x32xf32> to vector<8x1x32xf32>
    %350 = vector.broadcast %348 : vector<8x16x1xf32> to vector<8x16x32xf32>
    %351 = vector.broadcast %349 : vector<8x1x32xf32> to vector<8x16x32xf32>
    %352 = arith.mulf %350, %351 : vector<8x16x32xf32>
    %cst_116 = arith.constant 0.000000e+00 : f32
    %353 = vector.broadcast %cst_116 : f32 to vector<16x32xf32>
    %354 = vector.extract_strided_slice %347 {offsets = [0, 0, 0], sizes = [1, 16, 32], strides = [1, 1, 1]} : vector<8x16x32xf32> to vector<1x16x32xf32>
    %355 = vector.shape_cast %354 : vector<1x16x32xf32> to vector<16x32xf32>
    %356 = arith.mulf %355, %353 : vector<16x32xf32>
    %357 = vector.extract_strided_slice %352 {offsets = [0, 0, 0], sizes = [1, 16, 32], strides = [1, 1, 1]} : vector<8x16x32xf32> to vector<1x16x32xf32>
    %358 = vector.shape_cast %357 : vector<1x16x32xf32> to vector<16x32xf32>
    %359 = arith.addf %356, %358 : vector<16x32xf32>
    %360 = vector.extract_strided_slice %347 {offsets = [1, 0, 0], sizes = [1, 16, 32], strides = [1, 1, 1]} : vector<8x16x32xf32> to vector<1x16x32xf32>
    %361 = vector.shape_cast %360 : vector<1x16x32xf32> to vector<16x32xf32>
    %362 = arith.mulf %361, %359 : vector<16x32xf32>
    %363 = vector.extract_strided_slice %352 {offsets = [1, 0, 0], sizes = [1, 16, 32], strides = [1, 1, 1]} : vector<8x16x32xf32> to vector<1x16x32xf32>
    %364 = vector.shape_cast %363 : vector<1x16x32xf32> to vector<16x32xf32>
    %365 = arith.addf %362, %364 : vector<16x32xf32>
    %366 = vector.extract_strided_slice %347 {offsets = [2, 0, 0], sizes = [1, 16, 32], strides = [1, 1, 1]} : vector<8x16x32xf32> to vector<1x16x32xf32>
    %367 = vector.shape_cast %366 : vector<1x16x32xf32> to vector<16x32xf32>
    %368 = arith.mulf %367, %365 : vector<16x32xf32>
    %369 = vector.extract_strided_slice %352 {offsets = [2, 0, 0], sizes = [1, 16, 32], strides = [1, 1, 1]} : vector<8x16x32xf32> to vector<1x16x32xf32>
    %370 = vector.shape_cast %369 : vector<1x16x32xf32> to vector<16x32xf32>
    %371 = arith.addf %368, %370 : vector<16x32xf32>
    %372 = vector.extract_strided_slice %347 {offsets = [3, 0, 0], sizes = [1, 16, 32], strides = [1, 1, 1]} : vector<8x16x32xf32> to vector<1x16x32xf32>
    %373 = vector.shape_cast %372 : vector<1x16x32xf32> to vector<16x32xf32>
    %374 = arith.mulf %373, %371 : vector<16x32xf32>
    %375 = vector.extract_strided_slice %352 {offsets = [3, 0, 0], sizes = [1, 16, 32], strides = [1, 1, 1]} : vector<8x16x32xf32> to vector<1x16x32xf32>
    %376 = vector.shape_cast %375 : vector<1x16x32xf32> to vector<16x32xf32>
    %377 = arith.addf %374, %376 : vector<16x32xf32>
    %378 = vector.extract_strided_slice %347 {offsets = [4, 0, 0], sizes = [1, 16, 32], strides = [1, 1, 1]} : vector<8x16x32xf32> to vector<1x16x32xf32>
    %379 = vector.shape_cast %378 : vector<1x16x32xf32> to vector<16x32xf32>
    %380 = arith.mulf %379, %377 : vector<16x32xf32>
    %381 = vector.extract_strided_slice %352 {offsets = [4, 0, 0], sizes = [1, 16, 32], strides = [1, 1, 1]} : vector<8x16x32xf32> to vector<1x16x32xf32>
    %382 = vector.shape_cast %381 : vector<1x16x32xf32> to vector<16x32xf32>
    %383 = arith.addf %380, %382 : vector<16x32xf32>
    %384 = vector.extract_strided_slice %347 {offsets = [5, 0, 0], sizes = [1, 16, 32], strides = [1, 1, 1]} : vector<8x16x32xf32> to vector<1x16x32xf32>
    %385 = vector.shape_cast %384 : vector<1x16x32xf32> to vector<16x32xf32>
    %386 = arith.mulf %385, %383 : vector<16x32xf32>
    %387 = vector.extract_strided_slice %352 {offsets = [5, 0, 0], sizes = [1, 16, 32], strides = [1, 1, 1]} : vector<8x16x32xf32> to vector<1x16x32xf32>
    %388 = vector.shape_cast %387 : vector<1x16x32xf32> to vector<16x32xf32>
    %389 = arith.addf %386, %388 : vector<16x32xf32>
    %390 = vector.extract_strided_slice %347 {offsets = [6, 0, 0], sizes = [1, 16, 32], strides = [1, 1, 1]} : vector<8x16x32xf32> to vector<1x16x32xf32>
    %391 = vector.shape_cast %390 : vector<1x16x32xf32> to vector<16x32xf32>
    %392 = arith.mulf %391, %389 : vector<16x32xf32>
    %393 = vector.extract_strided_slice %352 {offsets = [6, 0, 0], sizes = [1, 16, 32], strides = [1, 1, 1]} : vector<8x16x32xf32> to vector<1x16x32xf32>
    %394 = vector.shape_cast %393 : vector<1x16x32xf32> to vector<16x32xf32>
    %395 = arith.addf %392, %394 : vector<16x32xf32>
    %396 = vector.extract_strided_slice %347 {offsets = [7, 0, 0], sizes = [1, 16, 32], strides = [1, 1, 1]} : vector<8x16x32xf32> to vector<1x16x32xf32>
    %397 = vector.shape_cast %396 : vector<1x16x32xf32> to vector<16x32xf32>
    %398 = arith.mulf %397, %395 : vector<16x32xf32>
    %399 = vector.extract_strided_slice %352 {offsets = [7, 0, 0], sizes = [1, 16, 32], strides = [1, 1, 1]} : vector<8x16x32xf32> to vector<1x16x32xf32>
    %400 = vector.shape_cast %399 : vector<1x16x32xf32> to vector<16x32xf32>
    %401 = arith.addf %398, %400 : vector<16x32xf32>
    %402 = vector.shape_cast %359 : vector<16x32xf32> to vector<1x16x32xf32>
    %403 = vector.shape_cast %365 : vector<16x32xf32> to vector<1x16x32xf32>
    %404 = vector.shape_cast %371 : vector<16x32xf32> to vector<1x16x32xf32>
    %405 = vector.shape_cast %377 : vector<16x32xf32> to vector<1x16x32xf32>
    %406 = vector.shape_cast %383 : vector<16x32xf32> to vector<1x16x32xf32>
    %407 = vector.shape_cast %389 : vector<16x32xf32> to vector<1x16x32xf32>
    %408 = vector.shape_cast %395 : vector<16x32xf32> to vector<1x16x32xf32>
    %409 = vector.shape_cast %401 : vector<16x32xf32> to vector<1x16x32xf32>
    %410 = tpu.concatenate %402, %403, %404, %405, %406, %407, %408, %409 in 0 : vector<1x16x32xf32>, vector<1x16x32xf32>, vector<1x16x32xf32>, vector<1x16x32xf32>, vector<1x16x32xf32>, vector<1x16x32xf32>, vector<1x16x32xf32>, vector<1x16x32xf32> -> vector<8x16x32xf32>
    %411 = vector.shape_cast %338 : vector<8x16xf32> to vector<8x16x1xf32>
    %412 = vector.broadcast %411 : vector<8x16x1xf32> to vector<8x16x32xf32>
    %413 = arith.mulf %412, %410 : vector<8x16x32xf32>
    %cst_117 = arith.constant dense<0.000000e+00> : vector<8x32xf32>
    %414 = vector.multi_reduction <add>, %413, %cst_117 [1] : vector<8x16x32xf32> to vector<8x32xf32>
    %c1_118 = arith.constant 1 : index
    %c0_119 = arith.constant 0 : index
    %c0_120 = arith.constant 0 : index
    %415 = vector.load %arg11[%c1_118, %c0_119, %c0_120] : memref<2x1x32xf32, #tpu.memory_space<vmem>>, vector<1x1x32xf32>
    %416 = vector.shape_cast %415 : vector<1x1x32xf32> to vector<1x32xf32>
    %417 = vector.broadcast %416 : vector<1x32xf32> to vector<8x32xf32>
    %418 = arith.mulf %321, %417 : vector<8x32xf32>
    %419 = arith.addf %414, %418 : vector<8x32xf32>
    %420 = arith.negf %299 : vector<8x32xf32>
    %421 = math.exp %420 : vector<8x32xf32>
    %cst_121 = arith.constant 1.000000e+00 : f32
    %422 = vector.broadcast %cst_121 : f32 to vector<8x32xf32>
    %423 = arith.addf %422, %421 : vector<8x32xf32>
    %424 = arith.divf %422, %423 : vector<8x32xf32>
    %425 = arith.mulf %299, %424 : vector<8x32xf32>
    %426 = arith.mulf %419, %425 : vector<8x32xf32>
    %c1_122 = arith.constant 1 : index
    %c0_123 = arith.constant 0 : index
    %c0_124 = arith.constant 0 : index
    %427 = vector.load %arg12[%c1_122, %c0_123, %c0_124] : memref<2x32x32xf32, #tpu.memory_space<vmem>>, vector<1x32x32xf32>
    %428 = vector.shape_cast %427 : vector<1x32x32xf32> to vector<32x32xf32>
    %cst_125 = arith.constant dense<0.000000e+00> : vector<8x32xf32>
    %429 = tpu.matmul %426, %428, %cst_125 {dimension_numbers = #tpu.dot_dimension_numbers<[1], [0], [0], [1], [0, 0, 1, 1], [], []>} : vector<8x32xf32>, vector<32x32xf32>, vector<8x32xf32> -> vector<8x32xf32>
    %430 = vector.extract_strided_slice %272 {offsets = [2, 0], sizes = [1, 32], strides = [1, 1]} : vector<8x32xf32> to vector<1x32xf32>
    %431 = vector.extract_strided_slice %272 {offsets = [3, 0], sizes = [1, 32], strides = [1, 1]} : vector<8x32xf32> to vector<1x32xf32>
    %cst_126 = arith.constant dense<0.000000e+00> : vector<8xf32>
    %432 = vector.multi_reduction <add>, %429, %cst_126 [1] : vector<8x32xf32> to vector<8xf32>
    %433 = vector.shape_cast %432 : vector<8xf32> to vector<8x1xf32>
    %cst_127 = arith.constant 3.200000e+01 : f32
    %434 = vector.broadcast %cst_127 : f32 to vector<8x1xf32>
    %435 = arith.divf %433, %434 : vector<8x1xf32>
    %436 = vector.broadcast %435 : vector<8x1xf32> to vector<8x32xf32>
    %437 = arith.subf %429, %436 : vector<8x32xf32>
    %438 = arith.mulf %437, %437 : vector<8x32xf32>
    %cst_128 = arith.constant dense<0.000000e+00> : vector<8xf32>
    %439 = vector.multi_reduction <add>, %438, %cst_128 [1] : vector<8x32xf32> to vector<8xf32>
    %440 = vector.shape_cast %439 : vector<8xf32> to vector<8x1xf32>
    %cst_129 = arith.constant 3.200000e+01 : f32
    %441 = vector.broadcast %cst_129 : f32 to vector<8x1xf32>
    %442 = arith.divf %440, %441 : vector<8x1xf32>
    %cst_130 = arith.constant 9.99999974E-6 : f32
    %443 = vector.broadcast %cst_130 : f32 to vector<8x1xf32>
    %444 = arith.addf %442, %443 : vector<8x1xf32>
    %445 = math.rsqrt %444 : vector<8x1xf32>
    %446 = vector.broadcast %445 : vector<8x1xf32> to vector<8x32xf32>
    %447 = arith.mulf %437, %446 : vector<8x32xf32>
    %448 = vector.broadcast %430 : vector<1x32xf32> to vector<8x32xf32>
    %449 = arith.mulf %447, %448 : vector<8x32xf32>
    %450 = vector.broadcast %431 : vector<1x32xf32> to vector<8x32xf32>
    %451 = arith.addf %449, %450 : vector<8x32xf32>
    %452 = arith.addf %270, %451 : vector<8x32xf32>
    %453 = vector.extract_strided_slice %272 {offsets = [4, 0], sizes = [1, 32], strides = [1, 1]} : vector<8x32xf32> to vector<1x32xf32>
    %454 = vector.extract_strided_slice %272 {offsets = [5, 0], sizes = [1, 32], strides = [1, 1]} : vector<8x32xf32> to vector<1x32xf32>
    %cst_131 = arith.constant dense<0.000000e+00> : vector<8xf32>
    %455 = vector.multi_reduction <add>, %452, %cst_131 [1] : vector<8x32xf32> to vector<8xf32>
    %456 = vector.shape_cast %455 : vector<8xf32> to vector<8x1xf32>
    %cst_132 = arith.constant 3.200000e+01 : f32
    %457 = vector.broadcast %cst_132 : f32 to vector<8x1xf32>
    %458 = arith.divf %456, %457 : vector<8x1xf32>
    %459 = vector.broadcast %458 : vector<8x1xf32> to vector<8x32xf32>
    %460 = arith.subf %452, %459 : vector<8x32xf32>
    %461 = arith.mulf %460, %460 : vector<8x32xf32>
    %cst_133 = arith.constant dense<0.000000e+00> : vector<8xf32>
    %462 = vector.multi_reduction <add>, %461, %cst_133 [1] : vector<8x32xf32> to vector<8xf32>
    %463 = vector.shape_cast %462 : vector<8xf32> to vector<8x1xf32>
    %cst_134 = arith.constant 3.200000e+01 : f32
    %464 = vector.broadcast %cst_134 : f32 to vector<8x1xf32>
    %465 = arith.divf %463, %464 : vector<8x1xf32>
    %cst_135 = arith.constant 9.99999974E-6 : f32
    %466 = vector.broadcast %cst_135 : f32 to vector<8x1xf32>
    %467 = arith.addf %465, %466 : vector<8x1xf32>
    %468 = math.rsqrt %467 : vector<8x1xf32>
    %469 = vector.broadcast %468 : vector<8x1xf32> to vector<8x32xf32>
    %470 = arith.mulf %460, %469 : vector<8x32xf32>
    %471 = vector.broadcast %453 : vector<1x32xf32> to vector<8x32xf32>
    %472 = arith.mulf %470, %471 : vector<8x32xf32>
    %473 = vector.broadcast %454 : vector<1x32xf32> to vector<8x32xf32>
    %474 = arith.addf %472, %473 : vector<8x32xf32>
    %c1_136 = arith.constant 1 : index
    %c0_137 = arith.constant 0 : index
    %c0_138 = arith.constant 0 : index
    %475 = vector.load %arg13[%c1_136, %c0_137, %c0_138] : memref<2x32x64xf32, #tpu.memory_space<vmem>>, vector<1x32x64xf32>
    %476 = vector.shape_cast %475 : vector<1x32x64xf32> to vector<32x64xf32>
    %cst_139 = arith.constant dense<0.000000e+00> : vector<8x64xf32>
    %477 = tpu.matmul %474, %476, %cst_139 {dimension_numbers = #tpu.dot_dimension_numbers<[1], [0], [0], [1], [0, 0, 1, 1], [], []>} : vector<8x32xf32>, vector<32x64xf32>, vector<8x64xf32> -> vector<8x64xf32>
    %cst_140 = arith.constant 0.000000e+00 : f32
    %478 = vector.broadcast %cst_140 : f32 to vector<8x64xf32>
    %479 = arith.cmpf oge, %477, %478 : vector<8x64xf32>
    %cst_141 = arith.constant 0.00999999977 : f32
    %480 = vector.broadcast %cst_141 : f32 to vector<8x64xf32>
    %481 = arith.mulf %480, %477 : vector<8x64xf32>
    %482 = arith.select %479, %477, %481 : vector<8x64xi1>, vector<8x64xf32>
    %c1_142 = arith.constant 1 : index
    %c0_143 = arith.constant 0 : index
    %c0_144 = arith.constant 0 : index
    %483 = vector.load %arg14[%c1_142, %c0_143, %c0_144] : memref<2x64x32xf32, #tpu.memory_space<vmem>>, vector<1x64x32xf32>
    %484 = vector.shape_cast %483 : vector<1x64x32xf32> to vector<64x32xf32>
    %cst_145 = arith.constant dense<0.000000e+00> : vector<8x32xf32>
    %485 = tpu.matmul %482, %484, %cst_145 {dimension_numbers = #tpu.dot_dimension_numbers<[1], [0], [0], [1], [0, 0, 1, 1], [], []>} : vector<8x64xf32>, vector<64x32xf32>, vector<8x32xf32> -> vector<8x32xf32>
    %486 = arith.addf %452, %485 : vector<8x32xf32>
    %487 = vector.extract_strided_slice %272 {offsets = [6, 0], sizes = [1, 32], strides = [1, 1]} : vector<8x32xf32> to vector<1x32xf32>
    %488 = vector.extract_strided_slice %272 {offsets = [7, 0], sizes = [1, 32], strides = [1, 1]} : vector<8x32xf32> to vector<1x32xf32>
    %cst_146 = arith.constant dense<0.000000e+00> : vector<8xf32>
    %489 = vector.multi_reduction <add>, %486, %cst_146 [1] : vector<8x32xf32> to vector<8xf32>
    %490 = vector.shape_cast %489 : vector<8xf32> to vector<8x1xf32>
    %cst_147 = arith.constant 3.200000e+01 : f32
    %491 = vector.broadcast %cst_147 : f32 to vector<8x1xf32>
    %492 = arith.divf %490, %491 : vector<8x1xf32>
    %493 = vector.broadcast %492 : vector<8x1xf32> to vector<8x32xf32>
    %494 = arith.subf %486, %493 : vector<8x32xf32>
    %495 = arith.mulf %494, %494 : vector<8x32xf32>
    %cst_148 = arith.constant dense<0.000000e+00> : vector<8xf32>
    %496 = vector.multi_reduction <add>, %495, %cst_148 [1] : vector<8x32xf32> to vector<8xf32>
    %497 = vector.shape_cast %496 : vector<8xf32> to vector<8x1xf32>
    %cst_149 = arith.constant 3.200000e+01 : f32
    %498 = vector.broadcast %cst_149 : f32 to vector<8x1xf32>
    %499 = arith.divf %497, %498 : vector<8x1xf32>
    %cst_150 = arith.constant 9.99999974E-6 : f32
    %500 = vector.broadcast %cst_150 : f32 to vector<8x1xf32>
    %501 = arith.addf %499, %500 : vector<8x1xf32>
    %502 = math.rsqrt %501 : vector<8x1xf32>
    %503 = vector.broadcast %502 : vector<8x1xf32> to vector<8x32xf32>
    %504 = arith.mulf %494, %503 : vector<8x32xf32>
    %505 = vector.broadcast %487 : vector<1x32xf32> to vector<8x32xf32>
    %506 = arith.mulf %504, %505 : vector<8x32xf32>
    %507 = vector.broadcast %488 : vector<1x32xf32> to vector<8x32xf32>
    %508 = arith.addf %506, %507 : vector<8x32xf32>
    %c1_151 = arith.constant 1 : index
    %c0_152 = arith.constant 0 : index
    %c0_153 = arith.constant 0 : index
    %509 = vector.load %arg15[%c1_151, %c0_152, %c0_153] : memref<2x32x32xf32, #tpu.memory_space<vmem>>, vector<1x32x32xf32>
    %510 = vector.shape_cast %509 : vector<1x32x32xf32> to vector<32x32xf32>
    %cst_154 = arith.constant dense<0.000000e+00> : vector<8x32xf32>
    %511 = tpu.matmul %508, %510, %cst_154 {dimension_numbers = #tpu.dot_dimension_numbers<[1], [0], [0], [1], [0, 0, 1, 1], [], []>} : vector<8x32xf32>, vector<32x32xf32>, vector<8x32xf32> -> vector<8x32xf32>
    %c1_155 = arith.constant 1 : index
    %c0_156 = arith.constant 0 : index
    %c0_157 = arith.constant 0 : index
    %512 = vector.load %arg16[%c1_155, %c0_156, %c0_157] : memref<2x1x32xf32, #tpu.memory_space<vmem>>, vector<1x1x32xf32>
    %513 = vector.shape_cast %512 : vector<1x1x32xf32> to vector<1x32xf32>
    %514 = vector.broadcast %513 : vector<1x32xf32> to vector<8x32xf32>
    %515 = arith.addf %511, %514 : vector<8x32xf32>
    %516 = arith.addf %486, %515 : vector<8x32xf32>
    %c0_158 = arith.constant 0 : index
    %c0_159 = arith.constant 0 : index
    %517 = vector.load %arg17[%c0_158, %c0_159] : memref<32x32xf32, #tpu.memory_space<vmem>>, vector<32x32xf32>
    %cst_160 = arith.constant dense<0.000000e+00> : vector<8x32xf32>
    %518 = tpu.matmul %516, %517, %cst_160 {dimension_numbers = #tpu.dot_dimension_numbers<[1], [0], [0], [1], [0, 0, 1, 1], [], []>} : vector<8x32xf32>, vector<32x32xf32>, vector<8x32xf32> -> vector<8x32xf32>
    %c0_161 = arith.constant 0 : index
    %c0_162 = arith.constant 0 : index
    %519 = vector.load %arg18[%c0_161, %c0_162] : memref<1x32xf32, #tpu.memory_space<vmem>>, vector<1x32xf32>
    %520 = vector.broadcast %519 : vector<1x32xf32> to vector<8x32xf32>
    %521 = arith.addf %518, %520 : vector<8x32xf32>
    %cst_163 = arith.constant 0.000000e+00 : f32
    %522 = vector.broadcast %cst_163 : f32 to vector<8x32xf32>
    %523 = arith.maximumf %521, %522 : vector<8x32xf32>
    %c0_164 = arith.constant 0 : index
    %c0_165 = arith.constant 0 : index
    %524 = vector.load %arg19[%c0_164, %c0_165] : memref<32x32xf32, #tpu.memory_space<vmem>>, vector<32x32xf32>
    %cst_166 = arith.constant dense<0.000000e+00> : vector<8x32xf32>
    %525 = tpu.matmul %523, %524, %cst_166 {dimension_numbers = #tpu.dot_dimension_numbers<[1], [0], [0], [1], [0, 0, 1, 1], [], []>} : vector<8x32xf32>, vector<32x32xf32>, vector<8x32xf32> -> vector<8x32xf32>
    %c0_167 = arith.constant 0 : index
    %c0_168 = arith.constant 0 : index
    %526 = vector.load %arg20[%c0_167, %c0_168] : memref<1x32xf32, #tpu.memory_space<vmem>>, vector<1x32xf32>
    %527 = vector.broadcast %526 : vector<1x32xf32> to vector<8x32xf32>
    %528 = arith.addf %525, %527 : vector<8x32xf32>
    %cst_169 = arith.constant 0.000000e+00 : f32
    %529 = vector.broadcast %cst_169 : f32 to vector<8x32xf32>
    %530 = arith.maximumf %528, %529 : vector<8x32xf32>
    %531 = arith.addf %530, %516 : vector<8x32xf32>
    %532 = tpu.concatenate %531, %516 in 1 : vector<8x32xf32>, vector<8x32xf32> -> vector<8x64xf32>
    %c0_170 = arith.constant 0 : index
    %c0_171 = arith.constant 0 : index
    %533 = vector.load %arg21[%c0_170, %c0_171] : memref<64x8xf32, #tpu.memory_space<vmem>>, vector<64x8xf32>
    %cst_172 = arith.constant dense<0.000000e+00> : vector<8x8xf32>
    %534 = tpu.matmul %532, %533, %cst_172 {dimension_numbers = #tpu.dot_dimension_numbers<[1], [0], [0], [1], [0, 0, 1, 1], [], []>} : vector<8x64xf32>, vector<64x8xf32>, vector<8x8xf32> -> vector<8x8xf32>
    %c0_173 = arith.constant 0 : index
    %c0_174 = arith.constant 0 : index
    %535 = vector.load %arg22[%c0_173, %c0_174] : memref<1x8xf32, #tpu.memory_space<vmem>>, vector<1x8xf32>
    %536 = vector.broadcast %535 : vector<1x8xf32> to vector<8x8xf32>
    %537 = arith.addf %534, %536 : vector<8x8xf32>
    %cst_175 = arith.constant 1.000000e+00 : f32
    %538 = vector.broadcast %cst_175 : f32 to vector<1x4xf32>
    %539 = tpu.concatenate %15, %538 in 1 : vector<1x4xf32>, vector<1x4xf32> -> vector<1x8xf32>
    %cst_176 = arith.constant 0.000000e+00 : f32
    %540 = vector.broadcast %cst_176 : f32 to vector<1x4xf32>
    %541 = tpu.concatenate %5, %540 in 1 : vector<1x4xf32>, vector<1x4xf32> -> vector<1x8xf32>
    %542 = vector.broadcast %539 : vector<1x8xf32> to vector<8x8xf32>
    %543 = arith.mulf %537, %542 : vector<8x8xf32>
    %544 = vector.broadcast %541 : vector<1x8xf32> to vector<8x8xf32>
    %545 = arith.addf %543, %544 : vector<8x8xf32>
    %c0_177 = arith.constant 0 : index
    %c0_178 = arith.constant 0 : index
    %c0_179 = arith.constant 0 : index
    %546 = vector.load %arg23[%c0_177, %c0_178, %c0_179] : memref<1x8x8xf32, #tpu.memory_space<vmem>>, vector<1x8x8xf32>
    %547 = vector.shape_cast %546 : vector<1x8x8xf32> to vector<8x8xf32>
    %548 = vector.shape_cast %545 : vector<8x8xf32> to vector<1x8x8xf32>
    tpu.vector_store %arg23[%c0_177, %c0_178, %c0_179], %548 {strides = array<i32>} : memref<1x8x8xf32, #tpu.memory_space<vmem>>, vector<1x8x8xf32>,
    return
  }
  func.func @transform_0(%arg0: i32) -> (i32, i32, i32) {
    %c0_i32 = arith.constant 0 : i32
    %c0_i32_0 = arith.constant 0 : i32
    %c0_i32_1 = arith.constant 0 : i32
    return %arg0, %c0_i32, %c0_i32_0 : i32, i32, i32
  }
  func.func @transform_1(%arg0: i32) -> (i32, i32) {
    %c0_i32 = arith.constant 0 : i32
    %c0_i32_0 = arith.constant 0 : i32
    %c0_i32_1 = arith.constant 0 : i32
    return %c0_i32, %c0_i32_0 : i32, i32
  }
  func.func @transform_2(%arg0: i32) -> (i32, i32) {
    %c0_i32 = arith.constant 0 : i32
    %c0_i32_0 = arith.constant 0 : i32
    %c0_i32_1 = arith.constant 0 : i32
    return %c0_i32, %c0_i32_0 : i32, i32
  }
  func.func @transform_3(%arg0: i32) -> (i32, i32, i32) {
    %c0_i32 = arith.constant 0 : i32
    %c0_i32_0 = arith.constant 0 : i32
    %c0_i32_1 = arith.constant 0 : i32
    %c0_i32_2 = arith.constant 0 : i32
    return %c0_i32, %c0_i32_0, %c0_i32_1 : i32, i32, i32
  }
  func.func @transform_4(%arg0: i32) -> (i32, i32, i32) {
    %c0_i32 = arith.constant 0 : i32
    %c0_i32_0 = arith.constant 0 : i32
    %c0_i32_1 = arith.constant 0 : i32
    %c0_i32_2 = arith.constant 0 : i32
    return %c0_i32, %c0_i32_0, %c0_i32_1 : i32, i32, i32
  }
  func.func @transform_5(%arg0: i32) -> (i32, i32, i32) {
    %c0_i32 = arith.constant 0 : i32
    %c0_i32_0 = arith.constant 0 : i32
    %c0_i32_1 = arith.constant 0 : i32
    %c0_i32_2 = arith.constant 0 : i32
    return %c0_i32, %c0_i32_0, %c0_i32_1 : i32, i32, i32
  }
  func.func @transform_6(%arg0: i32) -> (i32, i32, i32) {
    %c0_i32 = arith.constant 0 : i32
    %c0_i32_0 = arith.constant 0 : i32
    %c0_i32_1 = arith.constant 0 : i32
    %c0_i32_2 = arith.constant 0 : i32
    return %c0_i32, %c0_i32_0, %c0_i32_1 : i32, i32, i32
  }
  func.func @transform_7(%arg0: i32) -> (i32, i32, i32) {
    %c0_i32 = arith.constant 0 : i32
    %c0_i32_0 = arith.constant 0 : i32
    %c0_i32_1 = arith.constant 0 : i32
    %c0_i32_2 = arith.constant 0 : i32
    return %c0_i32, %c0_i32_0, %c0_i32_1 : i32, i32, i32
  }
  func.func @transform_8(%arg0: i32) -> (i32, i32, i32) {
    %c0_i32 = arith.constant 0 : i32
    %c0_i32_0 = arith.constant 0 : i32
    %c0_i32_1 = arith.constant 0 : i32
    %c0_i32_2 = arith.constant 0 : i32
    return %c0_i32, %c0_i32_0, %c0_i32_1 : i32, i32, i32
  }
  func.func @transform_9(%arg0: i32) -> (i32, i32, i32) {
    %c0_i32 = arith.constant 0 : i32
    %c0_i32_0 = arith.constant 0 : i32
    %c0_i32_1 = arith.constant 0 : i32
    %c0_i32_2 = arith.constant 0 : i32
    return %c0_i32, %c0_i32_0, %c0_i32_1 : i32, i32, i32
  }
  func.func @transform_10(%arg0: i32) -> (i32, i32, i32) {
    %c0_i32 = arith.constant 0 : i32
    %c0_i32_0 = arith.constant 0 : i32
    %c0_i32_1 = arith.constant 0 : i32
    %c0_i32_2 = arith.constant 0 : i32
    return %c0_i32, %c0_i32_0, %c0_i32_1 : i32, i32, i32
  }
  func.func @transform_11(%arg0: i32) -> (i32, i32, i32) {
    %c0_i32 = arith.constant 0 : i32
    %c0_i32_0 = arith.constant 0 : i32
    %c0_i32_1 = arith.constant 0 : i32
    %c0_i32_2 = arith.constant 0 : i32
    return %c0_i32, %c0_i32_0, %c0_i32_1 : i32, i32, i32
  }
  func.func @transform_12(%arg0: i32) -> (i32, i32, i32) {
    %c0_i32 = arith.constant 0 : i32
    %c0_i32_0 = arith.constant 0 : i32
    %c0_i32_1 = arith.constant 0 : i32
    %c0_i32_2 = arith.constant 0 : i32
    return %c0_i32, %c0_i32_0, %c0_i32_1 : i32, i32, i32
  }
  func.func @transform_13(%arg0: i32) -> (i32, i32, i32) {
    %c0_i32 = arith.constant 0 : i32
    %c0_i32_0 = arith.constant 0 : i32
    %c0_i32_1 = arith.constant 0 : i32
    %c0_i32_2 = arith.constant 0 : i32
    return %c0_i32, %c0_i32_0, %c0_i32_1 : i32, i32, i32
  }
  func.func @transform_14(%arg0: i32) -> (i32, i32, i32) {
    %c0_i32 = arith.constant 0 : i32
    %c0_i32_0 = arith.constant 0 : i32
    %c0_i32_1 = arith.constant 0 : i32
    %c0_i32_2 = arith.constant 0 : i32
    return %c0_i32, %c0_i32_0, %c0_i32_1 : i32, i32, i32
  }
  func.func @transform_15(%arg0: i32) -> (i32, i32, i32) {
    %c0_i32 = arith.constant 0 : i32
    %c0_i32_0 = arith.constant 0 : i32
    %c0_i32_1 = arith.constant 0 : i32
    %c0_i32_2 = arith.constant 0 : i32
    return %c0_i32, %c0_i32_0, %c0_i32_1 : i32, i32, i32
  }
  func.func @transform_16(%arg0: i32) -> (i32, i32) {
    %c0_i32 = arith.constant 0 : i32
    %c0_i32_0 = arith.constant 0 : i32
    %c0_i32_1 = arith.constant 0 : i32
    return %c0_i32, %c0_i32_0 : i32, i32
  }
  func.func @transform_17(%arg0: i32) -> (i32, i32) {
    %c0_i32 = arith.constant 0 : i32
    %c0_i32_0 = arith.constant 0 : i32
    %c0_i32_1 = arith.constant 0 : i32
    return %c0_i32, %c0_i32_0 : i32, i32
  }
  func.func @transform_18(%arg0: i32) -> (i32, i32) {
    %c0_i32 = arith.constant 0 : i32
    %c0_i32_0 = arith.constant 0 : i32
    %c0_i32_1 = arith.constant 0 : i32
    return %c0_i32, %c0_i32_0 : i32, i32
  }
  func.func @transform_19(%arg0: i32) -> (i32, i32) {
    %c0_i32 = arith.constant 0 : i32
    %c0_i32_0 = arith.constant 0 : i32
    %c0_i32_1 = arith.constant 0 : i32
    return %c0_i32, %c0_i32_0 : i32, i32
  }
  func.func @transform_20(%arg0: i32) -> (i32, i32) {
    %c0_i32 = arith.constant 0 : i32
    %c0_i32_0 = arith.constant 0 : i32
    %c0_i32_1 = arith.constant 0 : i32
    return %c0_i32, %c0_i32_0 : i32, i32
  }
  func.func @transform_21(%arg0: i32) -> (i32, i32) {
    %c0_i32 = arith.constant 0 : i32
    %c0_i32_0 = arith.constant 0 : i32
    %c0_i32_1 = arith.constant 0 : i32
    return %c0_i32, %c0_i32_0 : i32, i32
  }
  func.func @transform_22(%arg0: i32) -> (i32, i32, i32) {
    %c0_i32 = arith.constant 0 : i32
    %c0_i32_0 = arith.constant 0 : i32
    %c0_i32_1 = arith.constant 0 : i32
    return %arg0, %c0_i32, %c0_i32_0 : i32, i32, i32
  }
}

</mosaic_0001>

<llo_original>
// kernel: sensitive_mamba_forward.1
$region0: #{sensitive_mamba_forward.1}
  #allocation0 [shape = 'u32[]', space=smem, size = 0x4, offset = 0x4, fixed_abs, tag = 'smem constant byte address 0x4 - core index']
  #allocation1 [shape = 'u32[144,128]{1,0:T(1,128)}', space=vmem, size = 0x12000, scoped, tag = 'internal scratch']
  %s0 = inlined_call_operand.vmem [shape: f32[2,8,4], index: 0, kind: input, shape index: {}]
  %s1 = inlined_call_operand.hbm [shape: f32[4,32], index: 1, kind: input, shape index: {}]
  %s2 = inlined_call_operand.hbm [shape: f32[1,32], index: 2, kind: input, shape index: {}]
  %s3 = inlined_call_operand.vmem [shape: f32[2,8,32], index: 3, kind: input, shape index: {}]
  %s4 = inlined_call_operand.vmem [shape: f32[2,32,64], index: 4, kind: input, shape index: {}]
  %s5 = inlined_call_operand.hbm [shape: f32[2,2,32], index: 5, kind: input, shape index: {}]
  %s6 = inlined_call_operand.hbm [shape: f32[2,1,32], index: 6, kind: input, shape index: {}]
  %s7 = inlined_call_operand.vmem [shape: f32[2,32,64], index: 7, kind: input, shape index: {}]
  %s8 = inlined_call_operand.hbm [shape: f32[2,1,32], index: 8, kind: input, shape index: {}]
  %s9 = inlined_call_operand.vmem [shape: f32[2,16,32], index: 9, kind: input, shape index: {}]
  %s10 = inlined_call_operand.hbm [shape: f32[2,1,32], index: 10, kind: input, shape index: {}]
  %s11 = inlined_call_operand.vmem [shape: f32[2,32,32], index: 11, kind: input, shape index: {}]
  %s12 = inlined_call_operand.hbm [shape: f32[2,32,64], index: 12, kind: input, shape index: {}]
  %s13 = inlined_call_operand.vmem [shape: f32[2,64,32], index: 13, kind: input, shape index: {}]
  %s14 = inlined_call_operand.hbm [shape: f32[2,32,32], index: 14, kind: input, shape index: {}]
  %s15 = inlined_call_operand.hbm [shape: f32[2,1,32], index: 15, kind: input, shape index: {}]
  %s16 = inlined_call_operand.vmem [shape: f32[32,32], index: 16, kind: input, shape index: {}]
  %s17 = inlined_call_operand.hbm [shape: f32[1,32], index: 17, kind: input, shape index: {}]
  %s18 = inlined_call_operand.hbm [shape: f32[32,32], index: 18, kind: input, shape index: {}]
  %s19 = inlined_call_operand.hbm [shape: f32[1,32], index: 19, kind: input, shape index: {}]
  %s20 = inlined_call_operand.vmem [shape: f32[64,8], index: 20, kind: input, shape index: {}]
  %s21 = inlined_call_operand.hbm [shape: f32[1,8], index: 21, kind: input, shape index: {}]
  %s22 = inlined_call_operand.vmem [shape: f32[2,8,8], index: 22, kind: output, shape index: {}]
  %s23 = sld [smem:[#allocation0]]
  $region173: #{sensitive_mamba_forward.1} parent=0
    _
  %s25 = ssub.s32 1, %s23
  %s26 = scalar_select 0, %s25, %s23
  $region1: #{sensitive_mamba_forward.1} parent=0
    #allocation2 [shape = 'u8[2048]{0}', space=vmem, size = 0x800, scoped, tag = 'input window, operand 1, single buffered']
    #allocation3 [shape = 's32[2]{0}', space=sflag, size = 0x8, scoped, tag = 'scoped memory for sensitive_mamba_forward.1']
    #allocation4 [shape = 'u8[512]{0}', space=vmem, size = 0x400, scoped, tag = 'input window, operand 2, single buffered']
    #allocation5 [shape = 's32[1]{0}', space=sflag, size = 0x4, scoped, tag = 'scoped memory for sensitive_mamba_forward.1']
    #allocation6 [shape = 'u8[2048]{0}', space=vmem, size = 0x800, scoped, tag = 'input window, operand 5, single buffered']
    #allocation7 [shape = 'u8[1024]{0}', space=vmem, size = 0x400, scoped, tag = 'input window, operand 6, single buffered']
    #allocation8 [shape = 's32[1]{0}', space=sflag, size = 0x4, scoped, tag = 'scoped memory for sensitive_mamba_forward.1']
    #allocation9 [shape = 'u8[1024]{0}', space=vmem, size = 0x400, scoped, tag = 'input window, operand 8, single buffered']
    #allocation10 [shape = 'u8[1024]{0}', space=vmem, size = 0x400, scoped, tag = 'input window, operand 10, single buffered']
    #allocation11 [shape = 's32[1]{0}', space=sflag, size = 0x4, scoped, tag = 'scoped memory for sensitive_mamba_forward.1']
    #allocation12 [shape = 'u8[32768]{0}', space=vmem, size = 0x8000, scoped, tag = 'input window, operand 12, single buffered']
    #allocation13 [shape = 'u8[32768]{0}', space=vmem, size = 0x8000, scoped, tag = 'input window, operand 14, single buffered']
    #allocation14 [shape = 's32[1]{0}', space=sflag, size = 0x4, scoped, tag = 'scoped memory for sensitive_mamba_forward.1']
    #allocation15 [shape = 'u8[1024]{0}', space=vmem, size = 0x400, scoped, tag = 'input window, operand 15, single buffered']
    #allocation16 [shape = 'u8[512]{0}', space=vmem, size = 0x400, scoped, tag = 'input window, operand 17, single buffered']
    #allocation17 [shape = 's32[1]{0}', space=sflag, size = 0x4, scoped, tag = 'scoped memory for sensitive_mamba_forward.1']
    #allocation18 [shape = 'u8[16384]{0}', space=vmem, size = 0x4000, scoped, tag = 'input window, operand 18, single buffered']
    #allocation19 [shape = 'u8[512]{0}', space=vmem, size = 0x400, scoped, tag = 'input window, operand 19, single buffered']
    #allocation20 [shape = 's32[1]{0}', space=sflag, size = 0x4, scoped, tag = 'scoped memory for sensitive_mamba_forward.1']
    #allocation21 [shape = 'u8[512]{0}', space=vmem, size = 0x400, scoped, tag = 'input window, operand 21, single buffered']
    %27 = vsyncpa [#allocation3], 0
    %28 = vsyncpa [#allocation5], 0
    %29 = vsyncpa [#allocation8], 0
    %30 = vsyncpa [#allocation11], 0
    %31 = vsyncpa [#allocation14], 0
    %32 = vsyncpa [#allocation17], 0
    %33 = vsyncpa [#allocation20], 0
    loop: start=0, step=1, limit=4
    $region2: #{sensitive_mamba_forward.1} parent=1 // loop_pre_header
      _
    $region3: #{sensitive_mamba_forward.1} parent=1 // loop_header
      %s35 = sphi 0, %s39
      %p36 = scmp.ge.s32.totalorder %s35, 4
      %s45 = sphi 0, %s47
      %s48 = sphi 0, %s45
      %s49 = sphi 0, %s48
      %s65 = sphi 0, %s49
      %s69 = sphi 0, %s69
      %s71 = sphi 0, %s69
      %s72 = sphi 0, %s71
      %s86 = sphi 0, %s72
      %s90 = sphi 0, %s90
      %s92 = sphi 0, %s90
      %s93 = sphi 0, %s92
      %s107 = sphi 0, %s93
      %s111 = sphi 0, %s111
      %s113 = sphi 0, %s111
      %s114 = sphi 0, %s113
      %s128 = sphi 0, %s114
      %s132 = sphi 0, %s132
      %s134 = sphi 0, %s132
      %s135 = sphi 0, %s134
      %s149 = sphi 0, %s135
      %s153 = sphi 0, %s153
      %s155 = sphi 0, %s153
      %s156 = sphi 0, %s155
      %s170 = sphi 0, %s156
      %s174 = sphi 0, %s174
      %s176 = sphi 0, %s174
      %s177 = sphi 0, %s176
      %s191 = sphi 0, %s177
      %s195 = sphi 0, %s195
      %s197 = sphi 0, %s195
      %s198 = sphi 0, %s197
      %s212 = sphi 0, %s198
      %s216 = sphi 0, %s216
      %s218 = sphi 0, %s216
      %s219 = sphi 0, %s218
      %s233 = sphi 0, %s219
      %s237 = sphi 0, %s237
      %s239 = sphi 0, %s237
      %s240 = sphi 0, %s239
      %s254 = sphi 0, %s240
      %s258 = sphi 0, %s258
      %s260 = sphi 0, %s258
      %s261 = sphi 0, %s260
      %s275 = sphi 0, %s261
      %s279 = sphi 0, %s279
      %s281 = sphi 0, %s279
      %s282 = sphi 0, %s281
      %s296 = sphi 0, %s282
      %s300 = sphi 0, %s300
      %s302 = sphi 0, %s300
      %s303 = sphi 0, %s302
      %s317 = sphi 0, %s303
      %s321 = sphi 0, %s321
      %s323 = sphi 0, %s321
      %s324 = sphi 0, %s323
      %s338 = sphi 0, %s324
      %s342 = sphi 0, %s342
      %s344 = sphi 0, %s342
      %s345 = sphi 0, %s344
      %s359 = sphi 0, %s345
      %s363 = sphi 0, %s363
      %s365 = sphi 0, %s363
      %s366 = sphi 0, %s365
      %s380 = sphi 0, %s366
      %s384 = sphi 0, %s384
      %s386 = sphi 0, %s384
      %s387 = sphi 0, %s386
      %s401 = sphi 0, %s387
      %s405 = sphi 0, %s405
      %s407 = sphi 0, %s405
      %s408 = sphi 0, %s407
      %s422 = sphi 0, %s408
      %s426 = sphi 0, %s426
      %s428 = sphi 0, %s426
      %s429 = sphi 0, %s428
      %s443 = sphi 0, %s429
      %s447 = sphi 0, %s447
      %s449 = sphi 0, %s447
      %s450 = sphi 0, %s449
      %s464 = sphi 0, %s450
      %s468 = sphi 0, %s468
      %s470 = sphi 0, %s468
      %s471 = sphi 0, %s470
      %s485 = sphi 0, %s471
      %s489 = sphi 0, %s489
      %s491 = sphi 0, %s489
      %s492 = sphi 0, %s491
      %s506 = sphi 0, %s492
      %s512 = sphi 0, %s514
      %s515 = sphi 0, %s512
      %s516 = sphi 0, %s515
      %s532 = sphi 0, %s516
    $region4: #{sensitive_mamba_forward.1} parent=1 // loop_header_branch
      %38 = sbr.rel (%p36) target = $region8
    $region5: #{sensitive_mamba_forward.1} parent=1 // loop_body
      %s40 = ssub.s32 %s35, 1
      %s41 = ssub.s32 %s35, 2
      %s42 = sadd.s32 %s35, 1
      %s43 = ssub.s32 %s35, %s42
      %p44 = scmp.eq.s32.totalorder %s43, 0
      %s46 = sadd.s32 %s45, 1
      %s47 = scalar_select %p44, %s45, %s46
      %p50 = pneg %p44
      %p51 = scmp.eq.s32.totalorder %s35, 1
      %p52 = por %p50, %p51
      %p53 = scmp.ne.s32.totalorder %s45, %s48
      %p54 = scmp.eq.s32.totalorder %s35, 0
      %p55 = por %p53, %p54
      %p56 = scmp.ne.s32.totalorder %s45, %s48
      %p57 = scmp.eq.s32.totalorder %s40, 1
      %p58 = por %p56, %p57
      %p59 = scmp.ne.s32.totalorder %s48, %s49
      %p60 = scmp.eq.s32.totalorder %s40, 0
      %p61 = por %p59, %p60
      %p62 = scmp.ne.s32.totalorder %s48, %s49
      %p63 = scmp.eq.s32.totalorder %s41, 1
      %p64 = por %p62, %p63
      %p66 = scmp.ne.s32.totalorder %s49, %s65
      %p67 = scmp.eq.s32.totalorder %s41, 0
      %p68 = por %p66, %p67
      %s70 = sadd.s32 %s69, 1
      %p73 = scmp.eq.s32.totalorder %s35, 1
      %p74 = scmp.ne.s32.totalorder %s69, %s71
      %p75 = scmp.eq.s32.totalorder %s35, 0
      %p76 = por %p74, %p75
      %p77 = scmp.ne.s32.totalorder %s69, %s71
      %p78 = scmp.eq.s32.totalorder %s40, 1
      %p79 = por %p77, %p78
      %p80 = scmp.ne.s32.totalorder %s71, %s72
      %p81 = scmp.eq.s32.totalorder %s40, 0
      %p82 = por %p80, %p81
      %p83 = scmp.ne.s32.totalorder %s71, %s72
      %p84 = scmp.eq.s32.totalorder %s41, 1
      %p85 = por %p83, %p84
      %p87 = scmp.ne.s32.totalorder %s72, %s86
      %p88 = scmp.eq.s32.totalorder %s41, 0
      %p89 = por %p87, %p88
      %s91 = sadd.s32 %s90, 1
      %p94 = scmp.eq.s32.totalorder %s35, 1
      %p95 = scmp.ne.s32.totalorder %s90, %s92
      %p96 = scmp.eq.s32.totalorder %s35, 0
      %p97 = por %p95, %p96
      %p98 = scmp.ne.s32.totalorder %s90, %s92
      %p99 = scmp.eq.s32.totalorder %s40, 1
      %p100 = por %p98, %p99
      %p101 = scmp.ne.s32.totalorder %s92, %s93
      %p102 = scmp.eq.s32.totalorder %s40, 0
      %p103 = por %p101, %p102
      %p104 = scmp.ne.s32.totalorder %s92, %s93
      %p105 = scmp.eq.s32.totalorder %s41, 1
      %p106 = por %p104, %p105
      %p108 = scmp.ne.s32.totalorder %s93, %s107
      %p109 = scmp.eq.s32.totalorder %s41, 0
      %p110 = por %p108, %p109
      %s112 = sadd.s32 %s111, 1
      %p115 = scmp.eq.s32.totalorder %s35, 1
      %p116 = scmp.ne.s32.totalorder %s111, %s113
      %p117 = scmp.eq.s32.totalorder %s35, 0
      %p118 = por %p116, %p117
      %p119 = scmp.ne.s32.totalorder %s111, %s113
      %p120 = scmp.eq.s32.totalorder %s40, 1
      %p121 = por %p119, %p120
      %p122 = scmp.ne.s32.totalorder %s113, %s114
      %p123 = scmp.eq.s32.totalorder %s40, 0
      %p124 = por %p122, %p123
      %p125 = scmp.ne.s32.totalorder %s113, %s114
      %p126 = scmp.eq.s32.totalorder %s41, 1
      %p127 = por %p125, %p126
      %p129 = scmp.ne.s32.totalorder %s114, %s128
      %p130 = scmp.eq.s32.totalorder %s41, 0
      %p131 = por %p129, %p130
      %s133 = sadd.s32 %s132, 1
      %p136 = scmp.eq.s32.totalorder %s35, 1
      %p137 = scmp.ne.s32.totalorder %s132, %s134
      %p138 = scmp.eq.s32.totalorder %s35, 0
      %p139 = por %p137, %p138
      %p140 = scmp.ne.s32.totalorder %s132, %s134
      %p141 = scmp.eq.s32.totalorder %s40, 1
      %p142 = por %p140, %p141
      %p143 = scmp.ne.s32.totalorder %s134, %s135
      %p144 = scmp.eq.s32.totalorder %s40, 0
      %p145 = por %p143, %p144
      %p146 = scmp.ne.s32.totalorder %s134, %s135
      %p147 = scmp.eq.s32.totalorder %s41, 1
      %p148 = por %p146, %p147
      %p150 = scmp.ne.s32.totalorder %s135, %s149
      %p151 = scmp.eq.s32.totalorder %s41, 0
      %p152 = por %p150, %p151
      %s154 = sadd.s32 %s153, 1
      %p157 = scmp.eq.s32.totalorder %s35, 1
      %p158 = scmp.ne.s32.totalorder %s153, %s155
      %p159 = scmp.eq.s32.totalorder %s35, 0
      %p160 = por %p158, %p159
      %p161 = scmp.ne.s32.totalorder %s153, %s155
      %p162 = scmp.eq.s32.totalorder %s40, 1
      %p163 = por %p161, %p162
      %p164 = scmp.ne.s32.totalorder %s155, %s156
      %p165 = scmp.eq.s32.totalorder %s40, 0
      %p166 = por %p164, %p165
      %p167 = scmp.ne.s32.totalorder %s155, %s156
      %p168 = scmp.eq.s32.totalorder %s41, 1
      %p169 = por %p167, %p168
      %p171 = scmp.ne.s32.totalorder %s156, %s170
      %p172 = scmp.eq.s32.totalorder %s41, 0
      %p173 = por %p171, %p172
      %s175 = sadd.s32 %s174, 1
      %p178 = scmp.eq.s32.totalorder %s35, 1
      %p179 = scmp.ne.s32.totalorder %s174, %s176
      %p180 = scmp.eq.s32.totalorder %s35, 0
      %p181 = por %p179, %p180
      %p182 = scmp.ne.s32.totalorder %s174, %s176
      %p183 = scmp.eq.s32.totalorder %s40, 1
      %p184 = por %p182, %p183
      %p185 = scmp.ne.s32.totalorder %s176, %s177
      %p186 = scmp.eq.s32.totalorder %s40, 0
      %p187 = por %p185, %p186
      %p188 = scmp.ne.s32.totalorder %s176, %s177
      %p189 = scmp.eq.s32.totalorder %s41, 1
      %p190 = por %p188, %p189
      %p192 = scmp.ne.s32.totalorder %s177, %s191
      %p193 = scmp.eq.s32.totalorder %s41, 0
      %p194 = por %p192, %p193
      %s196 = sadd.s32 %s195, 1
      %p199 = scmp.eq.s32.totalorder %s35, 1
      %p200 = scmp.ne.s32.totalorder %s195, %s197
      %p201 = scmp.eq.s32.totalorder %s35, 0
      %p202 = por %p200, %p201
      %p203 = scmp.ne.s32.totalorder %s195, %s197
      %p204 = scmp.eq.s32.totalorder %s40, 1
      %p205 = por %p203, %p204
      %p206 = scmp.ne.s32.totalorder %s197, %s198
      %p207 = scmp.eq.s32.totalorder %s40, 0
      %p208 = por %p206, %p207
      %p209 = scmp.ne.s32.totalorder %s197, %s198
      %p210 = scmp.eq.s32.totalorder %s41, 1
      %p211 = por %p209, %p210
      %p213 = scmp.ne.s32.totalorder %s198, %s212
      %p214 = scmp.eq.s32.totalorder %s41, 0
      %p215 = por %p213, %p214
      %s217 = sadd.s32 %s216, 1
      %p220 = scmp.eq.s32.totalorder %s35, 1
      %p221 = scmp.ne.s32.totalorder %s216, %s218
      %p222 = scmp.eq.s32.totalorder %s35, 0
      %p223 = por %p221, %p222
      %p224 = scmp.ne.s32.totalorder %s216, %s218
      %p225 = scmp.eq.s32.totalorder %s40, 1
      %p226 = por %p224, %p225
      %p227 = scmp.ne.s32.totalorder %s218, %s219
      %p228 = scmp.eq.s32.totalorder %s40, 0
      %p229 = por %p227, %p228
      %p230 = scmp.ne.s32.totalorder %s218, %s219
      %p231 = scmp.eq.s32.totalorder %s41, 1
      %p232 = por %p230, %p231
      %p234 = scmp.ne.s32.totalorder %s219, %s233
      %p235 = scmp.eq.s32.totalorder %s41, 0
      %p236 = por %p234, %p235
      %s238 = sadd.s32 %s237, 1
      %p241 = scmp.eq.s32.totalorder %s35, 1
      %p242 = scmp.ne.s32.totalorder %s237, %s239
      %p243 = scmp.eq.s32.totalorder %s35, 0
      %p244 = por %p242, %p243
      %p245 = scmp.ne.s32.totalorder %s237, %s239
      %p246 = scmp.eq.s32.totalorder %s40, 1
      %p247 = por %p245, %p246
      %p248 = scmp.ne.s32.totalorder %s239, %s240
      %p249 = scmp.eq.s32.totalorder %s40, 0
      %p250 = por %p248, %p249
      %p251 = scmp.ne.s32.totalorder %s239, %s240
      %p252 = scmp.eq.s32.totalorder %s41, 1
      %p253 = por %p251, %p252
      %p255 = scmp.ne.s32.totalorder %s240, %s254
      %p256 = scmp.eq.s32.totalorder %s41, 0
      %p257 = por %p255, %p256
      %s259 = sadd.s32 %s258, 1
      %p262 = scmp.eq.s32.totalorder %s35, 1
      %p263 = scmp.ne.s32.totalorder %s258, %s260
      %p264 = scmp.eq.s32.totalorder %s35, 0
      %p265 = por %p263, %p264
      %p266 = scmp.ne.s32.totalorder %s258, %s260
      %p267 = scmp.eq.s32.totalorder %s40, 1
      %p268 = por %p266, %p267
      %p269 = scmp.ne.s32.totalorder %s260, %s261
      %p270 = scmp.eq.s32.totalorder %s40, 0
      %p271 = por %p269, %p270
      %p272 = scmp.ne.s32.totalorder %s260, %s261
      %p273 = scmp.eq.s32.totalorder %s41, 1
      %p274 = por %p272, %p273
      %p276 = scmp.ne.s32.totalorder %s261, %s275
      %p277 = scmp.eq.s32.totalorder %s41, 0
      %p278 = por %p276, %p277
      %s280 = sadd.s32 %s279, 1
      %p283 = scmp.eq.s32.totalorder %s35, 1
      %p284 = scmp.ne.s32.totalorder %s279, %s281
      %p285 = scmp.eq.s32.totalorder %s35, 0
      %p286 = por %p284, %p285
      %p287 = scmp.ne.s32.totalorder %s279, %s281
      %p288 = scmp.eq.s32.totalorder %s40, 1
      %p289 = por %p287, %p288
      %p290 = scmp.ne.s32.totalorder %s281, %s282
      %p291 = scmp.eq.s32.totalorder %s40, 0
      %p292 = por %p290, %p291
      %p293 = scmp.ne.s32.totalorder %s281, %s282
      %p294 = scmp.eq.s32.totalorder %s41, 1
      %p295 = por %p293, %p294
      %p297 = scmp.ne.s32.totalorder %s282, %s296
      %p298 = scmp.eq.s32.totalorder %s41, 0
      %p299 = por %p297, %p298
      %s301 = sadd.s32 %s300, 1
      %p304 = scmp.eq.s32.totalorder %s35, 1
      %p305 = scmp.ne.s32.totalorder %s300, %s302
      %p306 = scmp.eq.s32.totalorder %s35, 0
      %p307 = por %p305, %p306
      %p308 = scmp.ne.s32.totalorder %s300, %s302
      %p309 = scmp.eq.s32.totalorder %s40, 1
      %p310 = por %p308, %p309
      %p311 = scmp.ne.s32.totalorder %s302, %s303
      %p312 = scmp.eq.s32.totalorder %s40, 0
      %p313 = por %p311, %p312
      %p314 = scmp.ne.s32.totalorder %s302, %s303
      %p315 = scmp.eq.s32.totalorder %s41, 1
      %p316 = por %p314, %p315
      %p318 = scmp.ne.s32.totalorder %s303, %s317
      %p319 = scmp.eq.s32.totalorder %s41, 0
      %p320 = por %p318, %p319
      %s322 = sadd.s32 %s321, 1
      %p325 = scmp.eq.s32.totalorder %s35, 1
      %p326 = scmp.ne.s32.totalorder %s321, %s323
      %p327 = scmp.eq.s32.totalorder %s35, 0
      %p328 = por %p326, %p327
      %p329 = scmp.ne.s32.totalorder %s321, %s323
      %p330 = scmp.eq.s32.totalorder %s40, 1
      %p331 = por %p329, %p330
      %p332 = scmp.ne.s32.totalorder %s323, %s324
      %p333 = scmp.eq.s32.totalorder %s40, 0
      %p334 = por %p332, %p333
      %p335 = scmp.ne.s32.totalorder %s323, %s324
      %p336 = scmp.eq.s32.totalorder %s41, 1
      %p337 = por %p335, %p336
      %p339 = scmp.ne.s32.totalorder %s324, %s338
      %p340 = scmp.eq.s32.totalorder %s41, 0
      %p341 = por %p339, %p340
      %s343 = sadd.s32 %s342, 1
      %p346 = scmp.eq.s32.totalorder %s35, 1
      %p347 = scmp.ne.s32.totalorder %s342, %s344
      %p348 = scmp.eq.s32.totalorder %s35, 0
      %p349 = por %p347, %p348
      %p350 = scmp.ne.s32.totalorder %s342, %s344
      %p351 = scmp.eq.s32.totalorder %s40, 1
      %p352 = por %p350, %p351
      %p353 = scmp.ne.s32.totalorder %s344, %s345
      %p354 = scmp.eq.s32.totalorder %s40, 0
      %p355 = por %p353, %p354
      %p356 = scmp.ne.s32.totalorder %s344, %s345
      %p357 = scmp.eq.s32.totalorder %s41, 1
      %p358 = por %p356, %p357
      %p360 = scmp.ne.s32.totalorder %s345, %s359
      %p361 = scmp.eq.s32.totalorder %s41, 0
      %p362 = por %p360, %p361
      %s364 = sadd.s32 %s363, 1
      %p367 = scmp.eq.s32.totalorder %s35, 1
      %p368 = scmp.ne.s32.totalorder %s363, %s365
      %p369 = scmp.eq.s32.totalorder %s35, 0
      %p370 = por %p368, %p369
      %p371 = scmp.ne.s32.totalorder %s363, %s365
      %p372 = scmp.eq.s32.totalorder %s40, 1
      %p373 = por %p371, %p372
      %p374 = scmp.ne.s32.totalorder %s365, %s366
      %p375 = scmp.eq.s32.totalorder %s40, 0
      %p376 = por %p374, %p375
      %p377 = scmp.ne.s32.totalorder %s365, %s366
      %p378 = scmp.eq.s32.totalorder %s41, 1
      %p379 = por %p377, %p378
      %p381 = scmp.ne.s32.totalorder %s366, %s380
      %p382 = scmp.eq.s32.totalorder %s41, 0
      %p383 = por %p381, %p382
      %s385 = sadd.s32 %s384, 1
      %p388 = scmp.eq.s32.totalorder %s35, 1
      %p389 = scmp.ne.s32.totalorder %s384, %s386
      %p390 = scmp.eq.s32.totalorder %s35, 0
      %p391 = por %p389, %p390
      %p392 = scmp.ne.s32.totalorder %s384, %s386
      %p393 = scmp.eq.s32.totalorder %s40, 1
      %p394 = por %p392, %p393
      %p395 = scmp.ne.s32.totalorder %s386, %s387
      %p396 = scmp.eq.s32.totalorder %s40, 0
      %p397 = por %p395, %p396
      %p398 = scmp.ne.s32.totalorder %s386, %s387
      %p399 = scmp.eq.s32.totalorder %s41, 1
      %p400 = por %p398, %p399
      %p402 = scmp.ne.s32.totalorder %s387, %s401
      %p403 = scmp.eq.s32.totalorder %s41, 0
      %p404 = por %p402, %p403
      %s406 = sadd.s32 %s405, 1
      %p409 = scmp.eq.s32.totalorder %s35, 1
      %p410 = scmp.ne.s32.totalorder %s405, %s407
      %p411 = scmp.eq.s32.totalorder %s35, 0
      %p412 = por %p410, %p411
      %p413 = scmp.ne.s32.totalorder %s405, %s407
      %p414 = scmp.eq.s32.totalorder %s40, 1
      %p415 = por %p413, %p414
      %p416 = scmp.ne.s32.totalorder %s407, %s408
      %p417 = scmp.eq.s32.totalorder %s40, 0
      %p418 = por %p416, %p417
      %p419 = scmp.ne.s32.totalorder %s407, %s408
      %p420 = scmp.eq.s32.totalorder %s41, 1
      %p421 = por %p419, %p420
      %p423 = scmp.ne.s32.totalorder %s408, %s422
      %p424 = scmp.eq.s32.totalorder %s41, 0
      %p425 = por %p423, %p424
      %s427 = sadd.s32 %s426, 1
      %p430 = scmp.eq.s32.totalorder %s35, 1
      %p431 = scmp.ne.s32.totalorder %s426, %s428
      %p432 = scmp.eq.s32.totalorder %s35, 0
      %p433 = por %p431, %p432
      %p434 = scmp.ne.s32.totalorder %s426, %s428
      %p435 = scmp.eq.s32.totalorder %s40, 1
      %p436 = por %p434, %p435
      %p437 = scmp.ne.s32.totalorder %s428, %s429
      %p438 = scmp.eq.s32.totalorder %s40, 0
      %p439 = por %p437, %p438
      %p440 = scmp.ne.s32.totalorder %s428, %s429
      %p441 = scmp.eq.s32.totalorder %s41, 1
      %p442 = por %p440, %p441
      %p444 = scmp.ne.s32.totalorder %s429, %s443
      %p445 = scmp.eq.s32.totalorder %s41, 0
      %p446 = por %p444, %p445
      %s448 = sadd.s32 %s447, 1
      %p451 = scmp.eq.s32.totalorder %s35, 1
      %p452 = scmp.ne.s32.totalorder %s447, %s449
      %p453 = scmp.eq.s32.totalorder %s35, 0
      %p454 = por %p452, %p453
      %p455 = scmp.ne.s32.totalorder %s447, %s449
      %p456 = scmp.eq.s32.totalorder %s40, 1
      %p457 = por %p455, %p456
      %p458 = scmp.ne.s32.totalorder %s449, %s450
      %p459 = scmp.eq.s32.totalorder %s40, 0
      %p460 = por %p458, %p459
      %p461 = scmp.ne.s32.totalorder %s449, %s450
      %p462 = scmp.eq.s32.totalorder %s41, 1
      %p463 = por %p461, %p462
      %p465 = scmp.ne.s32.totalorder %s450, %s464
      %p466 = scmp.eq.s32.totalorder %s41, 0
      %p467 = por %p465, %p466
      %s469 = sadd.s32 %s468, 1
      %p472 = scmp.eq.s32.totalorder %s35, 1
      %p473 = scmp.ne.s32.totalorder %s468, %s470
      %p474 = scmp.eq.s32.totalorder %s35, 0
      %p475 = por %p473, %p474
      %p476 = scmp.ne.s32.totalorder %s468, %s470
      %p477 = scmp.eq.s32.totalorder %s40, 1
      %p478 = por %p476, %p477
      %p479 = scmp.ne.s32.totalorder %s470, %s471
      %p480 = scmp.eq.s32.totalorder %s40, 0
      %p481 = por %p479, %p480
      %p482 = scmp.ne.s32.totalorder %s470, %s471
      %p483 = scmp.eq.s32.totalorder %s41, 1
      %p484 = por %p482, %p483
      %p486 = scmp.ne.s32.totalorder %s471, %s485
      %p487 = scmp.eq.s32.totalorder %s41, 0
      %p488 = por %p486, %p487
      %s490 = sadd.s32 %s489, 1
      %p493 = scmp.eq.s32.totalorder %s35, 1
      %p494 = scmp.ne.s32.totalorder %s489, %s491
      %p495 = scmp.eq.s32.totalorder %s35, 0
      %p496 = por %p494, %p495
      %p497 = scmp.ne.s32.totalorder %s489, %s491
      %p498 = scmp.eq.s32.totalorder %s40, 1
      %p499 = por %p497, %p498
      %p500 = scmp.ne.s32.totalorder %s491, %s492
      %p501 = scmp.eq.s32.totalorder %s40, 0
      %p502 = por %p500, %p501
      %p503 = scmp.ne.s32.totalorder %s491, %s492
      %p504 = scmp.eq.s32.totalorder %s41, 1
      %p505 = por %p503, %p504
      %p507 = scmp.ne.s32.totalorder %s492, %s506
      %p508 = scmp.eq.s32.totalorder %s41, 0
      %p509 = por %p507, %p508
      %s510 = ssub.s32 %s35, %s42
      %p511 = scmp.eq.s32.totalorder %s510, 0
      %s513 = sadd.s32 %s512, 1
      %s514 = scalar_select %p511, %s512, %s513
      %p517 = pneg %p511
      %p518 = scmp.eq.s32.totalorder %s35, 1
      %p519 = por %p517, %p518
      %p520 = scmp.ne.s32.totalorder %s512, %s515
      %p521 = scmp.eq.s32.totalorder %s35, 0
      %p522 = por %p520, %p521
      %p523 = scmp.ne.s32.totalorder %s512, %s515
      %p524 = scmp.eq.s32.totalorder %s40, 1
      %p525 = por %p523, %p524
      %p526 = scmp.ne.s32.totalorder %s515, %s516
      %p527 = scmp.eq.s32.totalorder %s40, 0
      %p528 = por %p526, %p527
      %p529 = scmp.ne.s32.totalorder %s515, %s516
      %p530 = scmp.eq.s32.totalorder %s41, 1
      %p531 = por %p529, %p530
      %p533 = scmp.ne.s32.totalorder %s516, %s532
      %p534 = scmp.eq.s32.totalorder %s41, 0
      %p535 = por %p533, %p534
      %p536 = scmp.le.s32.totalorder 1, %s35
      %p537 = scmp.lt.s32.totalorder %s35, 3
      %p538 = pnand %p536, %p537
      %p539 = pneg %p538
      // Predicated region
      $region9: #{sensitive_mamba_forward.1} parent=5 // pred_check
        _
      $region10: #{sensitive_mamba_forward.1} parent=5 // pred_check_branch
        %541 = sbr.rel (%p538) target = $region12
      $region11: #{sensitive_mamba_forward.1} parent=5 // pred_region
        %s542 = ssub.s32 %s35, 1
        // Predicated region
        $region13: #{sensitive_mamba_forward.1} parent=11 // pred_check
          %p543 = pneg %p82
        $region14: #{sensitive_mamba_forward.1} parent=11 // pred_check_branch
          %545 = sbr.rel (%p543) target = $region16
        $region15: #{sensitive_mamba_forward.1} parent=11 // pred_region
          %s547 = ssub.s32 64, 64
          %548 = vsyncadd [#allocation3], %s547
          %s550 = sshll.u32 [#allocation2], 4
          %s551 = int_to_ptr.vmem [resolvable:$true] %s550
          %553 = dma.hbm_to_vmem [thread:$0]  %s1, 64, %s551, [#allocation3]
        $region16: #{sensitive_mamba_forward.1} parent=11 // pred_fallthru
          _
        // Predicated region
        $region17: #{sensitive_mamba_forward.1} parent=11 // pred_check
          %p554 = pneg %p103
        $region18: #{sensitive_mamba_forward.1} parent=11 // pred_check_branch
          %556 = sbr.rel (%p554) target = $region20
        $region19: #{sensitive_mamba_forward.1} parent=11 // pred_region
          %s558 = ssub.s32 16, 16
          %559 = vsyncadd [#allocation5], %s558
          %s561 = sshll.u32 [#allocation4], 4
          %s562 = int_to_ptr.vmem [resolvable:$true] %s561
          %564 = dma.hbm_to_vmem [thread:$0]  %s2, 16, %s562, [#allocation5]
        $region20: #{sensitive_mamba_forward.1} parent=11 // pred_fallthru
          _
        // Predicated region
        $region21: #{sensitive_mamba_forward.1} parent=11 // pred_check
          %p565 = pneg %p124
        $region22: #{sensitive_mamba_forward.1} parent=11 // pred_check_branch
          %567 = sbr.rel (%p565) target = $region24
        $region23: #{sensitive_mamba_forward.1} parent=11 // pred_region
          _
        $region24: #{sensitive_mamba_forward.1} parent=11 // pred_fallthru
          _
        // Predicated region
        $region25: #{sensitive_mamba_forward.1} parent=11 // pred_check
          %p568 = pneg %p145
        $region26: #{sensitive_mamba_forward.1} parent=11 // pred_check_branch
          %570 = sbr.rel (%p568) target = $region28
        $region27: #{sensitive_mamba_forward.1} parent=11 // pred_region
          _
        $region28: #{sensitive_mamba_forward.1} parent=11 // pred_fallthru
          _
        // Predicated region
        $region29: #{sensitive_mamba_forward.1} parent=11 // pred_check
          %p571 = pneg %p166
        $region30: #{sensitive_mamba_forward.1} parent=11 // pred_check_branch
          %573 = sbr.rel (%p571) target = $region32
        $region31: #{sensitive_mamba_forward.1} parent=11 // pred_region
          %s575 = ssub.s32 64, 64
          %576 = vsyncadd [#allocation5], %s575
          %s577 = sshll.u32 [#allocation6], 4
          %s578 = int_to_ptr.vmem [resolvable:$true] %s577
          %583 = dma.hbm_to_vmem [thread:$0]  %s5, 64, %s578, [#allocation5], 32, 32, 2
        $region32: #{sensitive_mamba_forward.1} parent=11 // pred_fallthru
          _
        // Predicated region
        $region33: #{sensitive_mamba_forward.1} parent=11 // pred_check
          %p584 = pneg %p187
        $region34: #{sensitive_mamba_forward.1} parent=11 // pred_check_branch
          %586 = sbr.rel (%p584) target = $region36
        $region35: #{sensitive_mamba_forward.1} parent=11 // pred_region
          %s588 = ssub.s32 32, 32
          %589 = vsyncadd [#allocation8], %s588
          %s590 = sshll.u32 [#allocation7], 4
          %s591 = int_to_ptr.vmem [resolvable:$true] %s590
          %596 = dma.hbm_to_vmem [thread:$0]  %s6, 32, %s591, [#allocation8], 16, 16, 1
        $region36: #{sensitive_mamba_forward.1} parent=11 // pred_fallthru
          _
        // Predicated region
        $region37: #{sensitive_mamba_forward.1} parent=11 // pred_check
          %p597 = pneg %p208
        $region38: #{sensitive_mamba_forward.1} parent=11 // pred_check_branch
          %599 = sbr.rel (%p597) target = $region40
        $region39: #{sensitive_mamba_forward.1} parent=11 // pred_region
          _
        $region40: #{sensitive_mamba_forward.1} parent=11 // pred_fallthru
          _
        // Predicated region
        $region41: #{sensitive_mamba_forward.1} parent=11 // pred_check
          %p600 = pneg %p229
        $region42: #{sensitive_mamba_forward.1} parent=11 // pred_check_branch
          %602 = sbr.rel (%p600) target = $region44
        $region43: #{sensitive_mamba_forward.1} parent=11 // pred_region
          %s604 = ssub.s32 32, 32
          %605 = vsyncadd [#allocation8], %s604
          %s606 = sshll.u32 [#allocation9], 4
          %s607 = int_to_ptr.vmem [resolvable:$true] %s606
          %612 = dma.hbm_to_vmem [thread:$0]  %s8, 32, %s607, [#allocation8], 16, 16, 1
        $region44: #{sensitive_mamba_forward.1} parent=11 // pred_fallthru
          _
        // Predicated region
        $region45: #{sensitive_mamba_forward.1} parent=11 // pred_check
          %p613 = pneg %p250
        $region46: #{sensitive_mamba_forward.1} parent=11 // pred_check_branch
          %615 = sbr.rel (%p613) target = $region48
        $region47: #{sensitive_mamba_forward.1} parent=11 // pred_region
          _
        $region48: #{sensitive_mamba_forward.1} parent=11 // pred_fallthru
          _
        // Predicated region
        $region49: #{sensitive_mamba_forward.1} parent=11 // pred_check
          %p616 = pneg %p271
        $region50: #{sensitive_mamba_forward.1} parent=11 // pred_check_branch
          %618 = sbr.rel (%p616) target = $region52
        $region51: #{sensitive_mamba_forward.1} parent=11 // pred_region
          %s620 = ssub.s32 32, 32
          %621 = vsyncadd [#allocation11], %s620
          %s622 = sshll.u32 [#allocation10], 4
          %s623 = int_to_ptr.vmem [resolvable:$true] %s622
          %628 = dma.hbm_to_vmem [thread:$0]  %s10, 32, %s623, [#allocation11], 16, 16, 1
        $region52: #{sensitive_mamba_forward.1} parent=11 // pred_fallthru
          _
        // Predicated region
        $region53: #{sensitive_mamba_forward.1} parent=11 // pred_check
          %p629 = pneg %p292
        $region54: #{sensitive_mamba_forward.1} parent=11 // pred_check_branch
          %631 = sbr.rel (%p629) target = $region56
        $region55: #{sensitive_mamba_forward.1} parent=11 // pred_region
          _
        $region56: #{sensitive_mamba_forward.1} parent=11 // pred_fallthru
          _
        // Predicated region
        $region57: #{sensitive_mamba_forward.1} parent=11 // pred_check
          %p632 = pneg %p313
        $region58: #{sensitive_mamba_forward.1} parent=11 // pred_check_branch
          %634 = sbr.rel (%p632) target = $region60
        $region59: #{sensitive_mamba_forward.1} parent=11 // pred_region
          %s636 = ssub.s32 1024, 1024
          %637 = vsyncadd [#allocation11], %s636
          %s638 = sshll.u32 [#allocation12], 4
          %s639 = int_to_ptr.vmem [resolvable:$true] %s638
          %644 = dma.hbm_to_vmem [thread:$0]  %s12, 1024, %s639, [#allocation11], 128, 128, 8
        $region60: #{sensitive_mamba_forward.1} parent=11 // pred_fallthru
          _
        // Predicated region
        $region61: #{sensitive_mamba_forward.1} parent=11 // pred_check
          %p645 = pneg %p334
        $region62: #{sensitive_mamba_forward.1} parent=11 // pred_check_branch
          %647 = sbr.rel (%p645) target = $region64
        $region63: #{sensitive_mamba_forward.1} parent=11 // pred_region
          _
        $region64: #{sensitive_mamba_forward.1} parent=11 // pred_fallthru
          _
        // Predicated region
        $region65: #{sensitive_mamba_forward.1} parent=11 // pred_check
          %p648 = pneg %p355
        $region66: #{sensitive_mamba_forward.1} parent=11 // pred_check_branch
          %650 = sbr.rel (%p648) target = $region68
        $region67: #{sensitive_mamba_forward.1} parent=11 // pred_region
          %s652 = ssub.s32 1024, 1024
          %653 = vsyncadd [#allocation14], %s652
          %s654 = sshll.u32 [#allocation13], 4
          %s655 = int_to_ptr.vmem [resolvable:$true] %s654
          %660 = dma.hbm_to_vmem [thread:$0]  %s14, 1024, %s655, [#allocation14], 128, 128, 8
        $region68: #{sensitive_mamba_forward.1} parent=11 // pred_fallthru
          _
        // Predicated region
        $region69: #{sensitive_mamba_forward.1} parent=11 // pred_check
          %p661 = pneg %p376
        $region70: #{sensitive_mamba_forward.1} parent=11 // pred_check_branch
          %663 = sbr.rel (%p661) target = $region72
        $region71: #{sensitive_mamba_forward.1} parent=11 // pred_region
          %s665 = ssub.s32 32, 32
          %666 = vsyncadd [#allocation14], %s665
          %s667 = sshll.u32 [#allocation15], 4
          %s668 = int_to_ptr.vmem [resolvable:$true] %s667
          %673 = dma.hbm_to_vmem [thread:$0]  %s15, 32, %s668, [#allocation14], 16, 16, 1
        $region72: #{sensitive_mamba_forward.1} parent=11 // pred_fallthru
          _
        // Predicated region
        $region73: #{sensitive_mamba_forward.1} parent=11 // pred_check
          %p674 = pneg %p397
        $region74: #{sensitive_mamba_forward.1} parent=11 // pred_check_branch
          %676 = sbr.rel (%p674) target = $region76
        $region75: #{sensitive_mamba_forward.1} parent=11 // pred_region
          _
        $region76: #{sensitive_mamba_forward.1} parent=11 // pred_fallthru
          _
        // Predicated region
        $region77: #{sensitive_mamba_forward.1} parent=11 // pred_check
          %p677 = pneg %p418
        $region78: #{sensitive_mamba_forward.1} parent=11 // pred_check_branch
          %679 = sbr.rel (%p677) target = $region80
        $region79: #{sensitive_mamba_forward.1} parent=11 // pred_region
          %s681 = ssub.s32 16, 16
          %682 = vsyncadd [#allocation17], %s681
          %s684 = sshll.u32 [#allocation16], 4
          %s685 = int_to_ptr.vmem [resolvable:$true] %s684
          %687 = dma.hbm_to_vmem [thread:$0]  %s17, 16, %s685, [#allocation17]
        $region80: #{sensitive_mamba_forward.1} parent=11 // pred_fallthru
          _
        // Predicated region
        $region81: #{sensitive_mamba_forward.1} parent=11 // pred_check
          %p688 = pneg %p439
        $region82: #{sensitive_mamba_forward.1} parent=11 // pred_check_branch
          %690 = sbr.rel (%p688) target = $region84
        $region83: #{sensitive_mamba_forward.1} parent=11 // pred_region
          %s692 = ssub.s32 512, 512
          %693 = vsyncadd [#allocation17], %s692
          %s694 = sshll.u32 [#allocation18], 4
          %s695 = int_to_ptr.vmem [resolvable:$true] %s694
          %700 = dma.hbm_to_vmem [thread:$0]  %s18, 512, %s695, [#allocation17], 128, 128, 8
        $region84: #{sensitive_mamba_forward.1} parent=11 // pred_fallthru
          _
        // Predicated region
        $region85: #{sensitive_mamba_forward.1} parent=11 // pred_check
          %p701 = pneg %p460
        $region86: #{sensitive_mamba_forward.1} parent=11 // pred_check_branch
          %703 = sbr.rel (%p701) target = $region88
        $region87: #{sensitive_mamba_forward.1} parent=11 // pred_region
          %s705 = ssub.s32 16, 16
          %706 = vsyncadd [#allocation20], %s705
          %s708 = sshll.u32 [#allocation19], 4
          %s709 = int_to_ptr.vmem [resolvable:$true] %s708
          %711 = dma.hbm_to_vmem [thread:$0]  %s19, 16, %s709, [#allocation20]
        $region88: #{sensitive_mamba_forward.1} parent=11 // pred_fallthru
          _
        // Predicated region
        $region89: #{sensitive_mamba_forward.1} parent=11 // pred_check
          %p712 = pneg %p481
        $region90: #{sensitive_mamba_forward.1} parent=11 // pred_check_branch
          %714 = sbr.rel (%p712) target = $region92
        $region91: #{sensitive_mamba_forward.1} parent=11 // pred_region
          _
        $region92: #{sensitive_mamba_forward.1} parent=11 // pred_fallthru
          _
        // Predicated region
        $region93: #{sensitive_mamba_forward.1} parent=11 // pred_check
          %p715 = pneg %p502
        $region94: #{sensitive_mamba_forward.1} parent=11 // pred_check_branch
          %717 = sbr.rel (%p715) target = $region96
        $region95: #{sensitive_mamba_forward.1} parent=11 // pred_region
          %s719 = ssub.s32 16, 16
          %720 = vsyncadd [#allocation20], %s719
          %s722 = sshll.u32 [#allocation21], 4
          %s723 = int_to_ptr.vmem [resolvable:$true] %s722
          %725 = dma.hbm_to_vmem [thread:$0]  %s21, 16, %s723, [#allocation20]
        $region96: #{sensitive_mamba_forward.1} parent=11 // pred_fallthru
          _
      $region12: #{sensitive_mamba_forward.1} parent=5 // pred_fallthru
        _
      %p726 = scmp.lt.s32.totalorder %s35, 2
      // Predicated region
      $region97: #{sensitive_mamba_forward.1} parent=5 // pred_check
        %p727 = pneg %p726
      $region98: #{sensitive_mamba_forward.1} parent=5 // pred_check_branch
        %729 = sbr.rel (%p727) target = $region100
      $region99: #{sensitive_mamba_forward.1} parent=5 // pred_region
        // Predicated region
        $region101: #{sensitive_mamba_forward.1} parent=99 // pred_check
          %p730 = pneg %p55
        $region102: #{sensitive_mamba_forward.1} parent=99 // pred_check_branch
          %732 = sbr.rel (%p730) target = $region104
        $region103: #{sensitive_mamba_forward.1} parent=99 // pred_region
          %p733 = scmp.lt.s32.totalorder %s35, 1
          %s734 = scalar_select %p733, %s35, 1
          %s735 = smul.addr %s734, 8
          %s736 = scalar_lea.vmem %s0, %s735
        $region104: #{sensitive_mamba_forward.1} parent=99 // pred_fallthru
          _
      $region100: #{sensitive_mamba_forward.1} parent=5 // pred_fallthru
        _
      %p737 = scmp.le.s32.totalorder 1, %s35
      %p738 = scmp.lt.s32.totalorder %s35, 3
      %p739 = pnand %p737, %p738
      %p740 = pneg %p739
      // Predicated region
      $region105: #{sensitive_mamba_forward.1} parent=5 // pred_check
        _
      $region106: #{sensitive_mamba_forward.1} parent=5 // pred_check_branch
        %742 = sbr.rel (%p739) target = $region108
      $region107: #{sensitive_mamba_forward.1} parent=5 // pred_region
        %s743 = ssub.s32 %s35, 1
        // Predicated region
        $region109: #{sensitive_mamba_forward.1} parent=107 // pred_check
          %p744 = pneg %p82
        $region110: #{sensitive_mamba_forward.1} parent=107 // pred_check_branch
          %746 = sbr.rel (%p744) target = $region112
        $region111: #{sensitive_mamba_forward.1} parent=107 // pred_region
          %747 = dma.done [#allocation3], 64
        $region112: #{sensitive_mamba_forward.1} parent=107 // pred_fallthru
          _
        // Predicated region
        $region113: #{sensitive_mamba_forward.1} parent=107 // pred_check
          %p748 = pneg %p103
        $region114: #{sensitive_mamba_forward.1} parent=107 // pred_check_branch
          %750 = sbr.rel (%p748) target = $region116
        $region115: #{sensitive_mamba_forward.1} parent=107 // pred_region
          %751 = dma.done [#allocation5], 16
        $region116: #{sensitive_mamba_forward.1} parent=107 // pred_fallthru
          _
        // Predicated region
        $region117: #{sensitive_mamba_forward.1} parent=107 // pred_check
          %p752 = pneg %p166
        $region118: #{sensitive_mamba_forward.1} parent=107 // pred_check_branch
          %754 = sbr.rel (%p752) target = $region120
        $region119: #{sensitive_mamba_forward.1} parent=107 // pred_region
          %755 = dma.done [#allocation5], 64
        $region120: #{sensitive_mamba_forward.1} parent=107 // pred_fallthru
          _
        // Predicated region
        $region121: #{sensitive_mamba_forward.1} parent=107 // pred_check
          %p756 = pneg %p187
        $region122: #{sensitive_mamba_forward.1} parent=107 // pred_check_branch
          %758 = sbr.rel (%p756) target = $region124
        $region123: #{sensitive_mamba_forward.1} parent=107 // pred_region
          %759 = dma.done [#allocation8], 32
        $region124: #{sensitive_mamba_forward.1} parent=107 // pred_fallthru
          _
        // Predicated region
        $region125: #{sensitive_mamba_forward.1} parent=107 // pred_check
          %p760 = pneg %p229
        $region126: #{sensitive_mamba_forward.1} parent=107 // pred_check_branch
          %762 = sbr.rel (%p760) target = $region128
        $region127: #{sensitive_mamba_forward.1} parent=107 // pred_region
          %763 = dma.done [#allocation8], 32
        $region128: #{sensitive_mamba_forward.1} parent=107 // pred_fallthru
          _
        // Predicated region
        $region129: #{sensitive_mamba_forward.1} parent=107 // pred_check
          %p764 = pneg %p271
        $region130: #{sensitive_mamba_forward.1} parent=107 // pred_check_branch
          %766 = sbr.rel (%p764) target = $region132
        $region131: #{sensitive_mamba_forward.1} parent=107 // pred_region
          %767 = dma.done [#allocation11], 32
        $region132: #{sensitive_mamba_forward.1} parent=107 // pred_fallthru
          _
        // Predicated region
        $region133: #{sensitive_mamba_forward.1} parent=107 // pred_check
          %p768 = pneg %p313
        $region134: #{sensitive_mamba_forward.1} parent=107 // pred_check_branch
          %770 = sbr.rel (%p768) target = $region136
        $region135: #{sensitive_mamba_forward.1} parent=107 // pred_region
          %771 = dma.done [#allocation11], 1024
        $region136: #{sensitive_mamba_forward.1} parent=107 // pred_fallthru
          _
        // Predicated region
        $region137: #{sensitive_mamba_forward.1} parent=107 // pred_check
          %p772 = pneg %p355
        $region138: #{sensitive_mamba_forward.1} parent=107 // pred_check_branch
          %774 = sbr.rel (%p772) target = $region140
        $region139: #{sensitive_mamba_forward.1} parent=107 // pred_region
          %775 = dma.done [#allocation14], 1024
        $region140: #{sensitive_mamba_forward.1} parent=107 // pred_fallthru
          _
        // Predicated region
        $region141: #{sensitive_mamba_forward.1} parent=107 // pred_check
          %p776 = pneg %p376
        $region142: #{sensitive_mamba_forward.1} parent=107 // pred_check_branch
          %778 = sbr.rel (%p776) target = $region144
        $region143: #{sensitive_mamba_forward.1} parent=107 // pred_region
          %779 = dma.done [#allocation14], 32
        $region144: #{sensitive_mamba_forward.1} parent=107 // pred_fallthru
          _
        // Predicated region
        $region145: #{sensitive_mamba_forward.1} parent=107 // pred_check
          %p780 = pneg %p418
        $region146: #{sensitive_mamba_forward.1} parent=107 // pred_check_branch
          %782 = sbr.rel (%p780) target = $region148
        $region147: #{sensitive_mamba_forward.1} parent=107 // pred_region
          %783 = dma.done [#allocation17], 16
        $region148: #{sensitive_mamba_forward.1} parent=107 // pred_fallthru
          _
        // Predicated region
        $region149: #{sensitive_mamba_forward.1} parent=107 // pred_check
          %p784 = pneg %p439
        $region150: #{sensitive_mamba_forward.1} parent=107 // pred_check_branch
          %786 = sbr.rel (%p784) target = $region152
        $region151: #{sensitive_mamba_forward.1} parent=107 // pred_region
          %787 = dma.done [#allocation17], 512
        $region152: #{sensitive_mamba_forward.1} parent=107 // pred_fallthru
          _
        // Predicated region
        $region153: #{sensitive_mamba_forward.1} parent=107 // pred_check
          %p788 = pneg %p460
        $region154: #{sensitive_mamba_forward.1} parent=107 // pred_check_branch
          %790 = sbr.rel (%p788) target = $region156
        $region155: #{sensitive_mamba_forward.1} parent=107 // pred_region
          %791 = dma.done [#allocation20], 16
        $region156: #{sensitive_mamba_forward.1} parent=107 // pred_fallthru
          _
        // Predicated region
        $region157: #{sensitive_mamba_forward.1} parent=107 // pred_check
          %p792 = pneg %p502
        $region158: #{sensitive_mamba_forward.1} parent=107 // pred_check_branch
          %794 = sbr.rel (%p792) target = $region160
        $region159: #{sensitive_mamba_forward.1} parent=107 // pred_region
          %795 = dma.done [#allocation20], 16
        $region160: #{sensitive_mamba_forward.1} parent=107 // pred_fallthru
          _
        %p796 = scmp.lt.s32.totalorder %s40, 1
        %s797 = scalar_select %p796, %s40, 1
        %s798 = smul.addr %s797, 8
        %s799 = scalar_lea.vmem %s0, %s798
        %p800 = pneg %p61
        %p801 = pneg %p58
        %p802 = pneg %p82
        %p803 = pneg %p79
        %p804 = pneg %p103
        %p805 = pneg %p100
        %p806 = pneg %p124
        %p807 = pneg %p121
        %p808 = pneg %p145
        %p809 = pneg %p142
        %p810 = pneg %p166
        %p811 = pneg %p163
        %p812 = pneg %p187
        %p813 = pneg %p184
        %p814 = pneg %p208
        %p815 = pneg %p205
        %p816 = pneg %p229
        %p817 = pneg %p226
        %p818 = pneg %p250
        %p819 = pneg %p247
        %p820 = pneg %p271
        %p821 = pneg %p268
        %p822 = pneg %p292
        %p823 = pneg %p289
        %p824 = pneg %p313
        %p825 = pneg %p310
        %p826 = pneg %p334
        %p827 = pneg %p331
        %p828 = pneg %p355
        %p829 = pneg %p352
        %p830 = pneg %p376
        %p831 = pneg %p373
        %p832 = pneg %p397
        %p833 = pneg %p394
        %p834 = pneg %p418
        %p835 = pneg %p415
        %p836 = pneg %p439
        %p837 = pneg %p436
        %p838 = pneg %p460
        %p839 = pneg %p457
        %p840 = pneg %p481
        %p841 = pneg %p478
        %p842 = pneg %p502
        %p843 = pneg %p499
        %p844 = pneg %p528
        %p845 = pneg %p525
        %p846 = scmp.lt.s32.totalorder %s40, 1
        %s847 = scalar_select %p846, %s40, 1
        %s848 = smul.addr %s847, 8
        %s849 = scalar_lea.vmem %s22, %s848
        %p850 = scmp.lt.s32.totalorder %s40, 1
        %s851 = scalar_select %p850, %s40, 1
        %s852 = smul.addr %s851, 8
        %s853 = scalar_lea.vmem %s0, %s852
        %p854 = scmp.lt.s32.totalorder %s40, 1
        %s855 = scalar_select %p854, %s40, 1
        %s856 = smul.addr %s855, 8
        %s857 = scalar_lea.vmem %s22, %s856
        %v858 = vld [vmem:[%s853] sm:$0xff]
        %vm859 = vcmask 31744
        %v860 = vsel %vm859, %v858, 0.0
        %v861 = vrot.slane %v860, 4
        %v862 = vadd.f32 %v860, %v861
        %v863 = vrot.slane %v862, 2
        %v864 = vadd.f32 %v862, %v863
        %v865 = vrot.slane %v864, 1
        %v866 = vadd.f32 %v864, %v865
        %v867 = vrcp.pop 8.0
        %v868 = vmul.f32 %v866, %v867
        %v869 = vsub.f32 %v858, %v868
        %v870 = vmul.f32 %v869, %v869
        %v871 = vsel %vm859, %v870, 0.0
        %v872 = vrot.slane %v871, 4
        %v873 = vadd.f32 %v871, %v872
        %v874 = vrot.slane %v873, 2
        %v875 = vadd.f32 %v873, %v874
        %v876 = vrot.slane %v875, 1
        %v877 = vadd.f32 %v875, %v876
        %v878 = vmul.f32 %v877, %v867
        %v879 = vadd.f32 %v878, 1e-05
        %v880 = vrsqrt.pop %v879
        %v881 = vmul.f32 %v879, %v880
        %vm882 = vcmp.eq.f32.partialorder %v879, inf
        %v883 = vsel %vm882, %v879, %v881
        %vm884 = vcmp.eq.f32.partialorder %v879, 0.0
        %v885 = vand.u32 %v879, 2147483648
        %v886 = vsel %vm884, %v885, %v883
        %v887 = vrcp.pop %v886
        %v888 = vmul.f32 %v869, %v887
        %v889 = vld [vmem:[#allocation2] sm:$0xf]
        %v890 = vld [vmem:[#allocation4] sm:$0x1]
        %v892 = vlaneseq
        %v893 = vshrl.u32 %v892, 7
        %v894 = vsub.s32 0, %v893
        %v895 = vrot.slane %v890, %v894
        %v898 = vsel %vm859, %v888, 0
        %vm900 = vcmask 1043456
        %v902 = vsel %vm900, %v889, 0
        %904 = vmatprep.subr.mxu0 0.0
        %905 = vmatpush1.msra.mxu0 %v902
        %906 = vmatprep.subr.mxu0 0.0
        %907 = vmatpush1.msra.mxu0 0.0
        %908 = vmatprep.subr.mxu0 0.0
        %909 = vmatpush1.msra.mxu0 0.0
        %910 = vmatprep.subr.mxu0 0.0
        %911 = vmatpush1.msra.mxu0 0.0
        %912 = vmatprep.subr.mxu0 0.0
        %913 = vmatpush1.msra.mxu0 0.0
        %914 = vmatprep.subr.mxu0 0.0
        %915 = vmatpush1.msra.mxu0 0.0
        %916 = vmatprep.subr.mxu0 0.0
        %917 = vmatpush1.msra.mxu0 0.0
        %918 = vmatprep.subr.mxu0 0.0
        %919 = vmatpush1.msra.mxu0 0.0
        %920 = vmatprep.subr.mxu0 0.0
        %921 = vmatpush1.msra.mxu0 0.0
        %922 = vmatprep.subr.mxu0 0.0
        %923 = vmatpush1.msra.mxu0 0.0
        %924 = vmatprep.subr.mxu0 0.0
        %925 = vmatpush1.msra.mxu0 0.0
        %926 = vmatprep.subr.mxu0 0.0
        %927 = vmatpush1.msra.mxu0 0.0
        %928 = vmatprep.subr.mxu0 0.0
        %929 = vmatpush1.msra.mxu0 0.0
        %930 = vmatprep.subr.mxu0 0.0
        %931 = vmatpush1.msra.mxu0 0.0
        %932 = vmatprep.subr.mxu0 0.0
        %933 = vmatpush1.msra.mxu0 0.0
        %934 = vmatprep.subr.mxu0 0.0
        %935 = vmatpush1.msra.mxu0 0.0
        %936 = vmatprep.subr.mxu0 0.0
        %937 = vmatpush1.msra.mxu0 0.0
        %938 = vmatprep.subr.mxu0 0.0
        %939 = vmatpush1.msra.mxu0 0.0
        %940 = vmatprep.subr.mxu0 0.0
        %941 = vmatpush1.msra.mxu0 0.0
        %942 = vmatprep.subr.mxu0 0.0
        %943 = vmatpush1.msra.mxu0 0.0
        %944 = vmatprep.subr.mxu0 0.0
        %945 = vmatpush1.msra.mxu0 0.0
        %946 = vmatprep.subr.mxu0 0.0
        %947 = vmatpush1.msra.mxu0 0.0
        %948 = vmatprep.subr.mxu0 0.0
        %949 = vmatpush1.msra.mxu0 0.0
        %950 = vmatprep.subr.mxu0 0.0
        %951 = vmatpush1.msra.mxu0 0.0
        %952 = vmatprep.subr.mxu0 0.0
        %953 = vmatpush1.msra.mxu0 0.0
        %954 = vmatprep.subr.mxu0 0.0
        %955 = vmatpush1.msra.mxu0 0.0
        %956 = vmatprep.subr.mxu0 0.0
        %957 = vmatpush1.msra.mxu0 0.0
        %958 = vmatprep.subr.mxu0 0.0
        %959 = vmatpush1.msra.mxu0 0.0
        %960 = vmatprep.subr.mxu0 0.0
        %961 = vmatpush1.msra.mxu0 0.0
        %962 = vmatprep.subr.mxu0 0.0
        %963 = vmatpush1.msra.mxu0 0.0
        %964 = vmatprep.subr.mxu0 0.0
        %965 = vmatpush1.msra.mxu0 0.0
        %966 = vmatprep.subr.mxu0 0.0
        %967 = vmatpush1.msra.mxu0 0.0
        %968 = vmatprep.mubr.f32.mxu0 0.0
        %969 = vmatmul.mubr.f32.gmra.mrb[0].mxu0 %v898
        %v970 = vpop.f32.mrb[0].mxu0
        %v971 = vadd.f32 %v895, %v970
        %v972 = vpop.f32.mrb[0].mxu0
        %973 = vdwg.mxu0
        %v974 = vld [vmem:[%s3] sm:$0xff]
        %vm975 = vcmask 261120
        %v976 = vsel %vm975, %v971, 0.0
        %977 = vadd.xlane.f32.xlu0 %v976
        %v978 = vpop.xlane.xlu0 %977
        %v979 = vrcp.pop 32.0
        %v980 = vmul.f32 %v978, %v979
        %v981 = vsub.f32 %v971, %v980
        %v982 = vmul.f32 %v981, %v981
        %v983 = vsel %vm975, %v982, 0.0
        %984 = vadd.xlane.f32.xlu0 %v983
        %v985 = vpop.xlane.xlu0 %984
        %v986 = vmul.f32 %v985, %v979
        %v987 = vadd.f32 %v986, 1e-05
        %v988 = vrsqrt.pop %v987
        %v989 = vmul.f32 %v981, %v988
        %v990 = vlaneseq
        %v991 = vshrl.u32 %v990, 7
        %v992 = vsub.s32 0, %v991
        %v993 = vrot.slane %v974, %v992
        %v994 = vmul.f32 %v989, %v993
        %v995 = vlaneseq
        %v996 = vshrl.u32 %v995, 7
        %v997 = vsub.s32 1, %v996
        %v998 = vrot.slane %v974, %v997
        %v999 = vadd.f32 %v994, %v998
        %v1000 = vld [vmem:[%s4] sm:$0xff]
        %v1001 = vld [vmem:[%s4 + $0x8] sm:$0xff]
        %v1002 = vld [vmem:[%s4 + $0x10] sm:$0xff]
        %v1003 = vld [vmem:[%s4 + $0x18] sm:$0xff]
        %v1005 = vsel %vm975, %v999, 0
        %1007 = vmatprep.subr.mxu0 0.0
        %1008 = vmatpush1.msra.mxu0 %v1000
        %1009 = vmatprep.subr.mxu0 0.0
        %1010 = vmatpush1.msra.mxu0 %v1001
        %1011 = vmatprep.subr.mxu0 0.0
        %1012 = vmatpush1.msra.mxu0 %v1002
        %1013 = vmatprep.subr.mxu0 0.0
        %1014 = vmatpush1.msra.mxu0 %v1003
        %1015 = vmatprep.subr.mxu0 0.0
        %1016 = vmatpush1.msra.mxu0 0.0
        %1017 = vmatprep.subr.mxu0 0.0
        %1018 = vmatpush1.msra.mxu0 0.0
        %1019 = vmatprep.subr.mxu0 0.0
        %1020 = vmatpush1.msra.mxu0 0.0
        %1021 = vmatprep.subr.mxu0 0.0
        %1022 = vmatpush1.msra.mxu0 0.0
        %1023 = vmatprep.subr.mxu0 0.0
        %1024 = vmatpush1.msra.mxu0 0.0
        %1025 = vmatprep.subr.mxu0 0.0
        %1026 = vmatpush1.msra.mxu0 0.0
        %1027 = vmatprep.subr.mxu0 0.0
        %1028 = vmatpush1.msra.mxu0 0.0
        %1029 = vmatprep.subr.mxu0 0.0
        %1030 = vmatpush1.msra.mxu0 0.0
        %1031 = vmatprep.subr.mxu0 0.0
        %1032 = vmatpush1.msra.mxu0 0.0
        %1033 = vmatprep.subr.mxu0 0.0
        %1034 = vmatpush1.msra.mxu0 0.0
        %1035 = vmatprep.subr.mxu0 0.0
        %1036 = vmatpush1.msra.mxu0 0.0
        %1037 = vmatprep.subr.mxu0 0.0
        %1038 = vmatpush1.msra.mxu0 0.0
        %1039 = vmatprep.subr.mxu0 0.0
        %1040 = vmatpush1.msra.mxu0 0.0
        %1041 = vmatprep.subr.mxu0 0.0
        %1042 = vmatpush1.msra.mxu0 0.0
        %1043 = vmatprep.subr.mxu0 0.0
        %1044 = vmatpush1.msra.mxu0 0.0
        %1045 = vmatprep.subr.mxu0 0.0
        %1046 = vmatpush1.msra.mxu0 0.0
        %1047 = vmatprep.subr.mxu0 0.0
        %1048 = vmatpush1.msra.mxu0 0.0
        %1049 = vmatprep.subr.mxu0 0.0
        %1050 = vmatpush1.msra.mxu0 0.0
        %1051 = vmatprep.subr.mxu0 0.0
        %1052 = vmatpush1.msra.mxu0 0.0
        %1053 = vmatprep.subr.mxu0 0.0
        %1054 = vmatpush1.msra.mxu0 0.0
        %1055 = vmatprep.subr.mxu0 0.0
        %1056 = vmatpush1.msra.mxu0 0.0
        %1057 = vmatprep.subr.mxu0 0.0
        %1058 = vmatpush1.msra.mxu0 0.0
        %1059 = vmatprep.subr.mxu0 0.0
        %1060 = vmatpush1.msra.mxu0 0.0
        %1061 = vmatprep.subr.mxu0 0.0
        %1062 = vmatpush1.msra.mxu0 0.0
        %1063 = vmatprep.subr.mxu0 0.0
        %1064 = vmatpush1.msra.mxu0 0.0
        %1065 = vmatprep.subr.mxu0 0.0
        %1066 = vmatpush1.msra.mxu0 0.0
        %1067 = vmatprep.subr.mxu0 0.0
        %1068 = vmatpush1.msra.mxu0 0.0
        %1069 = vmatprep.subr.mxu0 0.0
        %1070 = vmatpush1.msra.mxu0 0.0
        %1071 = vmatprep.mubr.f32.mxu0 0.0
        %1072 = vmatmul.mubr.f32.gmra.mrb[0].mxu0 %v1005
        %v1073 = vpop.f32.mrb[0].mxu0
        %v1074 = vadd.f32 0.0, %v1073
        %v1075 = vpop.f32.mrb[0].mxu0
        %1076 = vdwg.mxu0
        %v1077 = vld [vmem:[#allocation6] sm:$0x3]
        %v1079 = vrot.slane %v1074, 7
        %vm1081 = vcmask 1040384
        %v1082 = vsel %vm1081, 0.0, %v1079
        %v1083 = vlaneseq
        %v1084 = vshrl.u32 %v1083, 7
        %v1085 = vsub.s32 1, %v1084
        %v1086 = vrot.slane %v1077, %v1085
        %v1087 = vmul.f32 %v1074, %v1086
        %v1088 = vlaneseq
        %v1089 = vshrl.u32 %v1088, 7
        %v1090 = vsub.s32 0, %v1089
        %v1091 = vrot.slane %v1077, %v1090
        %v1092 = vmul.f32 %v1082, %v1091
        %v1093 = vadd.f32 %v1087, %v1092
        %v1094 = vld [vmem:[#allocation7] sm:$0x1]
        %v1096 = vlaneseq
        %v1097 = vshrl.u32 %v1096, 7
        %v1098 = vsub.s32 0, %v1097
        %v1099 = vrot.slane %v1094, %v1098
        %v1101 = vadd.f32 %v1093, %v1099
        %v1102 = vxor.u32 %v1101, 2147483648
        %v1103 = vmul.f32 %v1102, 1.442695
        %v1104 = vpow.pop %v1103
        %v1105 = vadd.f32 %v1104, 1.0
        %v1106 = vrcp.pop %v1105
        %v1107 = vmul.f32 1.0, %v1106
        %v1108 = vmul.f32 %v1101, %v1107
        %v1109 = vld [vmem:[%s7] sm:$0xff]
        %v1110 = vld [vmem:[%s7 + $0x8] sm:$0xff]
        %v1111 = vld [vmem:[%s7 + $0x10] sm:$0xff]
        %v1112 = vld [vmem:[%s7 + $0x18] sm:$0xff]
        %v1114 = vsel %vm975, %v1108, 0
        %1116 = vmatprep.subr.mxu0 0.0
        %1117 = vmatpush1.msra.mxu0 %v1109
        %1118 = vmatprep.subr.mxu0 0.0
        %1119 = vmatpush1.msra.mxu0 %v1110
        %1120 = vmatprep.subr.mxu0 0.0
        %1121 = vmatpush1.msra.mxu0 %v1111
        %1122 = vmatprep.subr.mxu0 0.0
        %1123 = vmatpush1.msra.mxu0 %v1112
        %1124 = vmatprep.subr.mxu0 0.0
        %1125 = vmatpush1.msra.mxu0 0.0
        %1126 = vmatprep.subr.mxu0 0.0
        %1127 = vmatpush1.msra.mxu0 0.0
        %1128 = vmatprep.subr.mxu0 0.0
        %1129 = vmatpush1.msra.mxu0 0.0
        %1130 = vmatprep.subr.mxu0 0.0
        %1131 = vmatpush1.msra.mxu0 0.0
        %1132 = vmatprep.subr.mxu0 0.0
        %1133 = vmatpush1.msra.mxu0 0.0
        %1134 = vmatprep.subr.mxu0 0.0
        %1135 = vmatpush1.msra.mxu0 0.0
        %1136 = vmatprep.subr.mxu0 0.0
        %1137 = vmatpush1.msra.mxu0 0.0
        %1138 = vmatprep.subr.mxu0 0.0
        %1139 = vmatpush1.msra.mxu0 0.0
        %1140 = vmatprep.subr.mxu0 0.0
        %1141 = vmatpush1.msra.mxu0 0.0
        %1142 = vmatprep.subr.mxu0 0.0
        %1143 = vmatpush1.msra.mxu0 0.0
        %1144 = vmatprep.subr.mxu0 0.0
        %1145 = vmatpush1.msra.mxu0 0.0
        %1146 = vmatprep.subr.mxu0 0.0
        %1147 = vmatpush1.msra.mxu0 0.0
        %1148 = vmatprep.subr.mxu0 0.0
        %1149 = vmatpush1.msra.mxu0 0.0
        %1150 = vmatprep.subr.mxu0 0.0
        %1151 = vmatpush1.msra.mxu0 0.0
        %1152 = vmatprep.subr.mxu0 0.0
        %1153 = vmatpush1.msra.mxu0 0.0
        %1154 = vmatprep.subr.mxu0 0.0
        %1155 = vmatpush1.msra.mxu0 0.0
        %1156 = vmatprep.subr.mxu0 0.0
        %1157 = vmatpush1.msra.mxu0 0.0
        %1158 = vmatprep.subr.mxu0 0.0
        %1159 = vmatpush1.msra.mxu0 0.0
        %1160 = vmatprep.subr.mxu0 0.0
        %1161 = vmatpush1.msra.mxu0 0.0
        %1162 = vmatprep.subr.mxu0 0.0
        %1163 = vmatpush1.msra.mxu0 0.0
        %1164 = vmatprep.subr.mxu0 0.0
        %1165 = vmatpush1.msra.mxu0 0.0
        %1166 = vmatprep.subr.mxu0 0.0
        %1167 = vmatpush1.msra.mxu0 0.0
        %1168 = vmatprep.subr.mxu0 0.0
        %1169 = vmatpush1.msra.mxu0 0.0
        %1170 = vmatprep.subr.mxu0 0.0
        %1171 = vmatpush1.msra.mxu0 0.0
        %1172 = vmatprep.subr.mxu0 0.0
        %1173 = vmatpush1.msra.mxu0 0.0
        %1174 = vmatprep.subr.mxu0 0.0
        %1175 = vmatpush1.msra.mxu0 0.0
        %1176 = vmatprep.subr.mxu0 0.0
        %1177 = vmatpush1.msra.mxu0 0.0
        %1178 = vmatprep.subr.mxu0 0.0
        %1179 = vmatpush1.msra.mxu0 0.0
        %1180 = vmatprep.mubr.f32.mxu0 0.0
        %1181 = vmatmul.mubr.f32.gmra.mrb[0].mxu0 %v1114
        %v1182 = vpop.f32.mrb[0].mxu0
        %v1183 = vadd.f32 0.0, %v1182
        %v1184 = vpop.f32.mrb[0].mxu0
        %1185 = vdwg.mxu0
        %v1186 = vld [vmem:[#allocation9] sm:$0x1]
        %v1188 = vlaneseq
        %v1189 = vshrl.u32 %v1188, 7
        %v1190 = vsub.s32 0, %v1189
        %v1191 = vrot.slane %v1186, %v1190
        %v1193 = vadd.f32 %v1183, %v1191
        %vm1194 = vcmp.gt.f32.partialorder %v1193, 20.0
        %v1195 = vmin.f32 %v1193, 20.0
        %v1196 = vmul.f32 %v1195, 1.442695
        %v1197 = vpow.pop %v1196
        %v1198 = vadd.f32 %v1197, 1.0
        %v1199 = vlog2.pop %v1198
        %v1200 = vmul.f32 %v1199, 0.6931472
        %v1201 = vmul.f32 -0.5, %v1197
        %v1202 = vadd.f32 %v1201, 1.0
        %v1203 = vmul.f32 %v1202, %v1197
        %v1204 = vand.u32 2147483647, %v1197
        %vm1205 = vcmp.lt.f32.partialorder %v1204, 0.0004427343
        %v1206 = vsel %vm1205, %v1203, %v1200
        %v1207 = vsel %vm1194, %v1193, %v1206
        %v1208 = vld [vmem:[%s9] sm:$0xff]
        %v1209 = vld [vmem:[%s9 + $0x8] sm:$0xff]
        %v1210 = vmul.f32 %v1207, %v1108
        %v1212 = vcombine.high %v1207, %v1207
        %v1214 = vunpack.c.l.s4 1966171168
        %v1215 = vunpack.c.0.s8 %v1214
        %v1216 = vlaneseq
        %v1217 = vshrl.u32 %v1216, 7
        %v1218 = vsub.s32 %v1215, %v1217
        %v1219 = vrot.slane %v1207, %v1218
        %v1221 = vunpack.c.l.s4 1966171168
        %v1222 = vunpack.c.0.s8 %v1221
        %v1223 = vlaneseq
        %v1224 = vshrl.u32 %v1223, 7
        %v1225 = vsub.s32 %v1222, %v1224
        %v1226 = vrot.slane %v1212, %v1225
        %v1227 = vcombine.high %v1219, %v1219
        %v1228 = vcombine.high %v1226, %v1226
        %v1230 = vunpack.c.l.s4 1966171168
        %v1231 = vunpack.c.0.s8 %v1230
        %v1232 = vlaneseq
        %v1233 = vshrl.u32 %v1232, 7
        %v1234 = vsub.s32 %v1231, %v1233
        %v1235 = vrot.slane %v1219, %v1234
        %v1237 = vunpack.c.l.s4 1966171168
        %v1238 = vunpack.c.0.s8 %v1237
        %v1239 = vlaneseq
        %v1240 = vshrl.u32 %v1239, 7
        %v1241 = vsub.s32 %v1238, %v1240
        %v1242 = vrot.slane %v1226, %v1241
        %v1244 = vunpack.c.l.s4 1966171168
        %v1245 = vunpack.c.0.s8 %v1244
        %v1246 = vlaneseq
        %v1247 = vshrl.u32 %v1246, 7
        %v1248 = vsub.s32 %v1245, %v1247
        %v1249 = vrot.slane %v1227, %v1248
        %v1251 = vunpack.c.l.s4 1966171168
        %v1252 = vunpack.c.0.s8 %v1251
        %v1253 = vlaneseq
        %v1254 = vshrl.u32 %v1253, 7
        %v1255 = vsub.s32 %v1252, %v1254
        %v1256 = vrot.slane %v1228, %v1255
        %v1257 = vcombine.high %v1235, %v1235
        %v1258 = vcombine.high %v1242, %v1242
        %v1259 = vcombine.high %v1249, %v1249
        %v1260 = vcombine.high %v1256, %v1256
        %v1261 = vlaneseq
        %v1262 = vshrl.u32 %v1261, 7
        %v1263 = vsub.s32 0, %v1262
        %v1264 = vrot.slane %v1235, %v1263
        %v1265 = vlaneseq
        %v1266 = vshrl.u32 %v1265, 7
        %v1267 = vsub.s32 0, %v1266
        %v1268 = vrot.slane %v1249, %v1267
        %v1269 = vlaneseq
        %v1270 = vshrl.u32 %v1269, 7
        %v1271 = vsub.s32 0, %v1270
        %v1272 = vrot.slane %v1257, %v1271
        %v1273 = vlaneseq
        %v1274 = vshrl.u32 %v1273, 7
        %v1275 = vsub.s32 0, %v1274
        %v1276 = vrot.slane %v1259, %v1275
        %v1277 = vlaneseq
        %v1278 = vshrl.u32 %v1277, 7
        %v1279 = vsub.s32 0, %v1278
        %v1280 = vrot.slane %v1242, %v1279
        %v1281 = vlaneseq
        %v1282 = vshrl.u32 %v1281, 7
        %v1283 = vsub.s32 0, %v1282
        %v1284 = vrot.slane %v1256, %v1283
        %v1285 = vlaneseq
        %v1286 = vshrl.u32 %v1285, 7
        %v1287 = vsub.s32 0, %v1286
        %v1288 = vrot.slane %v1258, %v1287
        %v1289 = vlaneseq
        %v1290 = vshrl.u32 %v1289, 7
        %v1291 = vsub.s32 0, %v1290
        %v1292 = vrot.slane %v1260, %v1291
        %v1301 = vmul.f32 %v1264, %v1208
        %v1302 = vmul.f32 %v1264, %v1209
        %v1303 = vmul.f32 %v1268, %v1208
        %v1304 = vmul.f32 %v1268, %v1209
        %v1305 = vmul.f32 %v1272, %v1208
        %v1306 = vmul.f32 %v1272, %v1209
        %v1307 = vmul.f32 %v1276, %v1208
        %v1308 = vmul.f32 %v1276, %v1209
        %v1309 = vmul.f32 %v1280, %v1208
        %v1310 = vmul.f32 %v1280, %v1209
        %v1311 = vmul.f32 %v1284, %v1208
        %v1312 = vmul.f32 %v1284, %v1209
        %v1313 = vmul.f32 %v1288, %v1208
        %v1314 = vmul.f32 %v1288, %v1209
        %v1315 = vmul.f32 %v1292, %v1208
        %v1316 = vmul.f32 %v1292, %v1209
        %v1317 = vmul.f32 %v1301, 1.442695
        %v1318 = vpow.pop %v1317
        %v1319 = vmul.f32 %v1302, 1.442695
        %v1320 = vpow.pop %v1319
        %v1321 = vmul.f32 %v1303, 1.442695
        %v1322 = vpow.pop %v1321
        %v1323 = vmul.f32 %v1304, 1.442695
        %v1324 = vpow.pop %v1323
        %v1325 = vmul.f32 %v1305, 1.442695
        %v1326 = vpow.pop %v1325
        %v1327 = vmul.f32 %v1306, 1.442695
        %v1328 = vpow.pop %v1327
        %v1329 = vmul.f32 %v1307, 1.442695
        %v1330 = vpow.pop %v1329
        %v1331 = vmul.f32 %v1308, 1.442695
        %v1332 = vpow.pop %v1331
        %v1333 = vmul.f32 %v1309, 1.442695
        %v1334 = vpow.pop %v1333
        %v1335 = vmul.f32 %v1310, 1.442695
        %v1336 = vpow.pop %v1335
        %v1337 = vmul.f32 %v1311, 1.442695
        %v1338 = vpow.pop %v1337
        %v1339 = vmul.f32 %v1312, 1.442695
        %v1340 = vpow.pop %v1339
        %v1341 = vmul.f32 %v1313, 1.442695
        %v1342 = vpow.pop %v1341
        %v1343 = vmul.f32 %v1314, 1.442695
        %v1344 = vpow.pop %v1343
        %v1345 = vmul.f32 %v1315, 1.442695
        %v1346 = vpow.pop %v1345
        %v1347 = vmul.f32 %v1316, 1.442695
        %v1348 = vpow.pop %v1347
        %v1349 = vlaneseq
        %v1350 = vshrl.u32 %v1349, 7
        %v1351 = vsub.s32 0, %v1350
        %v1352 = vrot.slane %v1183, %v1351
        %s1354 = sor.u32 256, 32
        %1355 = vbcast.lane.b32.xlu0 %v1352, %s1354
        %v1356 = vpop.permute.xlu0 %1355
        %s1358 = sor.u32 256, 40
        %1359 = vbcast.lane.b32.xlu0 %v1352, %s1358
        %v1360 = vpop.permute.xlu0 %1359
        %v1361 = vlaneseq
        %v1362 = vshrl.u32 %v1361, 7
        %v1363 = vsub.s32 1, %v1362
        %v1364 = vrot.slane %v1183, %v1363
        %s1366 = sor.u32 256, 32
        %1367 = vbcast.lane.b32.xlu0 %v1364, %s1366
        %v1368 = vpop.permute.xlu0 %1367
        %s1370 = sor.u32 256, 40
        %1371 = vbcast.lane.b32.xlu0 %v1364, %s1370
        %v1372 = vpop.permute.xlu0 %1371
        %v1373 = vlaneseq
        %v1374 = vshrl.u32 %v1373, 7
        %v1375 = vsub.s32 2, %v1374
        %v1376 = vrot.slane %v1183, %v1375
        %s1378 = sor.u32 256, 32
        %1379 = vbcast.lane.b32.xlu0 %v1376, %s1378
        %v1380 = vpop.permute.xlu0 %1379
        %s1382 = sor.u32 256, 40
        %1383 = vbcast.lane.b32.xlu0 %v1376, %s1382
        %v1384 = vpop.permute.xlu0 %1383
        %v1385 = vlaneseq
        %v1386 = vshrl.u32 %v1385, 7
        %v1387 = vsub.s32 3, %v1386
        %v1388 = vrot.slane %v1183, %v1387
        %s1390 = sor.u32 256, 32
        %1391 = vbcast.lane.b32.xlu0 %v1388, %s1390
        %v1392 = vpop.permute.xlu0 %1391
        %s1394 = sor.u32 256, 40
        %1395 = vbcast.lane.b32.xlu0 %v1388, %s1394
        %v1396 = vpop.permute.xlu0 %1395
        %v1397 = vlaneseq
        %v1398 = vshrl.u32 %v1397, 7
        %v1399 = vsub.s32 4, %v1398
        %v1400 = vrot.slane %v1183, %v1399
        %s1402 = sor.u32 256, 32
        %1403 = vbcast.lane.b32.xlu0 %v1400, %s1402
        %v1404 = vpop.permute.xlu0 %1403
        %s1406 = sor.u32 256, 40
        %1407 = vbcast.lane.b32.xlu0 %v1400, %s1406
        %v1408 = vpop.permute.xlu0 %1407
        %v1409 = vlaneseq
        %v1410 = vshrl.u32 %v1409, 7
        %v1411 = vsub.s32 5, %v1410
        %v1412 = vrot.slane %v1183, %v1411
        %s1414 = sor.u32 256, 32
        %1415 = vbcast.lane.b32.xlu0 %v1412, %s1414
        %v1416 = vpop.permute.xlu0 %1415
        %s1418 = sor.u32 256, 40
        %1419 = vbcast.lane.b32.xlu0 %v1412, %s1418
        %v1420 = vpop.permute.xlu0 %1419
        %v1421 = vlaneseq
        %v1422 = vshrl.u32 %v1421, 7
        %v1423 = vsub.s32 6, %v1422
        %v1424 = vrot.slane %v1183, %v1423
        %s1426 = sor.u32 256, 32
        %1427 = vbcast.lane.b32.xlu0 %v1424, %s1426
        %v1428 = vpop.permute.xlu0 %1427
        %s1430 = sor.u32 256, 40
        %1431 = vbcast.lane.b32.xlu0 %v1424, %s1430
        %v1432 = vpop.permute.xlu0 %1431
        %v1433 = vlaneseq
        %v1434 = vshrl.u32 %v1433, 7
        %v1435 = vsub.s32 7, %v1434
        %v1436 = vrot.slane %v1183, %v1435
        %s1438 = sor.u32 256, 32
        %1439 = vbcast.lane.b32.xlu0 %v1436, %s1438
        %v1440 = vpop.permute.xlu0 %1439
        %s1442 = sor.u32 256, 40
        %1443 = vbcast.lane.b32.xlu0 %v1436, %s1442
        %v1444 = vpop.permute.xlu0 %1443
        %v1446 = vcombine.high %v1210, %v1210
        %v1448 = vunpack.c.l.s4 1966171168
        %v1449 = vunpack.c.0.s8 %v1448
        %v1450 = vlaneseq
        %v1451 = vshrl.u32 %v1450, 7
        %v1452 = vsub.s32 %v1449, %v1451
        %v1453 = vrot.slane %v1210, %v1452
        %v1455 = vunpack.c.l.s4 1966171168
        %v1456 = vunpack.c.0.s8 %v1455
        %v1457 = vlaneseq
        %v1458 = vshrl.u32 %v1457, 7
        %v1459 = vsub.s32 %v1456, %v1458
        %v1460 = vrot.slane %v1446, %v1459
        %v1461 = vcombine.high %v1453, %v1453
        %v1462 = vcombine.high %v1460, %v1460
        %v1464 = vunpack.c.l.s4 1966171168
        %v1465 = vunpack.c.0.s8 %v1464
        %v1466 = vlaneseq
        %v1467 = vshrl.u32 %v1466, 7
        %v1468 = vsub.s32 %v1465, %v1467
        %v1469 = vrot.slane %v1453, %v1468
        %v1471 = vunpack.c.l.s4 1966171168
        %v1472 = vunpack.c.0.s8 %v1471
        %v1473 = vlaneseq
        %v1474 = vshrl.u32 %v1473, 7
        %v1475 = vsub.s32 %v1472, %v1474
        %v1476 = vrot.slane %v1460, %v1475
        %v1478 = vunpack.c.l.s4 1966171168
        %v1479 = vunpack.c.0.s8 %v1478
        %v1480 = vlaneseq
        %v1481 = vshrl.u32 %v1480, 7
        %v1482 = vsub.s32 %v1479, %v1481
        %v1483 = vrot.slane %v1461, %v1482
        %v1485 = vunpack.c.l.s4 1966171168
        %v1486 = vunpack.c.0.s8 %v1485
        %v1487 = vlaneseq
        %v1488 = vshrl.u32 %v1487, 7
        %v1489 = vsub.s32 %v1486, %v1488
        %v1490 = vrot.slane %v1462, %v1489
        %v1491 = vcombine.high %v1469, %v1469
        %v1492 = vcombine.high %v1476, %v1476
        %v1493 = vcombine.high %v1483, %v1483
        %v1494 = vcombine.high %v1490, %v1490
        %v1495 = vlaneseq
        %v1496 = vshrl.u32 %v1495, 7
        %v1497 = vsub.s32 0, %v1496
        %v1498 = vrot.slane %v1469, %v1497
        %v1499 = vlaneseq
        %v1500 = vshrl.u32 %v1499, 7
        %v1501 = vsub.s32 0, %v1500
        %v1502 = vrot.slane %v1483, %v1501
        %v1503 = vlaneseq
        %v1504 = vshrl.u32 %v1503, 7
        %v1505 = vsub.s32 0, %v1504
        %v1506 = vrot.slane %v1491, %v1505
        %v1507 = vlaneseq
        %v1508 = vshrl.u32 %v1507, 7
        %v1509 = vsub.s32 0, %v1508
        %v1510 = vrot.slane %v1493, %v1509
        %v1511 = vlaneseq
        %v1512 = vshrl.u32 %v1511, 7
        %v1513 = vsub.s32 0, %v1512
        %v1514 = vrot.slane %v1476, %v1513
        %v1515 = vlaneseq
        %v1516 = vshrl.u32 %v1515, 7
        %v1517 = vsub.s32 0, %v1516
        %v1518 = vrot.slane %v1490, %v1517
        %v1519 = vlaneseq
        %v1520 = vshrl.u32 %v1519, 7
        %v1521 = vsub.s32 0, %v1520
        %v1522 = vrot.slane %v1492, %v1521
        %v1523 = vlaneseq
        %v1524 = vshrl.u32 %v1523, 7
        %v1525 = vsub.s32 0, %v1524
        %v1526 = vrot.slane %v1494, %v1525
        %v1535 = vmul.f32 %v1356, %v1498
        %v1536 = vmul.f32 %v1360, %v1498
        %v1537 = vmul.f32 %v1368, %v1502
        %v1538 = vmul.f32 %v1372, %v1502
        %v1539 = vmul.f32 %v1380, %v1506
        %v1540 = vmul.f32 %v1384, %v1506
        %v1541 = vmul.f32 %v1392, %v1510
        %v1542 = vmul.f32 %v1396, %v1510
        %v1543 = vmul.f32 %v1404, %v1514
        %v1544 = vmul.f32 %v1408, %v1514
        %v1545 = vmul.f32 %v1416, %v1518
        %v1546 = vmul.f32 %v1420, %v1518
        %v1547 = vmul.f32 %v1428, %v1522
        %v1548 = vmul.f32 %v1432, %v1522
        %v1549 = vmul.f32 %v1440, %v1526
        %v1550 = vmul.f32 %v1444, %v1526
        %v1551 = vmul.f32 %v1318, 0.0
        %v1552 = vmul.f32 %v1320, 0.0
        %v1553 = vadd.f32 %v1551, %v1535
        %v1554 = vadd.f32 %v1552, %v1536
        %v1555 = vmul.f32 %v1322, %v1553
        %v1556 = vmul.f32 %v1324, %v1554
        %v1557 = vadd.f32 %v1555, %v1537
        %v1558 = vadd.f32 %v1556, %v1538
        %v1559 = vmul.f32 %v1326, %v1557
        %v1560 = vmul.f32 %v1328, %v1558
        %v1561 = vadd.f32 %v1559, %v1539
        %v1562 = vadd.f32 %v1560, %v1540
        %v1563 = vmul.f32 %v1330, %v1561
        %v1564 = vmul.f32 %v1332, %v1562
        %v1565 = vadd.f32 %v1563, %v1541
        %v1566 = vadd.f32 %v1564, %v1542
        %v1567 = vmul.f32 %v1334, %v1565
        %v1568 = vmul.f32 %v1336, %v1566
        %v1569 = vadd.f32 %v1567, %v1543
        %v1570 = vadd.f32 %v1568, %v1544
        %v1571 = vmul.f32 %v1338, %v1569
        %v1572 = vmul.f32 %v1340, %v1570
        %v1573 = vadd.f32 %v1571, %v1545
        %v1574 = vadd.f32 %v1572, %v1546
        %v1575 = vmul.f32 %v1342, %v1573
        %v1576 = vmul.f32 %v1344, %v1574
        %v1577 = vadd.f32 %v1575, %v1547
        %v1578 = vadd.f32 %v1576, %v1548
        %v1579 = vmul.f32 %v1346, %v1577
        %v1580 = vmul.f32 %v1348, %v1578
        %v1581 = vadd.f32 %v1579, %v1549
        %v1582 = vadd.f32 %v1580, %v1550
        %s1584 = sor.u32 256, 48
        %1585 = vbcast.lane.b32.xlu0 %v1352, %s1584
        %v1586 = vpop.permute.xlu0 %1585
        %s1588 = sor.u32 256, 56
        %1589 = vbcast.lane.b32.xlu0 %v1352, %s1588
        %v1590 = vpop.permute.xlu0 %1589
        %s1592 = sor.u32 256, 48
        %1593 = vbcast.lane.b32.xlu0 %v1364, %s1592
        %v1594 = vpop.permute.xlu0 %1593
        %s1596 = sor.u32 256, 56
        %1597 = vbcast.lane.b32.xlu0 %v1364, %s1596
        %v1598 = vpop.permute.xlu0 %1597
        %s1600 = sor.u32 256, 48
        %1601 = vbcast.lane.b32.xlu0 %v1376, %s1600
        %v1602 = vpop.permute.xlu0 %1601
        %s1604 = sor.u32 256, 56
        %1605 = vbcast.lane.b32.xlu0 %v1376, %s1604
        %v1606 = vpop.permute.xlu0 %1605
        %s1608 = sor.u32 256, 48
        %1609 = vbcast.lane.b32.xlu0 %v1388, %s1608
        %v1610 = vpop.permute.xlu0 %1609
        %s1612 = sor.u32 256, 56
        %1613 = vbcast.lane.b32.xlu0 %v1388, %s1612
        %v1614 = vpop.permute.xlu0 %1613
        %s1616 = sor.u32 256, 48
        %1617 = vbcast.lane.b32.xlu0 %v1400, %s1616
        %v1618 = vpop.permute.xlu0 %1617
        %s1620 = sor.u32 256, 56
        %1621 = vbcast.lane.b32.xlu0 %v1400, %s1620
        %v1622 = vpop.permute.xlu0 %1621
        %s1624 = sor.u32 256, 48
        %1625 = vbcast.lane.b32.xlu0 %v1412, %s1624
        %v1626 = vpop.permute.xlu0 %1625
        %s1628 = sor.u32 256, 56
        %1629 = vbcast.lane.b32.xlu0 %v1412, %s1628
        %v1630 = vpop.permute.xlu0 %1629
        %s1632 = sor.u32 256, 48
        %1633 = vbcast.lane.b32.xlu0 %v1424, %s1632
        %v1634 = vpop.permute.xlu0 %1633
        %s1636 = sor.u32 256, 56
        %1637 = vbcast.lane.b32.xlu0 %v1424, %s1636
        %v1638 = vpop.permute.xlu0 %1637
        %s1640 = sor.u32 256, 48
        %1641 = vbcast.lane.b32.xlu0 %v1436, %s1640
        %v1642 = vpop.permute.xlu0 %1641
        %s1644 = sor.u32 256, 56
        %1645 = vbcast.lane.b32.xlu0 %v1436, %s1644
        %v1646 = vpop.permute.xlu0 %1645
        %v1647 = vmul.f32 %v1586, %v1553
        %v1648 = vmul.f32 %v1590, %v1554
        %v1649 = vmul.f32 %v1594, %v1557
        %v1650 = vmul.f32 %v1598, %v1558
        %v1651 = vmul.f32 %v1602, %v1561
        %v1652 = vmul.f32 %v1606, %v1562
        %v1653 = vmul.f32 %v1610, %v1565
        %v1654 = vmul.f32 %v1614, %v1566
        %v1655 = vmul.f32 %v1618, %v1569
        %v1656 = vmul.f32 %v1622, %v1570
        %v1657 = vmul.f32 %v1626, %v1573
        %v1658 = vmul.f32 %v1630, %v1574
        %v1659 = vmul.f32 %v1634, %v1577
        %v1660 = vmul.f32 %v1638, %v1578
        %v1661 = vmul.f32 %v1642, %v1581
        %v1662 = vmul.f32 %v1646, %v1582
        %v1663 = vsel %vm975, %v1647, 0.0
        %v1664 = vsel %vm975, %v1648, 0.0
        %v1665 = vadd.f32 %v1663, %v1664
        %v1666 = vrot.slane %v1665, 4
        %v1667 = vadd.f32 %v1665, %v1666
        %v1668 = vrot.slane %v1667, 2
        %v1669 = vadd.f32 %v1667, %v1668
        %v1670 = vrot.slane %v1669, 1
        %v1671 = vadd.f32 %v1669, %v1670
        %v1672 = vsel %vm975, %v1649, 0.0
        %v1673 = vsel %vm975, %v1650, 0.0
        %v1674 = vadd.f32 %v1672, %v1673
        %v1675 = vrot.slane %v1674, 4
        %v1676 = vadd.f32 %v1674, %v1675
        %v1677 = vrot.slane %v1676, 2
        %v1678 = vadd.f32 %v1676, %v1677
        %v1679 = vrot.slane %v1678, 1
        %v1680 = vadd.f32 %v1678, %v1679
        %v1681 = vsel %vm975, %v1651, 0.0
        %v1682 = vsel %vm975, %v1652, 0.0
        %v1683 = vadd.f32 %v1681, %v1682
        %v1684 = vrot.slane %v1683, 4
        %v1685 = vadd.f32 %v1683, %v1684
        %v1686 = vrot.slane %v1685, 2
        %v1687 = vadd.f32 %v1685, %v1686
        %v1688 = vrot.slane %v1687, 1
        %v1689 = vadd.f32 %v1687, %v1688
        %v1690 = vsel %vm975, %v1653, 0.0
        %v1691 = vsel %vm975, %v1654, 0.0
        %v1692 = vadd.f32 %v1690, %v1691
        %v1693 = vrot.slane %v1692, 4
        %v1694 = vadd.f32 %v1692, %v1693
        %v1695 = vrot.slane %v1694, 2
        %v1696 = vadd.f32 %v1694, %v1695
        %v1697 = vrot.slane %v1696, 1
        %v1698 = vadd.f32 %v1696, %v1697
        %v1699 = vsel %vm975, %v1655, 0.0
        %v1700 = vsel %vm975, %v1656, 0.0
        %v1701 = vadd.f32 %v1699, %v1700
        %v1702 = vrot.slane %v1701, 4
        %v1703 = vadd.f32 %v1701, %v1702
        %v1704 = vrot.slane %v1703, 2
        %v1705 = vadd.f32 %v1703, %v1704
        %v1706 = vrot.slane %v1705, 1
        %v1707 = vadd.f32 %v1705, %v1706
        %v1708 = vsel %vm975, %v1657, 0.0
        %v1709 = vsel %vm975, %v1658, 0.0
        %v1710 = vadd.f32 %v1708, %v1709
        %v1711 = vrot.slane %v1710, 4
        %v1712 = vadd.f32 %v1710, %v1711
        %v1713 = vrot.slane %v1712, 2
        %v1714 = vadd.f32 %v1712, %v1713
        %v1715 = vrot.slane %v1714, 1
        %v1716 = vadd.f32 %v1714, %v1715
        %v1717 = vsel %vm975, %v1659, 0.0
        %v1718 = vsel %vm975, %v1660, 0.0
        %v1719 = vadd.f32 %v1717, %v1718
        %v1720 = vrot.slane %v1719, 4
        %v1721 = vadd.f32 %v1719, %v1720
        %v1722 = vrot.slane %v1721, 2
        %v1723 = vadd.f32 %v1721, %v1722
        %v1724 = vrot.slane %v1723, 1
        %v1725 = vadd.f32 %v1723, %v1724
        %v1726 = vsel %vm975, %v1661, 0.0
        %v1727 = vsel %vm975, %v1662, 0.0
        %v1728 = vadd.f32 %v1726, %v1727
        %v1729 = vrot.slane %v1728, 4
        %v1730 = vadd.f32 %v1728, %v1729
        %v1731 = vrot.slane %v1730, 2
        %v1732 = vadd.f32 %v1730, %v1731
        %v1733 = vrot.slane %v1732, 1
        %v1734 = vadd.f32 %v1732, %v1733
        %v1735 = vld [vmem:[#allocation10] sm:$0x1]
        %v1737 = vlaneseq
        %v1738 = vshrl.u32 %v1737, 7
        %v1739 = vsub.s32 0, %v1738
        %v1740 = vrot.slane %v1735, %v1739
        %v1742 = vmul.f32 %v1108, %v1740
        %v1744 = vrot.slane %v1742, 1
        %v1745 = vrot.slane %v1742, 2
        %v1746 = vrot.slane %v1742, 3
        %v1747 = vrot.slane %v1742, 4
        %v1748 = vrot.slane %v1742, 5
        %v1749 = vrot.slane %v1742, 6
        %v1750 = vrot.slane %v1742, 7
        %v1759 = vadd.f32 %v1671, %v1742
        %v1760 = vadd.f32 %v1680, %v1744
        %v1761 = vadd.f32 %v1689, %v1745
        %v1762 = vadd.f32 %v1698, %v1746
        %v1763 = vadd.f32 %v1707, %v1747
        %v1764 = vadd.f32 %v1716, %v1748
        %v1765 = vadd.f32 %v1725, %v1749
        %v1766 = vadd.f32 %v1734, %v1750
        %v1767 = vxor.u32 %v1074, 2147483648
        %v1768 = vmul.f32 %v1767, 1.442695
        %v1769 = vpow.pop %v1768
        %v1770 = vadd.f32 %v1769, 1.0
        %v1771 = vrcp.pop %v1770
        %v1772 = vmul.f32 1.0, %v1771
        %v1773 = vmul.f32 %v1074, %v1772
        %v1775 = vrot.slane %v1773, 1
        %v1776 = vrot.slane %v1773, 2
        %v1777 = vrot.slane %v1773, 3
        %v1778 = vrot.slane %v1773, 4
        %v1779 = vrot.slane %v1773, 5
        %v1780 = vrot.slane %v1773, 6
        %v1781 = vrot.slane %v1773, 7
        %1782 = vrot.lane.b32.xlu0 %v1773, 96
        %v1783 = vpop.permute.xlu0 %1782
        %1784 = vrot.lane.b32.xlu0 %v1775, 96
        %v1785 = vpop.permute.xlu0 %1784
        %1786 = vrot.lane.b32.xlu0 %v1776, 96
        %v1787 = vpop.permute.xlu0 %1786
        %1788 = vrot.lane.b32.xlu0 %v1777, 96
        %v1789 = vpop.permute.xlu0 %1788
        %1790 = vrot.lane.b32.xlu0 %v1778, 96
        %v1791 = vpop.permute.xlu0 %1790
        %1792 = vrot.lane.b32.xlu0 %v1779, 96
        %v1793 = vpop.permute.xlu0 %1792
        %1794 = vrot.lane.b32.xlu0 %v1780, 96
        %v1795 = vpop.permute.xlu0 %1794
        %1796 = vrot.lane.b32.xlu0 %v1781, 96
        %v1797 = vpop.permute.xlu0 %1796
        %v1806 = vmul.f32 %v1759, %v1783
        %v1807 = vmul.f32 %v1760, %v1785
        %v1808 = vmul.f32 %v1761, %v1787
        %v1809 = vmul.f32 %v1762, %v1789
        %v1810 = vmul.f32 %v1763, %v1791
        %v1811 = vmul.f32 %v1764, %v1793
        %v1812 = vmul.f32 %v1765, %v1795
        %v1813 = vmul.f32 %v1766, %v1797
        %v1814 = vld [vmem:[%s11] sm:$0xff]
        %v1815 = vld [vmem:[%s11 + $0x8] sm:$0xff]
        %v1816 = vld [vmem:[%s11 + $0x10] sm:$0xff]
        %v1817 = vld [vmem:[%s11 + $0x18] sm:$0xff]
        %v1826 = vrot.slane %v1807, 7
        %vm1827 = vcmask 1041409
        %v1828 = vsel %vm1827, %v1826, %v1806
        %v1829 = vrot.slane %v1808, 6
        %vm1830 = vcmask 1042434
        %v1831 = vsel %vm1830, %v1829, %v1828
        %v1832 = vrot.slane %v1809, 5
        %vm1833 = vcmask 1043459
        %v1834 = vsel %vm1833, %v1832, %v1831
        %v1835 = vrot.slane %v1810, 4
        %vm1836 = vcmask 1044484
        %v1837 = vsel %vm1836, %v1835, %v1834
        %v1838 = vrot.slane %v1811, 3
        %vm1839 = vcmask 1045509
        %v1840 = vsel %vm1839, %v1838, %v1837
        %v1841 = vrot.slane %v1812, 2
        %vm1842 = vcmask 1046534
        %v1843 = vsel %vm1842, %v1841, %v1840
        %v1844 = vrot.slane %v1813, 1
        %vm1845 = vcmask 1047559
        %v1846 = vsel %vm1845, %v1844, %v1843
        %v1847 = vsel %vm975, %v1846, 0
        %1849 = vmatprep.subr.mxu0 0.0
        %1850 = vmatpush1.msra.mxu0 %v1814
        %1851 = vmatprep.subr.mxu0 0.0
        %1852 = vmatpush1.msra.mxu0 %v1815
        %1853 = vmatprep.subr.mxu0 0.0
        %1854 = vmatpush1.msra.mxu0 %v1816
        %1855 = vmatprep.subr.mxu0 0.0
        %1856 = vmatpush1.msra.mxu0 %v1817
        %1857 = vmatprep.subr.mxu0 0.0
        %1858 = vmatpush1.msra.mxu0 0.0
        %1859 = vmatprep.subr.mxu0 0.0
        %1860 = vmatpush1.msra.mxu0 0.0
        %1861 = vmatprep.subr.mxu0 0.0
        %1862 = vmatpush1.msra.mxu0 0.0
        %1863 = vmatprep.subr.mxu0 0.0
        %1864 = vmatpush1.msra.mxu0 0.0
        %1865 = vmatprep.subr.mxu0 0.0
        %1866 = vmatpush1.msra.mxu0 0.0
        %1867 = vmatprep.subr.mxu0 0.0
        %1868 = vmatpush1.msra.mxu0 0.0
        %1869 = vmatprep.subr.mxu0 0.0
        %1870 = vmatpush1.msra.mxu0 0.0
        %1871 = vmatprep.subr.mxu0 0.0
        %1872 = vmatpush1.msra.mxu0 0.0
        %1873 = vmatprep.subr.mxu0 0.0
        %1874 = vmatpush1.msra.mxu0 0.0
        %1875 = vmatprep.subr.mxu0 0.0
        %1876 = vmatpush1.msra.mxu0 0.0
        %1877 = vmatprep.subr.mxu0 0.0
        %1878 = vmatpush1.msra.mxu0 0.0
        %1879 = vmatprep.subr.mxu0 0.0
        %1880 = vmatpush1.msra.mxu0 0.0
        %1881 = vmatprep.subr.mxu0 0.0
        %1882 = vmatpush1.msra.mxu0 0.0
        %1883 = vmatprep.subr.mxu0 0.0
        %1884 = vmatpush1.msra.mxu0 0.0
        %1885 = vmatprep.subr.mxu0 0.0
        %1886 = vmatpush1.msra.mxu0 0.0
        %1887 = vmatprep.subr.mxu0 0.0
        %1888 = vmatpush1.msra.mxu0 0.0
        %1889 = vmatprep.subr.mxu0 0.0
        %1890 = vmatpush1.msra.mxu0 0.0
        %1891 = vmatprep.subr.mxu0 0.0
        %1892 = vmatpush1.msra.mxu0 0.0
        %1893 = vmatprep.subr.mxu0 0.0
        %1894 = vmatpush1.msra.mxu0 0.0
        %1895 = vmatprep.subr.mxu0 0.0
        %1896 = vmatpush1.msra.mxu0 0.0
        %1897 = vmatprep.subr.mxu0 0.0
        %1898 = vmatpush1.msra.mxu0 0.0
        %1899 = vmatprep.subr.mxu0 0.0
        %1900 = vmatpush1.msra.mxu0 0.0
        %1901 = vmatprep.subr.mxu0 0.0
        %1902 = vmatpush1.msra.mxu0 0.0
        %1903 = vmatprep.subr.mxu0 0.0
        %1904 = vmatpush1.msra.mxu0 0.0
        %1905 = vmatprep.subr.mxu0 0.0
        %1906 = vmatpush1.msra.mxu0 0.0
        %1907 = vmatprep.subr.mxu0 0.0
        %1908 = vmatpush1.msra.mxu0 0.0
        %1909 = vmatprep.subr.mxu0 0.0
        %1910 = vmatpush1.msra.mxu0 0.0
        %1911 = vmatprep.subr.mxu0 0.0
        %1912 = vmatpush1.msra.mxu0 0.0
        %1913 = vmatprep.mubr.f32.mxu0 0.0
        %1914 = vmatmul.mubr.f32.gmra.mrb[0].mxu0 %v1847
        %v1915 = vpop.f32.mrb[0].mxu0
        %v1916 = vadd.f32 0.0, %v1915
        %v1917 = vpop.f32.mrb[0].mxu0
        %1918 = vdwg.mxu0
        %v1919 = vsel %vm975, %v1916, 0.0
        %1920 = vadd.xlane.f32.xlu0 %v1919
        %v1921 = vpop.xlane.xlu0 %1920
        %v1922 = vmul.f32 %v1921, %v979
        %v1923 = vsub.f32 %v1916, %v1922
        %v1924 = vmul.f32 %v1923, %v1923
        %v1925 = vsel %vm975, %v1924, 0.0
        %1926 = vadd.xlane.f32.xlu0 %v1925
        %v1927 = vpop.xlane.xlu0 %1926
        %v1928 = vmul.f32 %v1927, %v979
        %v1929 = vadd.f32 %v1928, 1e-05
        %v1930 = vrsqrt.pop %v1929
        %v1931 = vmul.f32 %v1923, %v1930
        %v1932 = vlaneseq
        %v1933 = vshrl.u32 %v1932, 7
        %v1934 = vsub.s32 2, %v1933
        %v1935 = vrot.slane %v974, %v1934
        %v1936 = vmul.f32 %v1931, %v1935
        %v1937 = vlaneseq
        %v1938 = vshrl.u32 %v1937, 7
        %v1939 = vsub.s32 3, %v1938
        %v1940 = vrot.slane %v974, %v1939
        %v1941 = vadd.f32 %v1936, %v1940
        %v1942 = vadd.f32 %v971, %v1941
        %v1943 = vsel %vm975, %v1942, 0.0
        %1944 = vadd.xlane.f32.xlu0 %v1943
        %v1945 = vpop.xlane.xlu0 %1944
        %v1946 = vmul.f32 %v1945, %v979
        %v1947 = vsub.f32 %v1942, %v1946
        %v1948 = vmul.f32 %v1947, %v1947
        %v1949 = vsel %vm975, %v1948, 0.0
        %1950 = vadd.xlane.f32.xlu0 %v1949
        %v1951 = vpop.xlane.xlu0 %1950
        %v1952 = vmul.f32 %v1951, %v979
        %v1953 = vadd.f32 %v1952, 1e-05
        %v1954 = vrsqrt.pop %v1953
        %v1955 = vmul.f32 %v1947, %v1954
        %v1956 = vlaneseq
        %v1957 = vshrl.u32 %v1956, 7
        %v1958 = vsub.s32 4, %v1957
        %v1959 = vrot.slane %v974, %v1958
        %v1960 = vmul.f32 %v1955, %v1959
        %v1961 = vlaneseq
        %v1962 = vshrl.u32 %v1961, 7
        %v1963 = vsub.s32 5, %v1962
        %v1964 = vrot.slane %v974, %v1963
        %v1965 = vadd.f32 %v1960, %v1964
        %v1966 = vld [vmem:[#allocation12] sm:$0xff]
        %v1967 = vld [vmem:[#allocation12 + $0x8] sm:$0xff]
        %v1968 = vld [vmem:[#allocation12 + $0x10] sm:$0xff]
        %v1969 = vld [vmem:[#allocation12 + $0x18] sm:$0xff]
        %v1971 = vsel %vm975, %v1965, 0
        %1973 = vmatprep.subr.mxu0 0.0
        %1974 = vmatpush1.msra.mxu0 %v1966
        %1975 = vmatprep.subr.mxu0 0.0
        %1976 = vmatpush1.msra.mxu0 %v1967
        %1977 = vmatprep.subr.mxu0 0.0
        %1978 = vmatpush1.msra.mxu0 %v1968
        %1979 = vmatprep.subr.mxu0 0.0
        %1980 = vmatpush1.msra.mxu0 %v1969
        %1981 = vmatprep.subr.mxu0 0.0
        %1982 = vmatpush1.msra.mxu0 0.0
        %1983 = vmatprep.subr.mxu0 0.0
        %1984 = vmatpush1.msra.mxu0 0.0
        %1985 = vmatprep.subr.mxu0 0.0
        %1986 = vmatpush1.msra.mxu0 0.0
        %1987 = vmatprep.subr.mxu0 0.0
        %1988 = vmatpush1.msra.mxu0 0.0
        %1989 = vmatprep.subr.mxu0 0.0
        %1990 = vmatpush1.msra.mxu0 0.0
        %1991 = vmatprep.subr.mxu0 0.0
        %1992 = vmatpush1.msra.mxu0 0.0
        %1993 = vmatprep.subr.mxu0 0.0
        %1994 = vmatpush1.msra.mxu0 0.0
        %1995 = vmatprep.subr.mxu0 0.0
        %1996 = vmatpush1.msra.mxu0 0.0
        %1997 = vmatprep.subr.mxu0 0.0
        %1998 = vmatpush1.msra.mxu0 0.0
        %1999 = vmatprep.subr.mxu0 0.0
        %2000 = vmatpush1.msra.mxu0 0.0
        %2001 = vmatprep.subr.mxu0 0.0
        %2002 = vmatpush1.msra.mxu0 0.0
        %2003 = vmatprep.subr.mxu0 0.0
        %2004 = vmatpush1.msra.mxu0 0.0
        %2005 = vmatprep.subr.mxu0 0.0
        %2006 = vmatpush1.msra.mxu0 0.0
        %2007 = vmatprep.subr.mxu0 0.0
        %2008 = vmatpush1.msra.mxu0 0.0
        %2009 = vmatprep.subr.mxu0 0.0
        %2010 = vmatpush1.msra.mxu0 0.0
        %2011 = vmatprep.subr.mxu0 0.0
        %2012 = vmatpush1.msra.mxu0 0.0
        %2013 = vmatprep.subr.mxu0 0.0
        %2014 = vmatpush1.msra.mxu0 0.0
        %2015 = vmatprep.subr.mxu0 0.0
        %2016 = vmatpush1.msra.mxu0 0.0
        %2017 = vmatprep.subr.mxu0 0.0
        %2018 = vmatpush1.msra.mxu0 0.0
        %2019 = vmatprep.subr.mxu0 0.0
        %2020 = vmatpush1.msra.mxu0 0.0
        %2021 = vmatprep.subr.mxu0 0.0
        %2022 = vmatpush1.msra.mxu0 0.0
        %2023 = vmatprep.subr.mxu0 0.0
        %2024 = vmatpush1.msra.mxu0 0.0
        %2025 = vmatprep.subr.mxu0 0.0
        %2026 = vmatpush1.msra.mxu0 0.0
        %2027 = vmatprep.subr.mxu0 0.0
        %2028 = vmatpush1.msra.mxu0 0.0
        %2029 = vmatprep.subr.mxu0 0.0
        %2030 = vmatpush1.msra.mxu0 0.0
        %2031 = vmatprep.subr.mxu0 0.0
        %2032 = vmatpush1.msra.mxu0 0.0
        %2033 = vmatprep.subr.mxu0 0.0
        %2034 = vmatpush1.msra.mxu0 0.0
        %2035 = vmatprep.subr.mxu0 0.0
        %2036 = vmatpush1.msra.mxu0 0.0
        %2037 = vmatprep.mubr.f32.mxu0 0.0
        %2038 = vmatmul.mubr.f32.gmra.mrb[0].mxu0 %v1971
        %v2039 = vpop.f32.mrb[0].mxu0
        %v2040 = vadd.f32 0.0, %v2039
        %v2041 = vpop.f32.mrb[0].mxu0
        %2042 = vdwg.mxu0
        %vm2043 = vcmp.ge.f32.partialorder %v2040, 0.0
        %v2044 = vmul.f32 %v2040, 0.01
        %v2045 = vsel %vm2043, %v2040, %v2044
        %v2046 = vld [vmem:[%s13] sm:$0xff]
        %v2047 = vld [vmem:[%s13 + $0x8] sm:$0xff]
        %v2048 = vld [vmem:[%s13 + $0x10] sm:$0xff]
        %v2049 = vld [vmem:[%s13 + $0x18] sm:$0xff]
        %v2050 = vld [vmem:[%s13 + $0x20] sm:$0xff]
        %v2051 = vld [vmem:[%s13 + $0x28] sm:$0xff]
        %v2052 = vld [vmem:[%s13 + $0x30] sm:$0xff]
        %v2053 = vld [vmem:[%s13 + $0x38] sm:$0xff]
        %vm2054 = vcmask 523264
        %v2056 = vsel %vm2054, %v2045, 0
        %2058 = vmatprep.subr.mxu0 0.0
        %2059 = vmatpush1.msra.mxu0 %v2046
        %2060 = vmatprep.subr.mxu0 0.0
        %2061 = vmatpush1.msra.mxu0 %v2047
        %2062 = vmatprep.subr.mxu0 0.0
        %2063 = vmatpush1.msra.mxu0 %v2048
        %2064 = vmatprep.subr.mxu0 0.0
        %2065 = vmatpush1.msra.mxu0 %v2049
        %2066 = vmatprep.subr.mxu0 0.0
        %2067 = vmatpush1.msra.mxu0 %v2050
        %2068 = vmatprep.subr.mxu0 0.0
        %2069 = vmatpush1.msra.mxu0 %v2051
        %2070 = vmatprep.subr.mxu0 0.0
        %2071 = vmatpush1.msra.mxu0 %v2052
        %2072 = vmatprep.subr.mxu0 0.0
        %2073 = vmatpush1.msra.mxu0 %v2053
        %2074 = vmatprep.subr.mxu0 0.0
        %2075 = vmatpush1.msra.mxu0 0.0
        %2076 = vmatprep.subr.mxu0 0.0
        %2077 = vmatpush1.msra.mxu0 0.0
        %2078 = vmatprep.subr.mxu0 0.0
        %2079 = vmatpush1.msra.mxu0 0.0
        %2080 = vmatprep.subr.mxu0 0.0
        %2081 = vmatpush1.msra.mxu0 0.0
        %2082 = vmatprep.subr.mxu0 0.0
        %2083 = vmatpush1.msra.mxu0 0.0
        %2084 = vmatprep.subr.mxu0 0.0
        %2085 = vmatpush1.msra.mxu0 0.0
        %2086 = vmatprep.subr.mxu0 0.0
        %2087 = vmatpush1.msra.mxu0 0.0
        %2088 = vmatprep.subr.mxu0 0.0
        %2089 = vmatpush1.msra.mxu0 0.0
        %2090 = vmatprep.subr.mxu0 0.0
        %2091 = vmatpush1.msra.mxu0 0.0
        %2092 = vmatprep.subr.mxu0 0.0
        %2093 = vmatpush1.msra.mxu0 0.0
        %2094 = vmatprep.subr.mxu0 0.0
        %2095 = vmatpush1.msra.mxu0 0.0
        %2096 = vmatprep.subr.mxu0 0.0
        %2097 = vmatpush1.msra.mxu0 0.0
        %2098 = vmatprep.subr.mxu0 0.0
        %2099 = vmatpush1.msra.mxu0 0.0
        %2100 = vmatprep.subr.mxu0 0.0
        %2101 = vmatpush1.msra.mxu0 0.0
        %2102 = vmatprep.subr.mxu0 0.0
        %2103 = vmatpush1.msra.mxu0 0.0
        %2104 = vmatprep.subr.mxu0 0.0
        %2105 = vmatpush1.msra.mxu0 0.0
        %2106 = vmatprep.subr.mxu0 0.0
        %2107 = vmatpush1.msra.mxu0 0.0
        %2108 = vmatprep.subr.mxu0 0.0
        %2109 = vmatpush1.msra.mxu0 0.0
        %2110 = vmatprep.subr.mxu0 0.0
        %2111 = vmatpush1.msra.mxu0 0.0
        %2112 = vmatprep.subr.mxu0 0.0
        %2113 = vmatpush1.msra.mxu0 0.0
        %2114 = vmatprep.subr.mxu0 0.0
        %2115 = vmatpush1.msra.mxu0 0.0
        %2116 = vmatprep.subr.mxu0 0.0
        %2117 = vmatpush1.msra.mxu0 0.0
        %2118 = vmatprep.subr.mxu0 0.0
        %2119 = vmatpush1.msra.mxu0 0.0
        %2120 = vmatprep.subr.mxu0 0.0
        %2121 = vmatpush1.msra.mxu0 0.0
        %2122 = vmatprep.mubr.f32.mxu0 0.0
        %2123 = vmatmul.mubr.f32.gmra.mrb[0].mxu0 %v2056
        %v2124 = vpop.f32.mrb[0].mxu0
        %v2125 = vadd.f32 0.0, %v2124
        %v2126 = vpop.f32.mrb[0].mxu0
        %2127 = vdwg.mxu0
        %v2128 = vadd.f32 %v1942, %v2125
        %v2129 = vsel %vm975, %v2128, 0.0
        %2130 = vadd.xlane.f32.xlu0 %v2129
        %v2131 = vpop.xlane.xlu0 %2130
        %v2132 = vmul.f32 %v2131, %v979
        %v2133 = vsub.f32 %v2128, %v2132
        %v2134 = vmul.f32 %v2133, %v2133
        %v2135 = vsel %vm975, %v2134, 0.0
        %2136 = vadd.xlane.f32.xlu0 %v2135
        %v2137 = vpop.xlane.xlu0 %2136
        %v2138 = vmul.f32 %v2137, %v979
        %v2139 = vadd.f32 %v2138, 1e-05
        %v2140 = vrsqrt.pop %v2139
        %v2141 = vmul.f32 %v2133, %v2140
        %v2142 = vlaneseq
        %v2143 = vshrl.u32 %v2142, 7
        %v2144 = vsub.s32 6, %v2143
        %v2145 = vrot.slane %v974, %v2144
        %v2146 = vmul.f32 %v2141, %v2145
        %v2147 = vlaneseq
        %v2148 = vshrl.u32 %v2147, 7
        %v2149 = vsub.s32 7, %v2148
        %v2150 = vrot.slane %v974, %v2149
        %v2151 = vadd.f32 %v2146, %v2150
        %v2152 = vld [vmem:[#allocation13] sm:$0xff]
        %v2153 = vld [vmem:[#allocation13 + $0x8] sm:$0xff]
        %v2154 = vld [vmem:[#allocation13 + $0x10] sm:$0xff]
        %v2155 = vld [vmem:[#allocation13 + $0x18] sm:$0xff]
        %v2156 = vld [vmem:[#allocation15] sm:$0x1]
        %v2158 = vlaneseq
        %v2159 = vshrl.u32 %v2158, 7
        %v2160 = vsub.s32 0, %v2159
        %v2161 = vrot.slane %v2156, %v2160
        %v2164 = vsel %vm975, %v2151, 0
        %2166 = vmatprep.subr.mxu0 0.0
        %2167 = vmatpush1.msra.mxu0 %v2152
        %2168 = vmatprep.subr.mxu0 0.0
        %2169 = vmatpush1.msra.mxu0 %v2153
        %2170 = vmatprep.subr.mxu0 0.0
        %2171 = vmatpush1.msra.mxu0 %v2154
        %2172 = vmatprep.subr.mxu0 0.0
        %2173 = vmatpush1.msra.mxu0 %v2155
        %2174 = vmatprep.subr.mxu0 0.0
        %2175 = vmatpush1.msra.mxu0 0.0
        %2176 = vmatprep.subr.mxu0 0.0
        %2177 = vmatpush1.msra.mxu0 0.0
        %2178 = vmatprep.subr.mxu0 0.0
        %2179 = vmatpush1.msra.mxu0 0.0
        %2180 = vmatprep.subr.mxu0 0.0
        %2181 = vmatpush1.msra.mxu0 0.0
        %2182 = vmatprep.subr.mxu0 0.0
        %2183 = vmatpush1.msra.mxu0 0.0
        %2184 = vmatprep.subr.mxu0 0.0
        %2185 = vmatpush1.msra.mxu0 0.0
        %2186 = vmatprep.subr.mxu0 0.0
        %2187 = vmatpush1.msra.mxu0 0.0
        %2188 = vmatprep.subr.mxu0 0.0
        %2189 = vmatpush1.msra.mxu0 0.0
        %2190 = vmatprep.subr.mxu0 0.0
        %2191 = vmatpush1.msra.mxu0 0.0
        %2192 = vmatprep.subr.mxu0 0.0
        %2193 = vmatpush1.msra.mxu0 0.0
        %2194 = vmatprep.subr.mxu0 0.0
        %2195 = vmatpush1.msra.mxu0 0.0
        %2196 = vmatprep.subr.mxu0 0.0
        %2197 = vmatpush1.msra.mxu0 0.0
        %2198 = vmatprep.subr.mxu0 0.0
        %2199 = vmatpush1.msra.mxu0 0.0
        %2200 = vmatprep.subr.mxu0 0.0
        %2201 = vmatpush1.msra.mxu0 0.0
        %2202 = vmatprep.subr.mxu0 0.0
        %2203 = vmatpush1.msra.mxu0 0.0
        %2204 = vmatprep.subr.mxu0 0.0
        %2205 = vmatpush1.msra.mxu0 0.0
        %2206 = vmatprep.subr.mxu0 0.0
        %2207 = vmatpush1.msra.mxu0 0.0
        %2208 = vmatprep.subr.mxu0 0.0
        %2209 = vmatpush1.msra.mxu0 0.0
        %2210 = vmatprep.subr.mxu0 0.0
        %2211 = vmatpush1.msra.mxu0 0.0
        %2212 = vmatprep.subr.mxu0 0.0
        %2213 = vmatpush1.msra.mxu0 0.0
        %2214 = vmatprep.subr.mxu0 0.0
        %2215 = vmatpush1.msra.mxu0 0.0
        %2216 = vmatprep.subr.mxu0 0.0
        %2217 = vmatpush1.msra.mxu0 0.0
        %2218 = vmatprep.subr.mxu0 0.0
        %2219 = vmatpush1.msra.mxu0 0.0
        %2220 = vmatprep.subr.mxu0 0.0
        %2221 = vmatpush1.msra.mxu0 0.0
        %2222 = vmatprep.subr.mxu0 0.0
        %2223 = vmatpush1.msra.mxu0 0.0
        %2224 = vmatprep.subr.mxu0 0.0
        %2225 = vmatpush1.msra.mxu0 0.0
        %2226 = vmatprep.subr.mxu0 0.0
        %2227 = vmatpush1.msra.mxu0 0.0
        %2228 = vmatprep.subr.mxu0 0.0
        %2229 = vmatpush1.msra.mxu0 0.0
        %2230 = vmatprep.mubr.f32.mxu0 0.0
        %2231 = vmatmul.mubr.f32.gmra.mrb[0].mxu0 %v2164
        %v2232 = vpop.f32.mrb[0].mxu0
        %v2233 = vadd.f32 %v2161, %v2232
        %v2234 = vpop.f32.mrb[0].mxu0
        %2235 = vdwg.mxu0
        %v2236 = vadd.f32 %v2128, %v2233
        %s2237 = scalar_lea.vmem %s3, 8
        %v2238 = vld [vmem:[%s2237] sm:$0xff]
        %v2239 = vsel %vm975, %v2236, 0.0
        %2240 = vadd.xlane.f32.xlu0 %v2239
        %v2241 = vpop.xlane.xlu0 %2240
        %v2242 = vmul.f32 %v2241, %v979
        %v2243 = vsub.f32 %v2236, %v2242
        %v2244 = vmul.f32 %v2243, %v2243
        %v2245 = vsel %vm975, %v2244, 0.0
        %2246 = vadd.xlane.f32.xlu0 %v2245
        %v2247 = vpop.xlane.xlu0 %2246
        %v2248 = vmul.f32 %v2247, %v979
        %v2249 = vadd.f32 %v2248, 1e-05
        %v2250 = vrsqrt.pop %v2249
        %v2251 = vmul.f32 %v2243, %v2250
        %v2252 = vlaneseq
        %v2253 = vshrl.u32 %v2252, 7
        %v2254 = vsub.s32 0, %v2253
        %v2255 = vrot.slane %v2238, %v2254
        %v2256 = vmul.f32 %v2251, %v2255
        %v2257 = vlaneseq
        %v2258 = vshrl.u32 %v2257, 7
        %v2259 = vsub.s32 1, %v2258
        %v2260 = vrot.slane %v2238, %v2259
        %v2261 = vadd.f32 %v2256, %v2260
        %s2262 = scalar_lea.vmem %s4, 32
        %v2263 = vld [vmem:[%s2262] sm:$0xff]
        %v2264 = vld [vmem:[%s2262 + $0x8] sm:$0xff]
        %v2265 = vld [vmem:[%s2262 + $0x10] sm:$0xff]
        %v2266 = vld [vmem:[%s2262 + $0x18] sm:$0xff]
        %v2268 = vsel %vm975, %v2261, 0
        %2270 = vmatprep.subr.mxu0 0.0
        %2271 = vmatpush1.msra.mxu0 %v2263
        %2272 = vmatprep.subr.mxu0 0.0
        %2273 = vmatpush1.msra.mxu0 %v2264
        %2274 = vmatprep.subr.mxu0 0.0
        %2275 = vmatpush1.msra.mxu0 %v2265
        %2276 = vmatprep.subr.mxu0 0.0
        %2277 = vmatpush1.msra.mxu0 %v2266
        %2278 = vmatprep.subr.mxu0 0.0
        %2279 = vmatpush1.msra.mxu0 0.0
        %2280 = vmatprep.subr.mxu0 0.0
        %2281 = vmatpush1.msra.mxu0 0.0
        %2282 = vmatprep.subr.mxu0 0.0
        %2283 = vmatpush1.msra.mxu0 0.0
        %2284 = vmatprep.subr.mxu0 0.0
        %2285 = vmatpush1.msra.mxu0 0.0
        %2286 = vmatprep.subr.mxu0 0.0
        %2287 = vmatpush1.msra.mxu0 0.0
        %2288 = vmatprep.subr.mxu0 0.0
        %2289 = vmatpush1.msra.mxu0 0.0
        %2290 = vmatprep.subr.mxu0 0.0
        %2291 = vmatpush1.msra.mxu0 0.0
        %2292 = vmatprep.subr.mxu0 0.0
        %2293 = vmatpush1.msra.mxu0 0.0
        %2294 = vmatprep.subr.mxu0 0.0
        %2295 = vmatpush1.msra.mxu0 0.0
        %2296 = vmatprep.subr.mxu0 0.0
        %2297 = vmatpush1.msra.mxu0 0.0
        %2298 = vmatprep.subr.mxu0 0.0
        %2299 = vmatpush1.msra.mxu0 0.0
        %2300 = vmatprep.subr.mxu0 0.0
        %2301 = vmatpush1.msra.mxu0 0.0
        %2302 = vmatprep.subr.mxu0 0.0
        %2303 = vmatpush1.msra.mxu0 0.0
        %2304 = vmatprep.subr.mxu0 0.0
        %2305 = vmatpush1.msra.mxu0 0.0
        %2306 = vmatprep.subr.mxu0 0.0
        %2307 = vmatpush1.msra.mxu0 0.0
        %2308 = vmatprep.subr.mxu0 0.0
        %2309 = vmatpush1.msra.mxu0 0.0
        %2310 = vmatprep.subr.mxu0 0.0
        %2311 = vmatpush1.msra.mxu0 0.0
        %2312 = vmatprep.subr.mxu0 0.0
        %2313 = vmatpush1.msra.mxu0 0.0
        %2314 = vmatprep.subr.mxu0 0.0
        %2315 = vmatpush1.msra.mxu0 0.0
        %2316 = vmatprep.subr.mxu0 0.0
        %2317 = vmatpush1.msra.mxu0 0.0
        %2318 = vmatprep.subr.mxu0 0.0
        %2319 = vmatpush1.msra.mxu0 0.0
        %2320 = vmatprep.subr.mxu0 0.0
        %2321 = vmatpush1.msra.mxu0 0.0
        %2322 = vmatprep.subr.mxu0 0.0
        %2323 = vmatpush1.msra.mxu0 0.0
        %2324 = vmatprep.subr.mxu0 0.0
        %2325 = vmatpush1.msra.mxu0 0.0
        %2326 = vmatprep.subr.mxu0 0.0
        %2327 = vmatpush1.msra.mxu0 0.0
        %2328 = vmatprep.subr.mxu0 0.0
        %2329 = vmatpush1.msra.mxu0 0.0
        %2330 = vmatprep.subr.mxu0 0.0
        %2331 = vmatpush1.msra.mxu0 0.0
        %2332 = vmatprep.subr.mxu0 0.0
        %2333 = vmatpush1.msra.mxu0 0.0
        %2334 = vmatprep.mubr.f32.mxu0 0.0
        %2335 = vmatmul.mubr.f32.gmra.mrb[0].mxu0 %v2268
        %v2336 = vpop.f32.mrb[0].mxu0
        %v2337 = vadd.f32 0.0, %v2336
        %v2338 = vpop.f32.mrb[0].mxu0
        %2339 = vdwg.mxu0
        %s2340 = scalar_lea.vmem [#allocation6], 2
        %v2341 = vld [vmem:[%s2340] sm:$0x3]
        %v2343 = vrot.slane %v2337, 7
        %v2345 = vsel %vm1081, 0.0, %v2343
        %v2346 = vlaneseq
        %v2347 = vshrl.u32 %v2346, 7
        %v2348 = vsub.s32 1, %v2347
        %v2349 = vrot.slane %v2341, %v2348
        %v2350 = vmul.f32 %v2337, %v2349
        %v2351 = vlaneseq
        %v2352 = vshrl.u32 %v2351, 7
        %v2353 = vsub.s32 0, %v2352
        %v2354 = vrot.slane %v2341, %v2353
        %v2355 = vmul.f32 %v2345, %v2354
        %v2356 = vadd.f32 %v2350, %v2355
        %s2357 = scalar_lea.vmem [#allocation7], 1
        %v2358 = vld [vmem:[%s2357] sm:$0x1]
        %v2360 = vlaneseq
        %v2361 = vshrl.u32 %v2360, 7
        %v2362 = vsub.s32 0, %v2361
        %v2363 = vrot.slane %v2358, %v2362
        %v2365 = vadd.f32 %v2356, %v2363
        %v2366 = vxor.u32 %v2365, 2147483648
        %v2367 = vmul.f32 %v2366, 1.442695
        %v2368 = vpow.pop %v2367
        %v2369 = vadd.f32 %v2368, 1.0
        %v2370 = vrcp.pop %v2369
        %v2371 = vmul.f32 1.0, %v2370
        %v2372 = vmul.f32 %v2365, %v2371
        %s2373 = scalar_lea.vmem %s7, 32
        %v2374 = vld [vmem:[%s2373] sm:$0xff]
        %v2375 = vld [vmem:[%s2373 + $0x8] sm:$0xff]
        %v2376 = vld [vmem:[%s2373 + $0x10] sm:$0xff]
        %v2377 = vld [vmem:[%s2373 + $0x18] sm:$0xff]
        %v2379 = vsel %vm975, %v2372, 0
        %2381 = vmatprep.subr.mxu0 0.0
        %2382 = vmatpush1.msra.mxu0 %v2374
        %2383 = vmatprep.subr.mxu0 0.0
        %2384 = vmatpush1.msra.mxu0 %v2375
        %2385 = vmatprep.subr.mxu0 0.0
        %2386 = vmatpush1.msra.mxu0 %v2376
        %2387 = vmatprep.subr.mxu0 0.0
        %2388 = vmatpush1.msra.mxu0 %v2377
        %2389 = vmatprep.subr.mxu0 0.0
        %2390 = vmatpush1.msra.mxu0 0.0
        %2391 = vmatprep.subr.mxu0 0.0
        %2392 = vmatpush1.msra.mxu0 0.0
        %2393 = vmatprep.subr.mxu0 0.0
        %2394 = vmatpush1.msra.mxu0 0.0
        %2395 = vmatprep.subr.mxu0 0.0
        %2396 = vmatpush1.msra.mxu0 0.0
        %2397 = vmatprep.subr.mxu0 0.0
        %2398 = vmatpush1.msra.mxu0 0.0
        %2399 = vmatprep.subr.mxu0 0.0
        %2400 = vmatpush1.msra.mxu0 0.0
        %2401 = vmatprep.subr.mxu0 0.0
        %2402 = vmatpush1.msra.mxu0 0.0
        %2403 = vmatprep.subr.mxu0 0.0
        %2404 = vmatpush1.msra.mxu0 0.0
        %2405 = vmatprep.subr.mxu0 0.0
        %2406 = vmatpush1.msra.mxu0 0.0
        %2407 = vmatprep.subr.mxu0 0.0
        %2408 = vmatpush1.msra.mxu0 0.0
        %2409 = vmatprep.subr.mxu0 0.0
        %2410 = vmatpush1.msra.mxu0 0.0
        %2411 = vmatprep.subr.mxu0 0.0
        %2412 = vmatpush1.msra.mxu0 0.0
        %2413 = vmatprep.subr.mxu0 0.0
        %2414 = vmatpush1.msra.mxu0 0.0
        %2415 = vmatprep.subr.mxu0 0.0
        %2416 = vmatpush1.msra.mxu0 0.0
        %2417 = vmatprep.subr.mxu0 0.0
        %2418 = vmatpush1.msra.mxu0 0.0
        %2419 = vmatprep.subr.mxu0 0.0
        %2420 = vmatpush1.msra.mxu0 0.0
        %2421 = vmatprep.subr.mxu0 0.0
        %2422 = vmatpush1.msra.mxu0 0.0
        %2423 = vmatprep.subr.mxu0 0.0
        %2424 = vmatpush1.msra.mxu0 0.0
        %2425 = vmatprep.subr.mxu0 0.0
        %2426 = vmatpush1.msra.mxu0 0.0
        %2427 = vmatprep.subr.mxu0 0.0
        %2428 = vmatpush1.msra.mxu0 0.0
        %2429 = vmatprep.subr.mxu0 0.0
        %2430 = vmatpush1.msra.mxu0 0.0
        %2431 = vmatprep.subr.mxu0 0.0
        %2432 = vmatpush1.msra.mxu0 0.0
        %2433 = vmatprep.subr.mxu0 0.0
        %2434 = vmatpush1.msra.mxu0 0.0
        %2435 = vmatprep.subr.mxu0 0.0
        %2436 = vmatpush1.msra.mxu0 0.0
        %2437 = vmatprep.subr.mxu0 0.0
        %2438 = vmatpush1.msra.mxu0 0.0
        %2439 = vmatprep.subr.mxu0 0.0
        %2440 = vmatpush1.msra.mxu0 0.0
        %2441 = vmatprep.subr.mxu0 0.0
        %2442 = vmatpush1.msra.mxu0 0.0
        %2443 = vmatprep.subr.mxu0 0.0
        %2444 = vmatpush1.msra.mxu0 0.0
        %2445 = vmatprep.mubr.f32.mxu0 0.0
        %2446 = vmatmul.mubr.f32.gmra.mrb[0].mxu0 %v2379
        %v2447 = vpop.f32.mrb[0].mxu0
        %v2448 = vadd.f32 0.0, %v2447
        %v2449 = vpop.f32.mrb[0].mxu0
        %2450 = vdwg.mxu0
        %s2451 = scalar_lea.vmem [#allocation9], 1
        %v2452 = vld [vmem:[%s2451] sm:$0x1]
        %v2454 = vlaneseq
        %v2455 = vshrl.u32 %v2454, 7
        %v2456 = vsub.s32 0, %v2455
        %v2457 = vrot.slane %v2452, %v2456
        %v2459 = vadd.f32 %v2448, %v2457
        %vm2460 = vcmp.gt.f32.partialorder %v2459, 20.0
        %v2461 = vmin.f32 %v2459, 20.0
        %v2462 = vmul.f32 %v2461, 1.442695
        %v2463 = vpow.pop %v2462
        %v2464 = vadd.f32 %v2463, 1.0
        %v2465 = vlog2.pop %v2464
        %v2466 = vmul.f32 %v2465, 0.6931472
        %v2467 = vmul.f32 -0.5, %v2463
        %v2468 = vadd.f32 %v2467, 1.0
        %v2469 = vmul.f32 %v2468, %v2463
        %v2470 = vand.u32 2147483647, %v2463
        %vm2471 = vcmp.lt.f32.partialorder %v2470, 0.0004427343
        %v2472 = vsel %vm2471, %v2469, %v2466
        %v2473 = vsel %vm2460, %v2459, %v2472
        %s2474 = scalar_lea.vmem %s9, 16
        %v2475 = vld [vmem:[%s2474] sm:$0xff]
        %v2476 = vld [vmem:[%s2474 + $0x8] sm:$0xff]
        %v2477 = vmul.f32 %v2473, %v2372
        %v2479 = vcombine.high %v2473, %v2473
        %v2481 = vunpack.c.l.s4 1966171168
        %v2482 = vunpack.c.0.s8 %v2481
        %v2483 = vlaneseq
        %v2484 = vshrl.u32 %v2483, 7
        %v2485 = vsub.s32 %v2482, %v2484
        %v2486 = vrot.slane %v2473, %v2485
        %v2488 = vunpack.c.l.s4 1966171168
        %v2489 = vunpack.c.0.s8 %v2488
        %v2490 = vlaneseq
        %v2491 = vshrl.u32 %v2490, 7
        %v2492 = vsub.s32 %v2489, %v2491
        %v2493 = vrot.slane %v2479, %v2492
        %v2494 = vcombine.high %v2486, %v2486
        %v2495 = vcombine.high %v2493, %v2493
        %v2497 = vunpack.c.l.s4 1966171168
        %v2498 = vunpack.c.0.s8 %v2497
        %v2499 = vlaneseq
        %v2500 = vshrl.u32 %v2499, 7
        %v2501 = vsub.s32 %v2498, %v2500
        %v2502 = vrot.slane %v2486, %v2501
        %v2504 = vunpack.c.l.s4 1966171168
        %v2505 = vunpack.c.0.s8 %v2504
        %v2506 = vlaneseq
        %v2507 = vshrl.u32 %v2506, 7
        %v2508 = vsub.s32 %v2505, %v2507
        %v2509 = vrot.slane %v2493, %v2508
        %v2511 = vunpack.c.l.s4 1966171168
        %v2512 = vunpack.c.0.s8 %v2511
        %v2513 = vlaneseq
        %v2514 = vshrl.u32 %v2513, 7
        %v2515 = vsub.s32 %v2512, %v2514
        %v2516 = vrot.slane %v2494, %v2515
        %v2518 = vunpack.c.l.s4 1966171168
        %v2519 = vunpack.c.0.s8 %v2518
        %v2520 = vlaneseq
        %v2521 = vshrl.u32 %v2520, 7
        %v2522 = vsub.s32 %v2519, %v2521
        %v2523 = vrot.slane %v2495, %v2522
        %v2524 = vcombine.high %v2502, %v2502
        %v2525 = vcombine.high %v2509, %v2509
        %v2526 = vcombine.high %v2516, %v2516
        %v2527 = vcombine.high %v2523, %v2523
        %v2528 = vlaneseq
        %v2529 = vshrl.u32 %v2528, 7
        %v2530 = vsub.s32 0, %v2529
        %v2531 = vrot.slane %v2502, %v2530
        %v2532 = vlaneseq
        %v2533 = vshrl.u32 %v2532, 7
        %v2534 = vsub.s32 0, %v2533
        %v2535 = vrot.slane %v2516, %v2534
        %v2536 = vlaneseq
        %v2537 = vshrl.u32 %v2536, 7
        %v2538 = vsub.s32 0, %v2537
        %v2539 = vrot.slane %v2524, %v2538
        %v2540 = vlaneseq
        %v2541 = vshrl.u32 %v2540, 7
        %v2542 = vsub.s32 0, %v2541
        %v2543 = vrot.slane %v2526, %v2542
        %v2544 = vlaneseq
        %v2545 = vshrl.u32 %v2544, 7
        %v2546 = vsub.s32 0, %v2545
        %v2547 = vrot.slane %v2509, %v2546
        %v2548 = vlaneseq
        %v2549 = vshrl.u32 %v2548, 7
        %v2550 = vsub.s32 0, %v2549
        %v2551 = vrot.slane %v2523, %v2550
        %v2552 = vlaneseq
        %v2553 = vshrl.u32 %v2552, 7
        %v2554 = vsub.s32 0, %v2553
        %v2555 = vrot.slane %v2525, %v2554
        %v2556 = vlaneseq
        %v2557 = vshrl.u32 %v2556, 7
        %v2558 = vsub.s32 0, %v2557
        %v2559 = vrot.slane %v2527, %v2558
        %v2568 = vmul.f32 %v2531, %v2475
        %v2569 = vmul.f32 %v2531, %v2476
        %v2570 = vmul.f32 %v2535, %v2475
        %v2571 = vmul.f32 %v2535, %v2476
        %v2572 = vmul.f32 %v2539, %v2475
        %v2573 = vmul.f32 %v2539, %v2476
        %v2574 = vmul.f32 %v2543, %v2475
        %v2575 = vmul.f32 %v2543, %v2476
        %v2576 = vmul.f32 %v2547, %v2475
        %v2577 = vmul.f32 %v2547, %v2476
        %v2578 = vmul.f32 %v2551, %v2475
        %v2579 = vmul.f32 %v2551, %v2476
        %v2580 = vmul.f32 %v2555, %v2475
        %v2581 = vmul.f32 %v2555, %v2476
        %v2582 = vmul.f32 %v2559, %v2475
        %v2583 = vmul.f32 %v2559, %v2476
        %v2584 = vmul.f32 %v2568, 1.442695
        %v2585 = vpow.pop %v2584
        %v2586 = vmul.f32 %v2569, 1.442695
        %v2587 = vpow.pop %v2586
        %v2588 = vmul.f32 %v2570, 1.442695
        %v2589 = vpow.pop %v2588
        %v2590 = vmul.f32 %v2571, 1.442695
        %v2591 = vpow.pop %v2590
        %v2592 = vmul.f32 %v2572, 1.442695
        %v2593 = vpow.pop %v2592
        %v2594 = vmul.f32 %v2573, 1.442695
        %v2595 = vpow.pop %v2594
        %v2596 = vmul.f32 %v2574, 1.442695
        %v2597 = vpow.pop %v2596
        %v2598 = vmul.f32 %v2575, 1.442695
        %v2599 = vpow.pop %v2598
        %v2600 = vmul.f32 %v2576, 1.442695
        %v2601 = vpow.pop %v2600
        %v2602 = vmul.f32 %v2577, 1.442695
        %v2603 = vpow.pop %v2602
        %v2604 = vmul.f32 %v2578, 1.442695
        %v2605 = vpow.pop %v2604
        %v2606 = vmul.f32 %v2579, 1.442695
        %v2607 = vpow.pop %v2606
        %v2608 = vmul.f32 %v2580, 1.442695
        %v2609 = vpow.pop %v2608
        %v2610 = vmul.f32 %v2581, 1.442695
        %v2611 = vpow.pop %v2610
        %v2612 = vmul.f32 %v2582, 1.442695
        %v2613 = vpow.pop %v2612
        %v2614 = vmul.f32 %v2583, 1.442695
        %v2615 = vpow.pop %v2614
        %v2616 = vlaneseq
        %v2617 = vshrl.u32 %v2616, 7
        %v2618 = vsub.s32 0, %v2617
        %v2619 = vrot.slane %v2448, %v2618
        %s2621 = sor.u32 256, 32
        %2622 = vbcast.lane.b32.xlu0 %v2619, %s2621
        %v2623 = vpop.permute.xlu0 %2622
        %s2625 = sor.u32 256, 40
        %2626 = vbcast.lane.b32.xlu0 %v2619, %s2625
        %v2627 = vpop.permute.xlu0 %2626
        %v2628 = vlaneseq
        %v2629 = vshrl.u32 %v2628, 7
        %v2630 = vsub.s32 1, %v2629
        %v2631 = vrot.slane %v2448, %v2630
        %s2633 = sor.u32 256, 32
        %2634 = vbcast.lane.b32.xlu0 %v2631, %s2633
        %v2635 = vpop.permute.xlu0 %2634
        %s2637 = sor.u32 256, 40
        %2638 = vbcast.lane.b32.xlu0 %v2631, %s2637
        %v2639 = vpop.permute.xlu0 %2638
        %v2640 = vlaneseq
        %v2641 = vshrl.u32 %v2640, 7
        %v2642 = vsub.s32 2, %v2641
        %v2643 = vrot.slane %v2448, %v2642
        %s2645 = sor.u32 256, 32
        %2646 = vbcast.lane.b32.xlu0 %v2643, %s2645
        %v2647 = vpop.permute.xlu0 %2646
        %s2649 = sor.u32 256, 40
        %2650 = vbcast.lane.b32.xlu0 %v2643, %s2649
        %v2651 = vpop.permute.xlu0 %2650
        %v2652 = vlaneseq
        %v2653 = vshrl.u32 %v2652, 7
        %v2654 = vsub.s32 3, %v2653
        %v2655 = vrot.slane %v2448, %v2654
        %s2657 = sor.u32 256, 32
        %2658 = vbcast.lane.b32.xlu0 %v2655, %s2657
        %v2659 = vpop.permute.xlu0 %2658
        %s2661 = sor.u32 256, 40
        %2662 = vbcast.lane.b32.xlu0 %v2655, %s2661
        %v2663 = vpop.permute.xlu0 %2662
        %v2664 = vlaneseq
        %v2665 = vshrl.u32 %v2664, 7
        %v2666 = vsub.s32 4, %v2665
        %v2667 = vrot.slane %v2448, %v2666
        %s2669 = sor.u32 256, 32
        %2670 = vbcast.lane.b32.xlu0 %v2667, %s2669
        %v2671 = vpop.permute.xlu0 %2670
        %s2673 = sor.u32 256, 40
        %2674 = vbcast.lane.b32.xlu0 %v2667, %s2673
        %v2675 = vpop.permute.xlu0 %2674
        %v2676 = vlaneseq
        %v2677 = vshrl.u32 %v2676, 7
        %v2678 = vsub.s32 5, %v2677
        %v2679 = vrot.slane %v2448, %v2678
        %s2681 = sor.u32 256, 32
        %2682 = vbcast.lane.b32.xlu0 %v2679, %s2681
        %v2683 = vpop.permute.xlu0 %2682
        %s2685 = sor.u32 256, 40
        %2686 = vbcast.lane.b32.xlu0 %v2679, %s2685
        %v2687 = vpop.permute.xlu0 %2686
        %v2688 = vlaneseq
        %v2689 = vshrl.u32 %v2688, 7
        %v2690 = vsub.s32 6, %v2689
        %v2691 = vrot.slane %v2448, %v2690
        %s2693 = sor.u32 256, 32
        %2694 = vbcast.lane.b32.xlu0 %v2691, %s2693
        %v2695 = vpop.permute.xlu0 %2694
        %s2697 = sor.u32 256, 40
        %2698 = vbcast.lane.b32.xlu0 %v2691, %s2697
        %v2699 = vpop.permute.xlu0 %2698
        %v2700 = vlaneseq
        %v2701 = vshrl.u32 %v2700, 7
        %v2702 = vsub.s32 7, %v2701
        %v2703 = vrot.slane %v2448, %v2702
        %s2705 = sor.u32 256, 32
        %2706 = vbcast.lane.b32.xlu0 %v2703, %s2705
        %v2707 = vpop.permute.xlu0 %2706
        %s2709 = sor.u32 256, 40
        %2710 = vbcast.lane.b32.xlu0 %v2703, %s2709
        %v2711 = vpop.permute.xlu0 %2710
        %v2713 = vcombine.high %v2477, %v2477
        %v2715 = vunpack.c.l.s4 1966171168
        %v2716 = vunpack.c.0.s8 %v2715
        %v2717 = vlaneseq
        %v2718 = vshrl.u32 %v2717, 7
        %v2719 = vsub.s32 %v2716, %v2718
        %v2720 = vrot.slane %v2477, %v2719
        %v2722 = vunpack.c.l.s4 1966171168
        %v2723 = vunpack.c.0.s8 %v2722
        %v2724 = vlaneseq
        %v2725 = vshrl.u32 %v2724, 7
        %v2726 = vsub.s32 %v2723, %v2725
        %v2727 = vrot.slane %v2713, %v2726
        %v2728 = vcombine.high %v2720, %v2720
        %v2729 = vcombine.high %v2727, %v2727
        %v2731 = vunpack.c.l.s4 1966171168
        %v2732 = vunpack.c.0.s8 %v2731
        %v2733 = vlaneseq
        %v2734 = vshrl.u32 %v2733, 7
        %v2735 = vsub.s32 %v2732, %v2734
        %v2736 = vrot.slane %v2720, %v2735
        %v2738 = vunpack.c.l.s4 1966171168
        %v2739 = vunpack.c.0.s8 %v2738
        %v2740 = vlaneseq
        %v2741 = vshrl.u32 %v2740, 7
        %v2742 = vsub.s32 %v2739, %v2741
        %v2743 = vrot.slane %v2727, %v2742
        %v2745 = vunpack.c.l.s4 1966171168
        %v2746 = vunpack.c.0.s8 %v2745
        %v2747 = vlaneseq
        %v2748 = vshrl.u32 %v2747, 7
        %v2749 = vsub.s32 %v2746, %v2748
        %v2750 = vrot.slane %v2728, %v2749
        %v2752 = vunpack.c.l.s4 1966171168
        %v2753 = vunpack.c.0.s8 %v2752
        %v2754 = vlaneseq
        %v2755 = vshrl.u32 %v2754, 7
        %v2756 = vsub.s32 %v2753, %v2755
        %v2757 = vrot.slane %v2729, %v2756
        %v2758 = vcombine.high %v2736, %v2736
        %v2759 = vcombine.high %v2743, %v2743
        %v2760 = vcombine.high %v2750, %v2750
        %v2761 = vcombine.high %v2757, %v2757
        %v2762 = vlaneseq
        %v2763 = vshrl.u32 %v2762, 7
        %v2764 = vsub.s32 0, %v2763
        %v2765 = vrot.slane %v2736, %v2764
        %v2766 = vlaneseq
        %v2767 = vshrl.u32 %v2766, 7
        %v2768 = vsub.s32 0, %v2767
        %v2769 = vrot.slane %v2750, %v2768
        %v2770 = vlaneseq
        %v2771 = vshrl.u32 %v2770, 7
        %v2772 = vsub.s32 0, %v2771
        %v2773 = vrot.slane %v2758, %v2772
        %v2774 = vlaneseq
        %v2775 = vshrl.u32 %v2774, 7
        %v2776 = vsub.s32 0, %v2775
        %v2777 = vrot.slane %v2760, %v2776
        %v2778 = vlaneseq
        %v2779 = vshrl.u32 %v2778, 7
        %v2780 = vsub.s32 0, %v2779
        %v2781 = vrot.slane %v2743, %v2780
        %v2782 = vlaneseq
        %v2783 = vshrl.u32 %v2782, 7
        %v2784 = vsub.s32 0, %v2783
        %v2785 = vrot.slane %v2757, %v2784
        %v2786 = vlaneseq
        %v2787 = vshrl.u32 %v2786, 7
        %v2788 = vsub.s32 0, %v2787
        %v2789 = vrot.slane %v2759, %v2788
        %v2790 = vlaneseq
        %v2791 = vshrl.u32 %v2790, 7
        %v2792 = vsub.s32 0, %v2791
        %v2793 = vrot.slane %v2761, %v2792
        %v2802 = vmul.f32 %v2623, %v2765
        %v2803 = vmul.f32 %v2627, %v2765
        %v2804 = vmul.f32 %v2635, %v2769
        %v2805 = vmul.f32 %v2639, %v2769
        %v2806 = vmul.f32 %v2647, %v2773
        %v2807 = vmul.f32 %v2651, %v2773
        %v2808 = vmul.f32 %v2659, %v2777
        %v2809 = vmul.f32 %v2663, %v2777
        %v2810 = vmul.f32 %v2671, %v2781
        %v2811 = vmul.f32 %v2675, %v2781
        %v2812 = vmul.f32 %v2683, %v2785
        %v2813 = vmul.f32 %v2687, %v2785
        %v2814 = vmul.f32 %v2695, %v2789
        %v2815 = vmul.f32 %v2699, %v2789
        %v2816 = vmul.f32 %v2707, %v2793
        %v2817 = vmul.f32 %v2711, %v2793
        %v2818 = vmul.f32 %v2585, 0.0
        %v2819 = vmul.f32 %v2587, 0.0
        %v2820 = vadd.f32 %v2818, %v2802
        %v2821 = vadd.f32 %v2819, %v2803
        %v2822 = vmul.f32 %v2589, %v2820
        %v2823 = vmul.f32 %v2591, %v2821
        %v2824 = vadd.f32 %v2822, %v2804
        %v2825 = vadd.f32 %v2823, %v2805
        %v2826 = vmul.f32 %v2593, %v2824
        %v2827 = vmul.f32 %v2595, %v2825
        %v2828 = vadd.f32 %v2826, %v2806
        %v2829 = vadd.f32 %v2827, %v2807
        %v2830 = vmul.f32 %v2597, %v2828
        %v2831 = vmul.f32 %v2599, %v2829
        %v2832 = vadd.f32 %v2830, %v2808
        %v2833 = vadd.f32 %v2831, %v2809
        %v2834 = vmul.f32 %v2601, %v2832
        %v2835 = vmul.f32 %v2603, %v2833
        %v2836 = vadd.f32 %v2834, %v2810
        %v2837 = vadd.f32 %v2835, %v2811
        %v2838 = vmul.f32 %v2605, %v2836
        %v2839 = vmul.f32 %v2607, %v2837
        %v2840 = vadd.f32 %v2838, %v2812
        %v2841 = vadd.f32 %v2839, %v2813
        %v2842 = vmul.f32 %v2609, %v2840
        %v2843 = vmul.f32 %v2611, %v2841
        %v2844 = vadd.f32 %v2842, %v2814
        %v2845 = vadd.f32 %v2843, %v2815
        %v2846 = vmul.f32 %v2613, %v2844
        %v2847 = vmul.f32 %v2615, %v2845
        %v2848 = vadd.f32 %v2846, %v2816
        %v2849 = vadd.f32 %v2847, %v2817
        %s2851 = sor.u32 256, 48
        %2852 = vbcast.lane.b32.xlu0 %v2619, %s2851
        %v2853 = vpop.permute.xlu0 %2852
        %s2855 = sor.u32 256, 56
        %2856 = vbcast.lane.b32.xlu0 %v2619, %s2855
        %v2857 = vpop.permute.xlu0 %2856
        %s2859 = sor.u32 256, 48
        %2860 = vbcast.lane.b32.xlu0 %v2631, %s2859
        %v2861 = vpop.permute.xlu0 %2860
        %s2863 = sor.u32 256, 56
        %2864 = vbcast.lane.b32.xlu0 %v2631, %s2863
        %v2865 = vpop.permute.xlu0 %2864
        %s2867 = sor.u32 256, 48
        %2868 = vbcast.lane.b32.xlu0 %v2643, %s2867
        %v2869 = vpop.permute.xlu0 %2868
        %s2871 = sor.u32 256, 56
        %2872 = vbcast.lane.b32.xlu0 %v2643, %s2871
        %v2873 = vpop.permute.xlu0 %2872
        %s2875 = sor.u32 256, 48
        %2876 = vbcast.lane.b32.xlu0 %v2655, %s2875
        %v2877 = vpop.permute.xlu0 %2876
        %s2879 = sor.u32 256, 56
        %2880 = vbcast.lane.b32.xlu0 %v2655, %s2879
        %v2881 = vpop.permute.xlu0 %2880
        %s2883 = sor.u32 256, 48
        %2884 = vbcast.lane.b32.xlu0 %v2667, %s2883
        %v2885 = vpop.permute.xlu0 %2884
        %s2887 = sor.u32 256, 56
        %2888 = vbcast.lane.b32.xlu0 %v2667, %s2887
        %v2889 = vpop.permute.xlu0 %2888
        %s2891 = sor.u32 256, 48
        %2892 = vbcast.lane.b32.xlu0 %v2679, %s2891
        %v2893 = vpop.permute.xlu0 %2892
        %s2895 = sor.u32 256, 56
        %2896 = vbcast.lane.b32.xlu0 %v2679, %s2895
        %v2897 = vpop.permute.xlu0 %2896
        %s2899 = sor.u32 256, 48
        %2900 = vbcast.lane.b32.xlu0 %v2691, %s2899
        %v2901 = vpop.permute.xlu0 %2900
        %s2903 = sor.u32 256, 56
        %2904 = vbcast.lane.b32.xlu0 %v2691, %s2903
        %v2905 = vpop.permute.xlu0 %2904
        %s2907 = sor.u32 256, 48
        %2908 = vbcast.lane.b32.xlu0 %v2703, %s2907
        %v2909 = vpop.permute.xlu0 %2908
        %s2911 = sor.u32 256, 56
        %2912 = vbcast.lane.b32.xlu0 %v2703, %s2911
        %v2913 = vpop.permute.xlu0 %2912
        %v2914 = vmul.f32 %v2853, %v2820
        %v2915 = vmul.f32 %v2857, %v2821
        %v2916 = vmul.f32 %v2861, %v2824
        %v2917 = vmul.f32 %v2865, %v2825
        %v2918 = vmul.f32 %v2869, %v2828
        %v2919 = vmul.f32 %v2873, %v2829
        %v2920 = vmul.f32 %v2877, %v2832
        %v2921 = vmul.f32 %v2881, %v2833
        %v2922 = vmul.f32 %v2885, %v2836
        %v2923 = vmul.f32 %v2889, %v2837
        %v2924 = vmul.f32 %v2893, %v2840
        %v2925 = vmul.f32 %v2897, %v2841
        %v2926 = vmul.f32 %v2901, %v2844
        %v2927 = vmul.f32 %v2905, %v2845
        %v2928 = vmul.f32 %v2909, %v2848
        %v2929 = vmul.f32 %v2913, %v2849
        %v2930 = vsel %vm975, %v2914, 0.0
        %v2931 = vsel %vm975, %v2915, 0.0
        %v2932 = vadd.f32 %v2930, %v2931
        %v2933 = vrot.slane %v2932, 4
        %v2934 = vadd.f32 %v2932, %v2933
        %v2935 = vrot.slane %v2934, 2
        %v2936 = vadd.f32 %v2934, %v2935
        %v2937 = vrot.slane %v2936, 1
        %v2938 = vadd.f32 %v2936, %v2937
        %v2939 = vsel %vm975, %v2916, 0.0
        %v2940 = vsel %vm975, %v2917, 0.0
        %v2941 = vadd.f32 %v2939, %v2940
        %v2942 = vrot.slane %v2941, 4
        %v2943 = vadd.f32 %v2941, %v2942
        %v2944 = vrot.slane %v2943, 2
        %v2945 = vadd.f32 %v2943, %v2944
        %v2946 = vrot.slane %v2945, 1
        %v2947 = vadd.f32 %v2945, %v2946
        %v2948 = vsel %vm975, %v2918, 0.0
        %v2949 = vsel %vm975, %v2919, 0.0
        %v2950 = vadd.f32 %v2948, %v2949
        %v2951 = vrot.slane %v2950, 4
        %v2952 = vadd.f32 %v2950, %v2951
        %v2953 = vrot.slane %v2952, 2
        %v2954 = vadd.f32 %v2952, %v2953
        %v2955 = vrot.slane %v2954, 1
        %v2956 = vadd.f32 %v2954, %v2955
        %v2957 = vsel %vm975, %v2920, 0.0
        %v2958 = vsel %vm975, %v2921, 0.0
        %v2959 = vadd.f32 %v2957, %v2958
        %v2960 = vrot.slane %v2959, 4
        %v2961 = vadd.f32 %v2959, %v2960
        %v2962 = vrot.slane %v2961, 2
        %v2963 = vadd.f32 %v2961, %v2962
        %v2964 = vrot.slane %v2963, 1
        %v2965 = vadd.f32 %v2963, %v2964
        %v2966 = vsel %vm975, %v2922, 0.0
        %v2967 = vsel %vm975, %v2923, 0.0
        %v2968 = vadd.f32 %v2966, %v2967
        %v2969 = vrot.slane %v2968, 4
        %v2970 = vadd.f32 %v2968, %v2969
        %v2971 = vrot.slane %v2970, 2
        %v2972 = vadd.f32 %v2970, %v2971
        %v2973 = vrot.slane %v2972, 1
        %v2974 = vadd.f32 %v2972, %v2973
        %v2975 = vsel %vm975, %v2924, 0.0
        %v2976 = vsel %vm975, %v2925, 0.0
        %v2977 = vadd.f32 %v2975, %v2976
        %v2978 = vrot.slane %v2977, 4
        %v2979 = vadd.f32 %v2977, %v2978
        %v2980 = vrot.slane %v2979, 2
        %v2981 = vadd.f32 %v2979, %v2980
        %v2982 = vrot.slane %v2981, 1
        %v2983 = vadd.f32 %v2981, %v2982
        %v2984 = vsel %vm975, %v2926, 0.0
        %v2985 = vsel %vm975, %v2927, 0.0
        %v2986 = vadd.f32 %v2984, %v2985
        %v2987 = vrot.slane %v2986, 4
        %v2988 = vadd.f32 %v2986, %v2987
        %v2989 = vrot.slane %v2988, 2
        %v2990 = vadd.f32 %v2988, %v2989
        %v2991 = vrot.slane %v2990, 1
        %v2992 = vadd.f32 %v2990, %v2991
        %v2993 = vsel %vm975, %v2928, 0.0
        %v2994 = vsel %vm975, %v2929, 0.0
        %v2995 = vadd.f32 %v2993, %v2994
        %v2996 = vrot.slane %v2995, 4
        %v2997 = vadd.f32 %v2995, %v2996
        %v2998 = vrot.slane %v2997, 2
        %v2999 = vadd.f32 %v2997, %v2998
        %v3000 = vrot.slane %v2999, 1
        %v3001 = vadd.f32 %v2999, %v3000
        %s3002 = scalar_lea.vmem [#allocation10], 1
        %v3003 = vld [vmem:[%s3002] sm:$0x1]
        %v3005 = vlaneseq
        %v3006 = vshrl.u32 %v3005, 7
        %v3007 = vsub.s32 0, %v3006
        %v3008 = vrot.slane %v3003, %v3007
        %v3010 = vmul.f32 %v2372, %v3008
        %v3012 = vrot.slane %v3010, 1
        %v3013 = vrot.slane %v3010, 2
        %v3014 = vrot.slane %v3010, 3
        %v3015 = vrot.slane %v3010, 4
        %v3016 = vrot.slane %v3010, 5
        %v3017 = vrot.slane %v3010, 6
        %v3018 = vrot.slane %v3010, 7
        %v3027 = vadd.f32 %v2938, %v3010
        %v3028 = vadd.f32 %v2947, %v3012
        %v3029 = vadd.f32 %v2956, %v3013
        %v3030 = vadd.f32 %v2965, %v3014
        %v3031 = vadd.f32 %v2974, %v3015
        %v3032 = vadd.f32 %v2983, %v3016
        %v3033 = vadd.f32 %v2992, %v3017
        %v3034 = vadd.f32 %v3001, %v3018
        %v3035 = vxor.u32 %v2337, 2147483648
        %v3036 = vmul.f32 %v3035, 1.442695
        %v3037 = vpow.pop %v3036
        %v3038 = vadd.f32 %v3037, 1.0
        %v3039 = vrcp.pop %v3038
        %v3040 = vmul.f32 1.0, %v3039
        %v3041 = vmul.f32 %v2337, %v3040
        %v3043 = vrot.slane %v3041, 1
        %v3044 = vrot.slane %v3041, 2
        %v3045 = vrot.slane %v3041, 3
        %v3046 = vrot.slane %v3041, 4
        %v3047 = vrot.slane %v3041, 5
        %v3048 = vrot.slane %v3041, 6
        %v3049 = vrot.slane %v3041, 7
        %3050 = vrot.lane.b32.xlu0 %v3041, 96
        %v3051 = vpop.permute.xlu0 %3050
        %3052 = vrot.lane.b32.xlu0 %v3043, 96
        %v3053 = vpop.permute.xlu0 %3052
        %3054 = vrot.lane.b32.xlu0 %v3044, 96
        %v3055 = vpop.permute.xlu0 %3054
        %3056 = vrot.lane.b32.xlu0 %v3045, 96
        %v3057 = vpop.permute.xlu0 %3056
        %3058 = vrot.lane.b32.xlu0 %v3046, 96
        %v3059 = vpop.permute.xlu0 %3058
        %3060 = vrot.lane.b32.xlu0 %v3047, 96
        %v3061 = vpop.permute.xlu0 %3060
        %3062 = vrot.lane.b32.xlu0 %v3048, 96
        %v3063 = vpop.permute.xlu0 %3062
        %3064 = vrot.lane.b32.xlu0 %v3049, 96
        %v3065 = vpop.permute.xlu0 %3064
        %v3074 = vmul.f32 %v3027, %v3051
        %v3075 = vmul.f32 %v3028, %v3053
        %v3076 = vmul.f32 %v3029, %v3055
        %v3077 = vmul.f32 %v3030, %v3057
        %v3078 = vmul.f32 %v3031, %v3059
        %v3079 = vmul.f32 %v3032, %v3061
        %v3080 = vmul.f32 %v3033, %v3063
        %v3081 = vmul.f32 %v3034, %v3065
        %s3082 = scalar_lea.vmem %s11, 32
        %v3083 = vld [vmem:[%s3082] sm:$0xff]
        %v3084 = vld [vmem:[%s3082 + $0x8] sm:$0xff]
        %v3085 = vld [vmem:[%s3082 + $0x10] sm:$0xff]
        %v3086 = vld [vmem:[%s3082 + $0x18] sm:$0xff]
        %v3095 = vrot.slane %v3075, 7
        %v3096 = vsel %vm1827, %v3095, %v3074
        %v3097 = vrot.slane %v3076, 6
        %v3098 = vsel %vm1830, %v3097, %v3096
        %v3099 = vrot.slane %v3077, 5
        %v3100 = vsel %vm1833, %v3099, %v3098
        %v3101 = vrot.slane %v3078, 4
        %v3102 = vsel %vm1836, %v3101, %v3100
        %v3103 = vrot.slane %v3079, 3
        %v3104 = vsel %vm1839, %v3103, %v3102
        %v3105 = vrot.slane %v3080, 2
        %v3106 = vsel %vm1842, %v3105, %v3104
        %v3107 = vrot.slane %v3081, 1
        %v3108 = vsel %vm1845, %v3107, %v3106
        %v3109 = vsel %vm975, %v3108, 0
        %3111 = vmatprep.subr.mxu0 0.0
        %3112 = vmatpush1.msra.mxu0 %v3083
        %3113 = vmatprep.subr.mxu0 0.0
        %3114 = vmatpush1.msra.mxu0 %v3084
        %3115 = vmatprep.subr.mxu0 0.0
        %3116 = vmatpush1.msra.mxu0 %v3085
        %3117 = vmatprep.subr.mxu0 0.0
        %3118 = vmatpush1.msra.mxu0 %v3086
        %3119 = vmatprep.subr.mxu0 0.0
        %3120 = vmatpush1.msra.mxu0 0.0
        %3121 = vmatprep.subr.mxu0 0.0
        %3122 = vmatpush1.msra.mxu0 0.0
        %3123 = vmatprep.subr.mxu0 0.0
        %3124 = vmatpush1.msra.mxu0 0.0
        %3125 = vmatprep.subr.mxu0 0.0
        %3126 = vmatpush1.msra.mxu0 0.0
        %3127 = vmatprep.subr.mxu0 0.0
        %3128 = vmatpush1.msra.mxu0 0.0
        %3129 = vmatprep.subr.mxu0 0.0
        %3130 = vmatpush1.msra.mxu0 0.0
        %3131 = vmatprep.subr.mxu0 0.0
        %3132 = vmatpush1.msra.mxu0 0.0
        %3133 = vmatprep.subr.mxu0 0.0
        %3134 = vmatpush1.msra.mxu0 0.0
        %3135 = vmatprep.subr.mxu0 0.0
        %3136 = vmatpush1.msra.mxu0 0.0
        %3137 = vmatprep.subr.mxu0 0.0
        %3138 = vmatpush1.msra.mxu0 0.0
        %3139 = vmatprep.subr.mxu0 0.0
        %3140 = vmatpush1.msra.mxu0 0.0
        %3141 = vmatprep.subr.mxu0 0.0
        %3142 = vmatpush1.msra.mxu0 0.0
        %3143 = vmatprep.subr.mxu0 0.0
        %3144 = vmatpush1.msra.mxu0 0.0
        %3145 = vmatprep.subr.mxu0 0.0
        %3146 = vmatpush1.msra.mxu0 0.0
        %3147 = vmatprep.subr.mxu0 0.0
        %3148 = vmatpush1.msra.mxu0 0.0
        %3149 = vmatprep.subr.mxu0 0.0
        %3150 = vmatpush1.msra.mxu0 0.0
        %3151 = vmatprep.subr.mxu0 0.0
        %3152 = vmatpush1.msra.mxu0 0.0
        %3153 = vmatprep.subr.mxu0 0.0
        %3154 = vmatpush1.msra.mxu0 0.0
        %3155 = vmatprep.subr.mxu0 0.0
        %3156 = vmatpush1.msra.mxu0 0.0
        %3157 = vmatprep.subr.mxu0 0.0
        %3158 = vmatpush1.msra.mxu0 0.0
        %3159 = vmatprep.subr.mxu0 0.0
        %3160 = vmatpush1.msra.mxu0 0.0
        %3161 = vmatprep.subr.mxu0 0.0
        %3162 = vmatpush1.msra.mxu0 0.0
        %3163 = vmatprep.subr.mxu0 0.0
        %3164 = vmatpush1.msra.mxu0 0.0
        %3165 = vmatprep.subr.mxu0 0.0
        %3166 = vmatpush1.msra.mxu0 0.0
        %3167 = vmatprep.subr.mxu0 0.0
        %3168 = vmatpush1.msra.mxu0 0.0
        %3169 = vmatprep.subr.mxu0 0.0
        %3170 = vmatpush1.msra.mxu0 0.0
        %3171 = vmatprep.subr.mxu0 0.0
        %3172 = vmatpush1.msra.mxu0 0.0
        %3173 = vmatprep.subr.mxu0 0.0
        %3174 = vmatpush1.msra.mxu0 0.0
        %3175 = vmatprep.mubr.f32.mxu0 0.0
        %3176 = vmatmul.mubr.f32.gmra.mrb[0].mxu0 %v3109
        %v3177 = vpop.f32.mrb[0].mxu0
        %v3178 = vadd.f32 0.0, %v3177
        %v3179 = vpop.f32.mrb[0].mxu0
        %3180 = vdwg.mxu0
        %v3181 = vsel %vm975, %v3178, 0.0
        %3182 = vadd.xlane.f32.xlu0 %v3181
        %v3183 = vpop.xlane.xlu0 %3182
        %v3184 = vmul.f32 %v3183, %v979
        %v3185 = vsub.f32 %v3178, %v3184
        %v3186 = vmul.f32 %v3185, %v3185
        %v3187 = vsel %vm975, %v3186, 0.0
        %3188 = vadd.xlane.f32.xlu0 %v3187
        %v3189 = vpop.xlane.xlu0 %3188
        %v3190 = vmul.f32 %v3189, %v979
        %v3191 = vadd.f32 %v3190, 1e-05
        %v3192 = vrsqrt.pop %v3191
        %v3193 = vmul.f32 %v3185, %v3192
        %v3194 = vlaneseq
        %v3195 = vshrl.u32 %v3194, 7
        %v3196 = vsub.s32 2, %v3195
        %v3197 = vrot.slane %v2238, %v3196
        %v3198 = vmul.f32 %v3193, %v3197
        %v3199 = vlaneseq
        %v3200 = vshrl.u32 %v3199, 7
        %v3201 = vsub.s32 3, %v3200
        %v3202 = vrot.slane %v2238, %v3201
        %v3203 = vadd.f32 %v3198, %v3202
        %v3204 = vadd.f32 %v2236, %v3203
        %v3205 = vsel %vm975, %v3204, 0.0
        %3206 = vadd.xlane.f32.xlu0 %v3205
        %v3207 = vpop.xlane.xlu0 %3206
        %v3208 = vmul.f32 %v3207, %v979
        %v3209 = vsub.f32 %v3204, %v3208
        %v3210 = vmul.f32 %v3209, %v3209
        %v3211 = vsel %vm975, %v3210, 0.0
        %3212 = vadd.xlane.f32.xlu0 %v3211
        %v3213 = vpop.xlane.xlu0 %3212
        %v3214 = vmul.f32 %v3213, %v979
        %v3215 = vadd.f32 %v3214, 1e-05
        %v3216 = vrsqrt.pop %v3215
        %v3217 = vmul.f32 %v3209, %v3216
        %v3218 = vlaneseq
        %v3219 = vshrl.u32 %v3218, 7
        %v3220 = vsub.s32 4, %v3219
        %v3221 = vrot.slane %v2238, %v3220
        %v3222 = vmul.f32 %v3217, %v3221
        %v3223 = vlaneseq
        %v3224 = vshrl.u32 %v3223, 7
        %v3225 = vsub.s32 5, %v3224
        %v3226 = vrot.slane %v2238, %v3225
        %v3227 = vadd.f32 %v3222, %v3226
        %s3228 = scalar_lea.vmem [#allocation12], 32
        %v3229 = vld [vmem:[%s3228] sm:$0xff]
        %v3230 = vld [vmem:[%s3228 + $0x8] sm:$0xff]
        %v3231 = vld [vmem:[%s3228 + $0x10] sm:$0xff]
        %v3232 = vld [vmem:[%s3228 + $0x18] sm:$0xff]
        %v3234 = vsel %vm975, %v3227, 0
        %3236 = vmatprep.subr.mxu0 0.0
        %3237 = vmatpush1.msra.mxu0 %v3229
        %3238 = vmatprep.subr.mxu0 0.0
        %3239 = vmatpush1.msra.mxu0 %v3230
        %3240 = vmatprep.subr.mxu0 0.0
        %3241 = vmatpush1.msra.mxu0 %v3231
        %3242 = vmatprep.subr.mxu0 0.0
        %3243 = vmatpush1.msra.mxu0 %v3232
        %3244 = vmatprep.subr.mxu0 0.0
        %3245 = vmatpush1.msra.mxu0 0.0
        %3246 = vmatprep.subr.mxu0 0.0
        %3247 = vmatpush1.msra.mxu0 0.0
        %3248 = vmatprep.subr.mxu0 0.0
        %3249 = vmatpush1.msra.mxu0 0.0
        %3250 = vmatprep.subr.mxu0 0.0
        %3251 = vmatpush1.msra.mxu0 0.0
        %3252 = vmatprep.subr.mxu0 0.0
        %3253 = vmatpush1.msra.mxu0 0.0
        %3254 = vmatprep.subr.mxu0 0.0
        %3255 = vmatpush1.msra.mxu0 0.0
        %3256 = vmatprep.subr.mxu0 0.0
        %3257 = vmatpush1.msra.mxu0 0.0
        %3258 = vmatprep.subr.mxu0 0.0
        %3259 = vmatpush1.msra.mxu0 0.0
        %3260 = vmatprep.subr.mxu0 0.0
        %3261 = vmatpush1.msra.mxu0 0.0
        %3262 = vmatprep.subr.mxu0 0.0
        %3263 = vmatpush1.msra.mxu0 0.0
        %3264 = vmatprep.subr.mxu0 0.0
        %3265 = vmatpush1.msra.mxu0 0.0
        %3266 = vmatprep.subr.mxu0 0.0
        %3267 = vmatpush1.msra.mxu0 0.0
        %3268 = vmatprep.subr.mxu0 0.0
        %3269 = vmatpush1.msra.mxu0 0.0
        %3270 = vmatprep.subr.mxu0 0.0
        %3271 = vmatpush1.msra.mxu0 0.0
        %3272 = vmatprep.subr.mxu0 0.0
        %3273 = vmatpush1.msra.mxu0 0.0
        %3274 = vmatprep.subr.mxu0 0.0
        %3275 = vmatpush1.msra.mxu0 0.0
        %3276 = vmatprep.subr.mxu0 0.0
        %3277 = vmatpush1.msra.mxu0 0.0
        %3278 = vmatprep.subr.mxu0 0.0
        %3279 = vmatpush1.msra.mxu0 0.0
        %3280 = vmatprep.subr.mxu0 0.0
        %3281 = vmatpush1.msra.mxu0 0.0
        %3282 = vmatprep.subr.mxu0 0.0
        %3283 = vmatpush1.msra.mxu0 0.0
        %3284 = vmatprep.subr.mxu0 0.0
        %3285 = vmatpush1.msra.mxu0 0.0
        %3286 = vmatprep.subr.mxu0 0.0
        %3287 = vmatpush1.msra.mxu0 0.0
        %3288 = vmatprep.subr.mxu0 0.0
        %3289 = vmatpush1.msra.mxu0 0.0
        %3290 = vmatprep.subr.mxu0 0.0
        %3291 = vmatpush1.msra.mxu0 0.0
        %3292 = vmatprep.subr.mxu0 0.0
        %3293 = vmatpush1.msra.mxu0 0.0
        %3294 = vmatprep.subr.mxu0 0.0
        %3295 = vmatpush1.msra.mxu0 0.0
        %3296 = vmatprep.subr.mxu0 0.0
        %3297 = vmatpush1.msra.mxu0 0.0
        %3298 = vmatprep.subr.mxu0 0.0
        %3299 = vmatpush1.msra.mxu0 0.0
        %3300 = vmatprep.mubr.f32.mxu0 0.0
        %3301 = vmatmul.mubr.f32.gmra.mrb[0].mxu0 %v3234
        %v3302 = vpop.f32.mrb[0].mxu0
        %v3303 = vadd.f32 0.0, %v3302
        %v3304 = vpop.f32.mrb[0].mxu0
        %3305 = vdwg.mxu0
        %vm3306 = vcmp.ge.f32.partialorder %v3303, 0.0
        %v3307 = vmul.f32 %v3303, 0.01
        %v3308 = vsel %vm3306, %v3303, %v3307
        %s3309 = scalar_lea.vmem %s13, 64
        %v3310 = vld [vmem:[%s3309] sm:$0xff]
        %v3311 = vld [vmem:[%s3309 + $0x8] sm:$0xff]
        %v3312 = vld [vmem:[%s3309 + $0x10] sm:$0xff]
        %v3313 = vld [vmem:[%s3309 + $0x18] sm:$0xff]
        %v3314 = vld [vmem:[%s3309 + $0x20] sm:$0xff]
        %v3315 = vld [vmem:[%s3309 + $0x28] sm:$0xff]
        %v3316 = vld [vmem:[%s3309 + $0x30] sm:$0xff]
        %v3317 = vld [vmem:[%s3309 + $0x38] sm:$0xff]
        %v3319 = vsel %vm2054, %v3308, 0
        %3321 = vmatprep.subr.mxu0 0.0
        %3322 = vmatpush1.msra.mxu0 %v3310
        %3323 = vmatprep.subr.mxu0 0.0
        %3324 = vmatpush1.msra.mxu0 %v3311
        %3325 = vmatprep.subr.mxu0 0.0
        %3326 = vmatpush1.msra.mxu0 %v3312
        %3327 = vmatprep.subr.mxu0 0.0
        %3328 = vmatpush1.msra.mxu0 %v3313
        %3329 = vmatprep.subr.mxu0 0.0
        %3330 = vmatpush1.msra.mxu0 %v3314
        %3331 = vmatprep.subr.mxu0 0.0
        %3332 = vmatpush1.msra.mxu0 %v3315
        %3333 = vmatprep.subr.mxu0 0.0
        %3334 = vmatpush1.msra.mxu0 %v3316
        %3335 = vmatprep.subr.mxu0 0.0
        %3336 = vmatpush1.msra.mxu0 %v3317
        %3337 = vmatprep.subr.mxu0 0.0
        %3338 = vmatpush1.msra.mxu0 0.0
        %3339 = vmatprep.subr.mxu0 0.0
        %3340 = vmatpush1.msra.mxu0 0.0
        %3341 = vmatprep.subr.mxu0 0.0
        %3342 = vmatpush1.msra.mxu0 0.0
        %3343 = vmatprep.subr.mxu0 0.0
        %3344 = vmatpush1.msra.mxu0 0.0
        %3345 = vmatprep.subr.mxu0 0.0
        %3346 = vmatpush1.msra.mxu0 0.0
        %3347 = vmatprep.subr.mxu0 0.0
        %3348 = vmatpush1.msra.mxu0 0.0
        %3349 = vmatprep.subr.mxu0 0.0
        %3350 = vmatpush1.msra.mxu0 0.0
        %3351 = vmatprep.subr.mxu0 0.0
        %3352 = vmatpush1.msra.mxu0 0.0
        %3353 = vmatprep.subr.mxu0 0.0
        %3354 = vmatpush1.msra.mxu0 0.0
        %3355 = vmatprep.subr.mxu0 0.0
        %3356 = vmatpush1.msra.mxu0 0.0
        %3357 = vmatprep.subr.mxu0 0.0
        %3358 = vmatpush1.msra.mxu0 0.0
        %3359 = vmatprep.subr.mxu0 0.0
        %3360 = vmatpush1.msra.mxu0 0.0
        %3361 = vmatprep.subr.mxu0 0.0
        %3362 = vmatpush1.msra.mxu0 0.0
        %3363 = vmatprep.subr.mxu0 0.0
        %3364 = vmatpush1.msra.mxu0 0.0
        %3365 = vmatprep.subr.mxu0 0.0
        %3366 = vmatpush1.msra.mxu0 0.0
        %3367 = vmatprep.subr.mxu0 0.0
        %3368 = vmatpush1.msra.mxu0 0.0
        %3369 = vmatprep.subr.mxu0 0.0
        %3370 = vmatpush1.msra.mxu0 0.0
        %3371 = vmatprep.subr.mxu0 0.0
        %3372 = vmatpush1.msra.mxu0 0.0
        %3373 = vmatprep.subr.mxu0 0.0
        %3374 = vmatpush1.msra.mxu0 0.0
        %3375 = vmatprep.subr.mxu0 0.0
        %3376 = vmatpush1.msra.mxu0 0.0
        %3377 = vmatprep.subr.mxu0 0.0
        %3378 = vmatpush1.msra.mxu0 0.0
        %3379 = vmatprep.subr.mxu0 0.0
        %3380 = vmatpush1.msra.mxu0 0.0
        %3381 = vmatprep.subr.mxu0 0.0
        %3382 = vmatpush1.msra.mxu0 0.0
        %3383 = vmatprep.subr.mxu0 0.0
        %3384 = vmatpush1.msra.mxu0 0.0
        %3385 = vmatprep.mubr.f32.mxu0 0.0
        %3386 = vmatmul.mubr.f32.gmra.mrb[0].mxu0 %v3319
        %v3387 = vpop.f32.mrb[0].mxu0
        %v3388 = vadd.f32 0.0, %v3387
        %v3389 = vpop.f32.mrb[0].mxu0
        %3390 = vdwg.mxu0
        %v3391 = vadd.f32 %v3204, %v3388
        %v3392 = vsel %vm975, %v3391, 0.0
        %3393 = vadd.xlane.f32.xlu0 %v3392
        %v3394 = vpop.xlane.xlu0 %3393
        %v3395 = vmul.f32 %v3394, %v979
        %v3396 = vsub.f32 %v3391, %v3395
        %v3397 = vmul.f32 %v3396, %v3396
        %v3398 = vsel %vm975, %v3397, 0.0
        %3399 = vadd.xlane.f32.xlu0 %v3398
        %v3400 = vpop.xlane.xlu0 %3399
        %v3401 = vmul.f32 %v3400, %v979
        %v3402 = vadd.f32 %v3401, 1e-05
        %v3403 = vrsqrt.pop %v3402
        %v3404 = vmul.f32 %v3396, %v3403
        %v3405 = vlaneseq
        %v3406 = vshrl.u32 %v3405, 7
        %v3407 = vsub.s32 6, %v3406
        %v3408 = vrot.slane %v2238, %v3407
        %v3409 = vmul.f32 %v3404, %v3408
        %v3410 = vlaneseq
        %v3411 = vshrl.u32 %v3410, 7
        %v3412 = vsub.s32 7, %v3411
        %v3413 = vrot.slane %v2238, %v3412
        %v3414 = vadd.f32 %v3409, %v3413
        %s3415 = scalar_lea.vmem [#allocation13], 32
        %v3416 = vld [vmem:[%s3415] sm:$0xff]
        %v3417 = vld [vmem:[%s3415 + $0x8] sm:$0xff]
        %v3418 = vld [vmem:[%s3415 + $0x10] sm:$0xff]
        %v3419 = vld [vmem:[%s3415 + $0x18] sm:$0xff]
        %s3420 = scalar_lea.vmem [#allocation15], 1
        %v3421 = vld [vmem:[%s3420] sm:$0x1]
        %v3423 = vlaneseq
        %v3424 = vshrl.u32 %v3423, 7
        %v3425 = vsub.s32 0, %v3424
        %v3426 = vrot.slane %v3421, %v3425
        %v3429 = vsel %vm975, %v3414, 0
        %3431 = vmatprep.subr.mxu0 0.0
        %3432 = vmatpush1.msra.mxu0 %v3416
        %3433 = vmatprep.subr.mxu0 0.0
        %3434 = vmatpush1.msra.mxu0 %v3417
        %3435 = vmatprep.subr.mxu0 0.0
        %3436 = vmatpush1.msra.mxu0 %v3418
        %3437 = vmatprep.subr.mxu0 0.0
        %3438 = vmatpush1.msra.mxu0 %v3419
        %3439 = vmatprep.subr.mxu0 0.0
        %3440 = vmatpush1.msra.mxu0 0.0
        %3441 = vmatprep.subr.mxu0 0.0
        %3442 = vmatpush1.msra.mxu0 0.0
        %3443 = vmatprep.subr.mxu0 0.0
        %3444 = vmatpush1.msra.mxu0 0.0
        %3445 = vmatprep.subr.mxu0 0.0
        %3446 = vmatpush1.msra.mxu0 0.0
        %3447 = vmatprep.subr.mxu0 0.0
        %3448 = vmatpush1.msra.mxu0 0.0
        %3449 = vmatprep.subr.mxu0 0.0
        %3450 = vmatpush1.msra.mxu0 0.0
        %3451 = vmatprep.subr.mxu0 0.0
        %3452 = vmatpush1.msra.mxu0 0.0
        %3453 = vmatprep.subr.mxu0 0.0
        %3454 = vmatpush1.msra.mxu0 0.0
        %3455 = vmatprep.subr.mxu0 0.0
        %3456 = vmatpush1.msra.mxu0 0.0
        %3457 = vmatprep.subr.mxu0 0.0
        %3458 = vmatpush1.msra.mxu0 0.0
        %3459 = vmatprep.subr.mxu0 0.0
        %3460 = vmatpush1.msra.mxu0 0.0
        %3461 = vmatprep.subr.mxu0 0.0
        %3462 = vmatpush1.msra.mxu0 0.0
        %3463 = vmatprep.subr.mxu0 0.0
        %3464 = vmatpush1.msra.mxu0 0.0
        %3465 = vmatprep.subr.mxu0 0.0
        %3466 = vmatpush1.msra.mxu0 0.0
        %3467 = vmatprep.subr.mxu0 0.0
        %3468 = vmatpush1.msra.mxu0 0.0
        %3469 = vmatprep.subr.mxu0 0.0
        %3470 = vmatpush1.msra.mxu0 0.0
        %3471 = vmatprep.subr.mxu0 0.0
        %3472 = vmatpush1.msra.mxu0 0.0
        %3473 = vmatprep.subr.mxu0 0.0
        %3474 = vmatpush1.msra.mxu0 0.0
        %3475 = vmatprep.subr.mxu0 0.0
        %3476 = vmatpush1.msra.mxu0 0.0
        %3477 = vmatprep.subr.mxu0 0.0
        %3478 = vmatpush1.msra.mxu0 0.0
        %3479 = vmatprep.subr.mxu0 0.0
        %3480 = vmatpush1.msra.mxu0 0.0
        %3481 = vmatprep.subr.mxu0 0.0
        %3482 = vmatpush1.msra.mxu0 0.0
        %3483 = vmatprep.subr.mxu0 0.0
        %3484 = vmatpush1.msra.mxu0 0.0
        %3485 = vmatprep.subr.mxu0 0.0
        %3486 = vmatpush1.msra.mxu0 0.0
        %3487 = vmatprep.subr.mxu0 0.0
        %3488 = vmatpush1.msra.mxu0 0.0
        %3489 = vmatprep.subr.mxu0 0.0
        %3490 = vmatpush1.msra.mxu0 0.0
        %3491 = vmatprep.subr.mxu0 0.0
        %3492 = vmatpush1.msra.mxu0 0.0
        %3493 = vmatprep.subr.mxu0 0.0
        %3494 = vmatpush1.msra.mxu0 0.0
        %3495 = vmatprep.mubr.f32.mxu0 0.0
        %3496 = vmatmul.mubr.f32.gmra.mrb[0].mxu0 %v3429
        %v3497 = vpop.f32.mrb[0].mxu0
        %v3498 = vadd.f32 %v3426, %v3497
        %v3499 = vpop.f32.mrb[0].mxu0
        %3500 = vdwg.mxu0
        %v3501 = vadd.f32 %v3391, %v3498
        %v3502 = vld [vmem:[%s16] sm:$0xff]
        %v3503 = vld [vmem:[%s16 + $0x8] sm:$0xff]
        %v3504 = vld [vmem:[%s16 + $0x10] sm:$0xff]
        %v3505 = vld [vmem:[%s16 + $0x18] sm:$0xff]
        %v3506 = vld [vmem:[#allocation16] sm:$0x1]
        %v3508 = vlaneseq
        %v3509 = vshrl.u32 %v3508, 7
        %v3510 = vsub.s32 0, %v3509
        %v3511 = vrot.slane %v3506, %v3510
        %v3514 = vsel %vm975, %v3501, 0
        %3516 = vmatprep.subr.mxu0 0.0
        %3517 = vmatpush1.msra.mxu0 %v3502
        %3518 = vmatprep.subr.mxu0 0.0
        %3519 = vmatpush1.msra.mxu0 %v3503
        %3520 = vmatprep.subr.mxu0 0.0
        %3521 = vmatpush1.msra.mxu0 %v3504
        %3522 = vmatprep.subr.mxu0 0.0
        %3523 = vmatpush1.msra.mxu0 %v3505
        %3524 = vmatprep.subr.mxu0 0.0
        %3525 = vmatpush1.msra.mxu0 0.0
        %3526 = vmatprep.subr.mxu0 0.0
        %3527 = vmatpush1.msra.mxu0 0.0
        %3528 = vmatprep.subr.mxu0 0.0
        %3529 = vmatpush1.msra.mxu0 0.0
        %3530 = vmatprep.subr.mxu0 0.0
        %3531 = vmatpush1.msra.mxu0 0.0
        %3532 = vmatprep.subr.mxu0 0.0
        %3533 = vmatpush1.msra.mxu0 0.0
        %3534 = vmatprep.subr.mxu0 0.0
        %3535 = vmatpush1.msra.mxu0 0.0
        %3536 = vmatprep.subr.mxu0 0.0
        %3537 = vmatpush1.msra.mxu0 0.0
        %3538 = vmatprep.subr.mxu0 0.0
        %3539 = vmatpush1.msra.mxu0 0.0
        %3540 = vmatprep.subr.mxu0 0.0
        %3541 = vmatpush1.msra.mxu0 0.0
        %3542 = vmatprep.subr.mxu0 0.0
        %3543 = vmatpush1.msra.mxu0 0.0
        %3544 = vmatprep.subr.mxu0 0.0
        %3545 = vmatpush1.msra.mxu0 0.0
        %3546 = vmatprep.subr.mxu0 0.0
        %3547 = vmatpush1.msra.mxu0 0.0
        %3548 = vmatprep.subr.mxu0 0.0
        %3549 = vmatpush1.msra.mxu0 0.0
        %3550 = vmatprep.subr.mxu0 0.0
        %3551 = vmatpush1.msra.mxu0 0.0
        %3552 = vmatprep.subr.mxu0 0.0
        %3553 = vmatpush1.msra.mxu0 0.0
        %3554 = vmatprep.subr.mxu0 0.0
        %3555 = vmatpush1.msra.mxu0 0.0
        %3556 = vmatprep.subr.mxu0 0.0
        %3557 = vmatpush1.msra.mxu0 0.0
        %3558 = vmatprep.subr.mxu0 0.0
        %3559 = vmatpush1.msra.mxu0 0.0
        %3560 = vmatprep.subr.mxu0 0.0
        %3561 = vmatpush1.msra.mxu0 0.0
        %3562 = vmatprep.subr.mxu0 0.0
        %3563 = vmatpush1.msra.mxu0 0.0
        %3564 = vmatprep.subr.mxu0 0.0
        %3565 = vmatpush1.msra.mxu0 0.0
        %3566 = vmatprep.subr.mxu0 0.0
        %3567 = vmatpush1.msra.mxu0 0.0
        %3568 = vmatprep.subr.mxu0 0.0
        %3569 = vmatpush1.msra.mxu0 0.0
        %3570 = vmatprep.subr.mxu0 0.0
        %3571 = vmatpush1.msra.mxu0 0.0
        %3572 = vmatprep.subr.mxu0 0.0
        %3573 = vmatpush1.msra.mxu0 0.0
        %3574 = vmatprep.subr.mxu0 0.0
        %3575 = vmatpush1.msra.mxu0 0.0
        %3576 = vmatprep.subr.mxu0 0.0
        %3577 = vmatpush1.msra.mxu0 0.0
        %3578 = vmatprep.subr.mxu0 0.0
        %3579 = vmatpush1.msra.mxu0 0.0
        %3580 = vmatprep.mubr.f32.mxu0 0.0
        %3581 = vmatmul.mubr.f32.gmra.mrb[0].mxu0 %v3514
        %v3582 = vpop.f32.mrb[0].mxu0
        %v3583 = vadd.f32 %v3511, %v3582
        %v3584 = vpop.f32.mrb[0].mxu0
        %3585 = vdwg.mxu0
        %v3586 = vmax.f32 %v3583, 0.0
        %v3587 = vld [vmem:[#allocation18] sm:$0xff]
        %v3588 = vld [vmem:[#allocation18 + $0x8] sm:$0xff]
        %v3589 = vld [vmem:[#allocation18 + $0x10] sm:$0xff]
        %v3590 = vld [vmem:[#allocation18 + $0x18] sm:$0xff]
        %v3591 = vld [vmem:[#allocation19] sm:$0x1]
        %v3593 = vlaneseq
        %v3594 = vshrl.u32 %v3593, 7
        %v3595 = vsub.s32 0, %v3594
        %v3596 = vrot.slane %v3591, %v3595
        %v3599 = vsel %vm975, %v3586, 0
        %3601 = vmatprep.subr.mxu0 0.0
        %3602 = vmatpush1.msra.mxu0 %v3587
        %3603 = vmatprep.subr.mxu0 0.0
        %3604 = vmatpush1.msra.mxu0 %v3588
        %3605 = vmatprep.subr.mxu0 0.0
        %3606 = vmatpush1.msra.mxu0 %v3589
        %3607 = vmatprep.subr.mxu0 0.0
        %3608 = vmatpush1.msra.mxu0 %v3590
        %3609 = vmatprep.subr.mxu0 0.0
        %3610 = vmatpush1.msra.mxu0 0.0
        %3611 = vmatprep.subr.mxu0 0.0
        %3612 = vmatpush1.msra.mxu0 0.0
        %3613 = vmatprep.subr.mxu0 0.0
        %3614 = vmatpush1.msra.mxu0 0.0
        %3615 = vmatprep.subr.mxu0 0.0
        %3616 = vmatpush1.msra.mxu0 0.0
        %3617 = vmatprep.subr.mxu0 0.0
        %3618 = vmatpush1.msra.mxu0 0.0
        %3619 = vmatprep.subr.mxu0 0.0
        %3620 = vmatpush1.msra.mxu0 0.0
        %3621 = vmatprep.subr.mxu0 0.0
        %3622 = vmatpush1.msra.mxu0 0.0
        %3623 = vmatprep.subr.mxu0 0.0
        %3624 = vmatpush1.msra.mxu0 0.0
        %3625 = vmatprep.subr.mxu0 0.0
        %3626 = vmatpush1.msra.mxu0 0.0
        %3627 = vmatprep.subr.mxu0 0.0
        %3628 = vmatpush1.msra.mxu0 0.0
        %3629 = vmatprep.subr.mxu0 0.0
        %3630 = vmatpush1.msra.mxu0 0.0
        %3631 = vmatprep.subr.mxu0 0.0
        %3632 = vmatpush1.msra.mxu0 0.0
        %3633 = vmatprep.subr.mxu0 0.0
        %3634 = vmatpush1.msra.mxu0 0.0
        %3635 = vmatprep.subr.mxu0 0.0
        %3636 = vmatpush1.msra.mxu0 0.0
        %3637 = vmatprep.subr.mxu0 0.0
        %3638 = vmatpush1.msra.mxu0 0.0
        %3639 = vmatprep.subr.mxu0 0.0
        %3640 = vmatpush1.msra.mxu0 0.0
        %3641 = vmatprep.subr.mxu0 0.0
        %3642 = vmatpush1.msra.mxu0 0.0
        %3643 = vmatprep.subr.mxu0 0.0
        %3644 = vmatpush1.msra.mxu0 0.0
        %3645 = vmatprep.subr.mxu0 0.0
        %3646 = vmatpush1.msra.mxu0 0.0
        %3647 = vmatprep.subr.mxu0 0.0
        %3648 = vmatpush1.msra.mxu0 0.0
        %3649 = vmatprep.subr.mxu0 0.0
        %3650 = vmatpush1.msra.mxu0 0.0
        %3651 = vmatprep.subr.mxu0 0.0
        %3652 = vmatpush1.msra.mxu0 0.0
        %3653 = vmatprep.subr.mxu0 0.0
        %3654 = vmatpush1.msra.mxu0 0.0
        %3655 = vmatprep.subr.mxu0 0.0
        %3656 = vmatpush1.msra.mxu0 0.0
        %3657 = vmatprep.subr.mxu0 0.0
        %3658 = vmatpush1.msra.mxu0 0.0
        %3659 = vmatprep.subr.mxu0 0.0
        %3660 = vmatpush1.msra.mxu0 0.0
        %3661 = vmatprep.subr.mxu0 0.0
        %3662 = vmatpush1.msra.mxu0 0.0
        %3663 = vmatprep.subr.mxu0 0.0
        %3664 = vmatpush1.msra.mxu0 0.0
        %3665 = vmatprep.mubr.f32.mxu0 0.0
        %3666 = vmatmul.mubr.f32.gmra.mrb[0].mxu0 %v3599
        %v3667 = vpop.f32.mrb[0].mxu0
        %v3668 = vadd.f32 %v3596, %v3667
        %v3669 = vpop.f32.mrb[0].mxu0
        %3670 = vdwg.mxu0
        %v3671 = vmax.f32 %v3668, 0.0
        %v3672 = vadd.f32 %v3671, %v3501
        %3673 = vrot.lane.b32.xlu0 %v3501, 32
        %v3674 = vpop.permute.xlu0 %3673
        %v3676 = vsel %vm975, %v3672, %v3674
        %v3677 = vld [vmem:[%s20] sm:$0xff]
        %v3678 = vld [vmem:[%s20 + $0x8] sm:$0xff]
        %v3679 = vld [vmem:[%s20 + $0x10] sm:$0xff]
        %v3680 = vld [vmem:[%s20 + $0x18] sm:$0xff]
        %v3681 = vld [vmem:[%s20 + $0x20] sm:$0xff]
        %v3682 = vld [vmem:[%s20 + $0x28] sm:$0xff]
        %v3683 = vld [vmem:[%s20 + $0x30] sm:$0xff]
        %v3684 = vld [vmem:[%s20 + $0x38] sm:$0xff]
        %v3685 = vld [vmem:[#allocation21] sm:$0x1]
        %v3687 = vlaneseq
        %v3688 = vshrl.u32 %v3687, 7
        %v3689 = vsub.s32 0, %v3688
        %v3690 = vrot.slane %v3685, %v3689
        %v3693 = vsel %vm2054, %v3676, 0
        %3695 = vmatprep.subr.mxu0 0.0
        %3696 = vmatpush1.msra.mxu0 %v3677
        %3697 = vmatprep.subr.mxu0 0.0
        %3698 = vmatpush1.msra.mxu0 %v3678
        %3699 = vmatprep.subr.mxu0 0.0
        %3700 = vmatpush1.msra.mxu0 %v3679
        %3701 = vmatprep.subr.mxu0 0.0
        %3702 = vmatpush1.msra.mxu0 %v3680
        %3703 = vmatprep.subr.mxu0 0.0
        %3704 = vmatpush1.msra.mxu0 %v3681
        %3705 = vmatprep.subr.mxu0 0.0
        %3706 = vmatpush1.msra.mxu0 %v3682
        %3707 = vmatprep.subr.mxu0 0.0
        %3708 = vmatpush1.msra.mxu0 %v3683
        %3709 = vmatprep.subr.mxu0 0.0
        %3710 = vmatpush1.msra.mxu0 %v3684
        %3711 = vmatprep.subr.mxu0 0.0
        %3712 = vmatpush1.msra.mxu0 0.0
        %3713 = vmatprep.subr.mxu0 0.0
        %3714 = vmatpush1.msra.mxu0 0.0
        %3715 = vmatprep.subr.mxu0 0.0
        %3716 = vmatpush1.msra.mxu0 0.0
        %3717 = vmatprep.subr.mxu0 0.0
        %3718 = vmatpush1.msra.mxu0 0.0
        %3719 = vmatprep.subr.mxu0 0.0
        %3720 = vmatpush1.msra.mxu0 0.0
        %3721 = vmatprep.subr.mxu0 0.0
        %3722 = vmatpush1.msra.mxu0 0.0
        %3723 = vmatprep.subr.mxu0 0.0
        %3724 = vmatpush1.msra.mxu0 0.0
        %3725 = vmatprep.subr.mxu0 0.0
        %3726 = vmatpush1.msra.mxu0 0.0
        %3727 = vmatprep.subr.mxu0 0.0
        %3728 = vmatpush1.msra.mxu0 0.0
        %3729 = vmatprep.subr.mxu0 0.0
        %3730 = vmatpush1.msra.mxu0 0.0
        %3731 = vmatprep.subr.mxu0 0.0
        %3732 = vmatpush1.msra.mxu0 0.0
        %3733 = vmatprep.subr.mxu0 0.0
        %3734 = vmatpush1.msra.mxu0 0.0
        %3735 = vmatprep.subr.mxu0 0.0
        %3736 = vmatpush1.msra.mxu0 0.0
        %3737 = vmatprep.subr.mxu0 0.0
        %3738 = vmatpush1.msra.mxu0 0.0
        %3739 = vmatprep.subr.mxu0 0.0
        %3740 = vmatpush1.msra.mxu0 0.0
        %3741 = vmatprep.subr.mxu0 0.0
        %3742 = vmatpush1.msra.mxu0 0.0
        %3743 = vmatprep.subr.mxu0 0.0
        %3744 = vmatpush1.msra.mxu0 0.0
        %3745 = vmatprep.subr.mxu0 0.0
        %3746 = vmatpush1.msra.mxu0 0.0
        %3747 = vmatprep.subr.mxu0 0.0
        %3748 = vmatpush1.msra.mxu0 0.0
        %3749 = vmatprep.subr.mxu0 0.0
        %3750 = vmatpush1.msra.mxu0 0.0
        %3751 = vmatprep.subr.mxu0 0.0
        %3752 = vmatpush1.msra.mxu0 0.0
        %3753 = vmatprep.subr.mxu0 0.0
        %3754 = vmatpush1.msra.mxu0 0.0
        %3755 = vmatprep.subr.mxu0 0.0
        %3756 = vmatpush1.msra.mxu0 0.0
        %3757 = vmatprep.subr.mxu0 0.0
        %3758 = vmatpush1.msra.mxu0 0.0
        %3759 = vmatprep.mubr.f32.mxu0 0.0
        %3760 = vmatmul.mubr.f32.gmra.mrb[0].mxu0 %v3693
        %v3761 = vpop.f32.mrb[0].mxu0
        %v3762 = vadd.f32 %v3690, %v3761
        %v3763 = vpop.f32.mrb[0].mxu0
        %3764 = vdwg.mxu0
        %v3765 = vsel %vm859, %v886, 1.0
        %v3766 = vsel %vm859, %v868, 0.0
        %v3767 = vlaneseq
        %v3768 = vshrl.u32 %v3767, 7
        %v3769 = vsub.s32 0, %v3768
        %v3770 = vrot.slane %v3765, %v3769
        %v3771 = vmul.f32 %v3762, %v3770
        %v3772 = vlaneseq
        %v3773 = vshrl.u32 %v3772, 7
        %v3774 = vsub.s32 0, %v3773
        %v3775 = vrot.slane %v3766, %v3774
        %v3776 = vadd.f32 %v3771, %v3775
        %vm3777 = vcmask 64512
        %3778 = vst.msk [vmem:[%s857] sm:$0xff] %vm3777, %v3776
        %p3779 = scmp.lt.s32.totalorder %s40, 1
        %s3780 = scalar_select %p3779, %s40, 1
        %s3781 = smul.addr %s3780, 8
        %s3782 = scalar_lea.vmem %s22, %s3781
        // Predicated region
        $region161: #{sensitive_mamba_forward.1} parent=107 // pred_check
          %p3783 = pneg %p525
        $region162: #{sensitive_mamba_forward.1} parent=107 // pred_check_branch
          %3785 = sbr.rel (%p3783) target = $region164
        $region163: #{sensitive_mamba_forward.1} parent=107 // pred_region
          _
        $region164: #{sensitive_mamba_forward.1} parent=107 // pred_fallthru
          _
      $region108: #{sensitive_mamba_forward.1} parent=5 // pred_fallthru
        _
      %p3786 = scmp.le.s32.totalorder 2, %s35
      // Predicated region
      $region165: #{sensitive_mamba_forward.1} parent=5 // pred_check
        %p3787 = pneg %p3786
      $region166: #{sensitive_mamba_forward.1} parent=5 // pred_check_branch
        %3789 = sbr.rel (%p3787) target = $region168
      $region167: #{sensitive_mamba_forward.1} parent=5 // pred_region
        %s3790 = ssub.s32 %s35, 2
        // Predicated region
        $region169: #{sensitive_mamba_forward.1} parent=167 // pred_check
          %p3791 = pneg %p531
        $region170: #{sensitive_mamba_forward.1} parent=167 // pred_check_branch
          %3793 = sbr.rel (%p3791) target = $region172
        $region171: #{sensitive_mamba_forward.1} parent=167 // pred_region
          %p3794 = scmp.lt.s32.totalorder %s41, 1
          %s3795 = scalar_select %p3794, %s41, 1
          %s3796 = smul.addr %s3795, 8
          %s3797 = scalar_lea.vmem %s22, %s3796
        $region172: #{sensitive_mamba_forward.1} parent=167 // pred_fallthru
          _
      $region168: #{sensitive_mamba_forward.1} parent=5 // pred_fallthru
        _
    $region6: #{sensitive_mamba_forward.1} parent=1 // loop_footer
      %s39 = sadd.s32 1, %s35
    $region7: #{sensitive_mamba_forward.1} parent=1 // loop_footer_branch
      %34 = sbr.rel target = $region3
    $region8: #{sensitive_mamba_forward.1} parent=1 // loop_exit
      _
    %3798 = vsyncpa [#allocation3], 1
    %s3799 = scalar_lea.sflag [#allocation3], 1
    %3800 = vsyncpa %s3799, 1
    %3801 = vsyncpa [#allocation5], 1
    %3802 = vsyncpa [#allocation8], 1
    %3803 = vsyncpa [#allocation11], 1
    %3804 = vsyncpa [#allocation14], 1
    %3805 = vsyncpa [#allocation17], 1
    %3806 = vsyncpa [#allocation20], 1

</llo_original>
